<compile_context>
chip_gen: v7x
topology: tpu7x:2x2x1
jax: 0.10.0
libtpu: 0.0.40
codegen_flags: <defaults>
</compile_context>

<pallas_src>
import jax
import jax.numpy as jnp
import numpy as np
from jax.experimental import pallas as pl
from jax.experimental.pallas import tpu as pltpu

N_EMBD = 24
BLOCK_SIZE = 8                  # max sequence length T
N_HEAD = 4
HEAD_SIZE = N_EMBD // N_HEAD
N_LAYER = 3
VOCAB_SIZE = 65                 # stand-in for len(set(text))
HIDDEN = 4 * N_EMBD
NEG_BIG = -1e30                 # finite "-inf": robust under max-subtract softmax
LANE = 128                      # lane width; padded vocab axis

# Lane layout of the fused per-layer attention projection  x @ W_attn:
#   [ Q (C) | K (C) | v'_0 (C) | ... | v'_{H-1} (C) ]   with v'_h = x @ (W_v_h @ W_o_h)
# Blocks are placed so that none straddles a 128-lane tile boundary.
Q_OFF = 0
K_OFF = N_EMBD
VO_OFFS = []
_off = 2 * N_EMBD
for _h in range(N_HEAD):
    if (_off // LANE) != ((_off + N_EMBD - 1) // LANE):   # block would cross a lane tile
        _off = ((_off // LANE) + 1) * LANE
    VO_OFFS.append(_off)
    _off += N_EMBD
ATTN_WIDTH = _off               # 152 for C=24, H=4


def _model_kernel(tok_ref, mask_ref, emb_ref, attn_ref, ff_ref, bias_ref,
                  head_ref, o_ref):
    """Single-invocation forward: embedding -> 3 blocks -> LayerNorm -> lm_head."""
    M = tok_ref.shape[0]                       # B*T (static)
    C, D, T, H = N_EMBD, HEAD_SIZE, BLOCK_SIZE, N_HEAD

    # ---- embedding: one one-hot matmul against the fused [tok_tab; pos_tab] ----
    tok_ids = tok_ref[...]                                              # (M, 1) int32
    vt = VOCAB_SIZE + T
    col = jax.lax.broadcasted_iota(jnp.int32, (M, vt), 1)
    row = jax.lax.broadcasted_iota(jnp.int32, (M, vt), 0)
    pos_col = VOCAB_SIZE + (row % T)                                    # position = row % T
    oh = ((col == tok_ids) | (col == pos_col)).astype(jnp.float32)      # (M, V+T)
    x = jnp.dot(oh, emb_ref[...], preferred_element_type=jnp.float32)   # (M, C)

    mask_bias = mask_ref[...]                                           # (H*M, M), 0 / -1e30

    for l in range(N_LAYER):
        # fused projection: Q | K | per-head v'  (attn scale folded into W_q)
        proj = jnp.dot(x, attn_ref[l], preferred_element_type=jnp.float32)  # (M, ATTN_WIDTH)

        # per-head scores stacked along sublanes -> one masked softmax pass
        scores = []
        for h in range(H):
            q_h = proj[:, Q_OFF + h * D: Q_OFF + (h + 1) * D]
            k_h = proj[:, K_OFF + h * D: K_OFF + (h + 1) * D]
            scores.append(jnp.dot(q_h, k_h.T, preferred_element_type=jnp.float32))
        s = jnp.concatenate(scores, axis=0) + mask_bias                 # (H*M, M)
        s = s - jnp.max(s, axis=-1, keepdims=True)
        p = jnp.exp(s)
        p = p * pl.reciprocal(jnp.sum(p, axis=-1, keepdims=True), approx=True)

        # attention output: sum_h P_h @ v'_h   (W_o folded into v', b_o into b1')
        sa = jnp.zeros((M, C), jnp.float32)
        for h in range(H):
            vo_h = proj[:, VO_OFFS[h]: VO_OFFS[h] + C]                  # (M, C)
            sa = sa + jnp.dot(p[h * M:(h + 1) * M, :], vo_h,
                              preferred_element_type=jnp.float32)

        # FeedForward: Linear(C, 4C) -> ReLU -> Linear(4C, C)
        ff_l = ff_ref[l]                                                # (C+HIDDEN, HIDDEN)
        b_l = bias_ref[l]                                               # (2, HIDDEN)
        w1 = ff_l[0:C, :]                                               # (C, HIDDEN)
        w2 = ff_l[C:, 0:C]                                              # (HIDDEN, C)
        b1 = b_l[0:1, :]                                                # = b_o @ W1 + b1
        b2 = b_l[1:2, 0:C]
        hdn = jnp.maximum(jnp.dot(sa, w1, preferred_element_type=jnp.float32) + b1, 0.0)
        x = jnp.dot(hdn, w2, preferred_element_type=jnp.float32) + b2

    # ---- final LayerNorm (eps=1e-5, biased variance, affine) ----
    head = head_ref[...]                                                # (C+3, 128)
    ln_g = head[C + 1:C + 2, 0:C]
    ln_b = head[C + 2:C + 3, 0:C]
    mu = jnp.mean(x, axis=-1, keepdims=True)
    xc = x - mu
    var = jnp.mean(xc * xc, axis=-1, keepdims=True)
    y = xc * jax.lax.rsqrt(var + 1e-5) * ln_g + ln_b

    # ---- lm_head (vocab padded to 128 lanes -> lane-dense store) ----
    lm_w = head[0:C, :]                                                 # (C, 128)
    lm_b = head[C:C + 1, :]                                             # (1, 128)
    o_ref[...] = (jnp.dot(y, lm_w, preferred_element_type=jnp.float32) + lm_b
                  ).astype(o_ref.dtype)


def _causal_mask_bias(B, T):
    """Additive 0 / NEG_BIG mask for sublane-stacked per-head scores (host numpy)."""
    M = B * T
    r = np.arange(N_HEAD * M) % M                                       # query flat row
    c = np.arange(M)                                                    # key flat row
    valid = ((r[:, None] // T) == (c[None, :] // T)) & \
            ((c[None, :] % T) <= (r[:, None] % T))
    return jnp.asarray(np.where(valid, 0.0, NEG_BIG).astype(np.float32))


def bigram_forward(idx, packed_params):
    """idx: (B, T) int32 token ids -> logits (B, T, vocab)."""
    B, T = idx.shape
    M = B * T
    tok_ids = idx.reshape(M, 1).astype(jnp.int32)
    mask_bias = _causal_mask_bias(B, T)

    emb_table, w_attn, w_ff, biases, head = packed_params
    operands = (tok_ids, mask_bias, emb_table, w_attn, w_ff, biases, head)

    # Everything (weights + activations, tens of KB) fits trivially in VMEM, so
    # a single invocation with whole-array VMEM operands is optimal here.
    vmem = pl.BlockSpec(memory_space=pltpu.MemorySpace.VMEM)
    mm = lambda m, k, n: 2 * m * k * n
    flops = (mm(M, VOCAB_SIZE + T, N_EMBD) + mm(M, N_EMBD, LANE)
             + N_LAYER * (mm(M, N_EMBD, ATTN_WIDTH)
                          + N_HEAD * mm(M, HEAD_SIZE, M)
                          + N_HEAD * mm(M, M, N_EMBD)
                          + mm(M, N_EMBD, HIDDEN) + mm(M, HIDDEN, N_EMBD)))
    transcendentals = N_LAYER * N_HEAD * M * (M + 1) + 2 * M
    bytes_accessed = sum(int(a.size) * a.dtype.itemsize for a in operands) + M * LANE * 4

    logits = pl.pallas_call(
        _model_kernel,
        out_shape=jax.ShapeDtypeStruct((M, LANE), jnp.float32),
        in_specs=[vmem] * len(operands),
        out_specs=vmem,
        cost_estimate=pl.CostEstimate(flops=flops, transcendentals=transcendentals,
                                      bytes_accessed=bytes_accessed),
    )(*operands)
    # TODO(synk): for large B, add a batch-block grid axis with
    # dimension_semantics=("parallel",) (>=128 rows/block on v5e, >=256 on
    # v6e/v7x) so both v7x TensorCores get work.
    return logits[:, :VOCAB_SIZE].reshape(B, T, VOCAB_SIZE)


def init_params(key):
    """Raw per-head / per-layer parameters mirroring the PyTorch module layout
    (weights stored as (in_features, out_features))."""
    ks = iter(jax.random.split(key, 2 + 9 * N_LAYER + 2))
    s = 0.05
    rnd = lambda shape: s * jax.random.normal(next(ks), shape, jnp.float32)
    tok_tab = rnd((VOCAB_SIZE, N_EMBD))
    pos_tab = rnd((BLOCK_SIZE, N_EMBD))
    layers = []
    for _ in range(N_LAYER):
        layers.append((
            rnd((N_HEAD, N_EMBD, HEAD_SIZE)),   # W_q per head
            rnd((N_HEAD, N_EMBD, HEAD_SIZE)),   # W_k per head
            rnd((N_HEAD, N_EMBD, HEAD_SIZE)),   # W_v per head
            rnd((N_EMBD, N_EMBD)),              # W_o (proj)
            rnd((N_EMBD,)),                     # b_o
            rnd((N_EMBD, HIDDEN)),              # W_1
            rnd((HIDDEN,)),                     # b_1
            rnd((HIDDEN, N_EMBD)),              # W_2
            rnd((N_EMBD,)),                     # b_2
        ))
    ln_g = jnp.ones((N_EMBD,), jnp.float32)     # torch LayerNorm defaults
    ln_b = jnp.zeros((N_EMBD,), jnp.float32)
    lm_w = rnd((N_EMBD, VOCAB_SIZE))
    lm_b = rnd((VOCAB_SIZE,))
    return (tok_tab, pos_tab, layers, ln_g, ln_b, lm_w, lm_b)


def pack_params(raw_params):
    """One-time host-side packing into a handful of contiguous VMEM slabs:
    fused [tok;pos] table, per-layer attention slab (scaled W_q | W_k | per-head
    W_v@W_o), FF slab, bias slab (b_o folded into b1), and a padded head slab."""
    tok_tab, pos_tab, layers, ln_g, ln_b, lm_w, lm_b = raw_params
    C, D, H = N_EMBD, HEAD_SIZE, N_HEAD
    scale = float(C) ** -0.5

    emb_table = jnp.concatenate([tok_tab, pos_tab], axis=0)             # (V+T, C)

    w_attn, w_ff, biases = [], [], []
    for (wq, wk, wv, wo, bo, w1, b1, w2, b2) in layers:
        attn_l = jnp.zeros((C, ATTN_WIDTH), jnp.float32)
        for h in range(H):
            attn_l = attn_l.at[:, Q_OFF + h * D: Q_OFF + (h + 1) * D].set(wq[h] * scale)
            attn_l = attn_l.at[:, K_OFF + h * D: K_OFF + (h + 1) * D].set(wk[h])
            attn_l = attn_l.at[:, VO_OFFS[h]: VO_OFFS[h] + C].set(
                wv[h] @ wo[h * D:(h + 1) * D, :])                       # W_v_h @ W_o_h
        w_attn.append(attn_l)

        ff_l = jnp.zeros((C + HIDDEN, HIDDEN), jnp.float32)
        ff_l = ff_l.at[0:C, :].set(w1)
        ff_l = ff_l.at[C:, 0:C].set(w2)
        w_ff.append(ff_l)

        bias_l = jnp.zeros((2, HIDDEN), jnp.float32)
        bias_l = bias_l.at[0, :].set(bo @ w1 + b1)                      # fold b_o into b1
        bias_l = bias_l.at[1, 0:C].set(b2)
        biases.append(bias_l)

    head = jnp.zeros((C + 3, LANE), jnp.float32)                        # vocab padded to 128
    head = head.at[0:C, 0:VOCAB_SIZE].set(lm_w)
    head = head.at[C, 0:VOCAB_SIZE].set(lm_b)
    head = head.at[C + 1, 0:C].set(ln_g)
    head = head.at[C + 2, 0:C].set(ln_b)

    return (emb_table,
            jnp.stack(w_attn, axis=0),      # (L, C, ATTN_WIDTH)
            jnp.stack(w_ff, axis=0),        # (L, C+HIDDEN, HIDDEN)
            jnp.stack(biases, axis=0),      # (L, 2, HIDDEN)
            head)                           # (C+3, 128)


def model_reference(idx, raw_params):
    """Pure-JAX mirror of the PyTorch BigramLanguageModel.forward (targets=None)."""
    tok_tab, pos_tab, layers, ln_g, ln_b, lm_w, lm_b = raw_params
    B, T = idx.shape
    x = tok_tab[idx] + pos_tab[jnp.arange(T)][None, :, :]
    tril = jnp.tril(jnp.ones((T, T), jnp.float32))
    for (wq, wk, wv, wo, bo, w1, b1, w2, b2) in layers:
        heads = []
        for h in range(N_HEAD):
            q = x @ wq[h]
            k = x @ wk[h]
            v = x @ wv[h]
            wei = (q @ jnp.swapaxes(k, -1, -2)) * (N_EMBD ** -0.5)   # C**-0.5, as in Head
            wei = jnp.where(tril == 0, -jnp.inf, wei)
            wei = jax.nn.softmax(wei, axis=-1)
            heads.append(wei @ v)
        sa = jnp.concatenate(heads, axis=-1) @ wo + bo
        hdn = jnp.maximum(sa @ w1 + b1, 0.0)
        x = hdn @ w2 + b2
    mu = jnp.mean(x, axis=-1, keepdims=True)
    var = jnp.mean((x - mu) ** 2, axis=-1, keepdims=True)
    y = (x - mu) / jnp.sqrt(var + 1e-5) * ln_g + ln_b
    return y @ lm_w + lm_b


if __name__ == "__main__":
    key = jax.random.PRNGKey(0)
    k_idx, k_par = jax.random.split(key)

    B, T = 2, BLOCK_SIZE                                  # (2, 8) token ids
    idx = jax.random.randint(k_idx, (B, T), 0, VOCAB_SIZE, dtype=jnp.int32)

    raw_params = init_params(k_par)
    packed = pack_params(raw_params)                      # one-time host-side packing

    logits = bigram_forward(idx, packed)
    logits = jax.block_until_ready(logits)

    ref = model_reference(idx, raw_params)
    assert logits.shape == (B, T, VOCAB_SIZE)
    # tolerance covers the EUP approximate reciprocal in the softmax and the
    # host-side W_v@W_o / b_o@W1 reassociations (f32 rounding only)
    assert jnp.allclose(logits, ref, atol=5e-3, rtol=5e-3), "mismatch vs reference"

    # TODO(synk): cross-entropy loss (targets is not None) and the generate()
    # sampling loop (torch.multinomial) are host-level control flow, left to plain JAX.
    print("KERNEL_OK")
</pallas_src>

<mosaic_0001>
module attributes {stable_mosaic.version = 11 : i64} {
  func.func @_model_kernel(%arg0: memref<16x1xi32, #tpu.memory_space<vmem>>, %arg1: memref<64x16xf32, #tpu.memory_space<vmem>>, %arg2: memref<73x24xf32, #tpu.memory_space<vmem>>, %arg3: memref<3x24x152xf32, #tpu.memory_space<vmem>>, %arg4: memref<3x120x96xf32, #tpu.memory_space<vmem>>, %arg5: memref<3x2x96xf32, #tpu.memory_space<vmem>>, %arg6: memref<27x128xf32, #tpu.memory_space<vmem>>, %arg7: memref<16x128xf32, #tpu.memory_space<vmem>>) attributes {dimension_semantics = [], scalar_prefetch = 0 : i64, scratch_operands = 0 : i64, tpu.core_type = #tpu.core_type<tc>} {
    %c0 = arith.constant 0 : index
    %c0_0 = arith.constant 0 : index
    %0 = vector.load %arg0[%c0, %c0_0] : memref<16x1xi32, #tpu.memory_space<vmem>>, vector<16x1xi32>
    %1 = tpu.iota {dimensions = array<i32: 1>} : vector<16x73xi32>
    %2 = tpu.iota {dimensions = array<i32: 0>} : vector<16x73xi32>
    %c8_i32 = arith.constant 8 : i32
    %c0_i32 = arith.constant 0 : i32
    %3 = arith.cmpi eq, %c8_i32, %c0_i32 : i32
    %c1_i32 = arith.constant 1 : i32
    %4 = arith.select %3, %c1_i32, %c8_i32 : i32
    %5 = vector.broadcast %4 : i32 to vector<16x73xi32>
    %6 = arith.remsi %2, %5 : vector<16x73xi32>
    %c0_i32_1 = arith.constant 0 : i32
    %7 = vector.broadcast %c0_i32_1 : i32 to vector<16x73xi32>
    %8 = arith.cmpi ne, %6, %7 : vector<16x73xi32>
    %c0_i32_2 = arith.constant 0 : i32
    %9 = vector.broadcast %c0_i32_2 : i32 to vector<16x73xi32>
    %10 = arith.cmpi slt, %6, %9 : vector<16x73xi32>
    %c0_i32_3 = arith.constant 0 : i32
    %11 = arith.cmpi slt, %4, %c0_i32_3 : i32
    %12 = vector.broadcast %11 : i1 to vector<16x73xi1>
    %13 = vector.broadcast %12 : vector<16x73xi1> to vector<16x73xi1>
    %14 = arith.xori %10, %13 : vector<16x73xi1>
    %15 = arith.andi %14, %8 : vector<16x73xi1>
    %16 = vector.broadcast %4 : i32 to vector<16x73xi32>
    %17 = arith.addi %6, %16 : vector<16x73xi32>
    %18 = arith.select %15, %17, %6 : vector<16x73xi1>, vector<16x73xi32>
    %c65_i32 = arith.constant 65 : i32
    %19 = vector.broadcast %c65_i32 : i32 to vector<16x73xi32>
    %20 = arith.addi %19, %18 : vector<16x73xi32>
    %21 = vector.broadcast %0 : vector<16x1xi32> to vector<16x73xi32>
    %22 = arith.cmpi eq, %1, %21 : vector<16x73xi32>
    %23 = arith.cmpi eq, %1, %20 : vector<16x73xi32>
    %24 = arith.ori %22, %23 : vector<16x73xi1>
    %25 = arith.extui %24 : vector<16x73xi1> to vector<16x73xi32>
    %26 = arith.sitofp %25 : vector<16x73xi32> to vector<16x73xf32>
    %c0_4 = arith.constant 0 : index
    %c0_5 = arith.constant 0 : index
    %27 = vector.load %arg2[%c0_4, %c0_5] : memref<73x24xf32, #tpu.memory_space<vmem>>, vector<73x24xf32>
    %cst = arith.constant dense<0.000000e+00> : vector<16x24xf32>
    %28 = tpu.matmul %26, %27, %cst {dimension_numbers = #tpu.dot_dimension_numbers<[1], [0], [0], [1], [0, 0, 1, 1], [], []>} : vector<16x73xf32>, vector<73x24xf32>, vector<16x24xf32> -> vector<16x24xf32>
    %c0_6 = arith.constant 0 : index
    %c0_7 = arith.constant 0 : index
    %29 = vector.load %arg1[%c0_6, %c0_7] : memref<64x16xf32, #tpu.memory_space<vmem>>, vector<64x16xf32>
    %c0_8 = arith.constant 0 : index
    %c0_9 = arith.constant 0 : index
    %c0_10 = arith.constant 0 : index
    %30 = vector.load %arg3[%c0_8, %c0_9, %c0_10] : memref<3x24x152xf32, #tpu.memory_space<vmem>>, vector<1x24x152xf32>
    %31 = vector.shape_cast %30 : vector<1x24x152xf32> to vector<24x152xf32>
    %cst_11 = arith.constant dense<0.000000e+00> : vector<16x152xf32>
    %32 = tpu.matmul %28, %31, %cst_11 {dimension_numbers = #tpu.dot_dimension_numbers<[1], [0], [0], [1], [0, 0, 1, 1], [], []>} : vector<16x24xf32>, vector<24x152xf32>, vector<16x152xf32> -> vector<16x152xf32>
    %33 = vector.extract_strided_slice %32 {offsets = [0, 0], sizes = [16, 6], strides = [1, 1]} : vector<16x152xf32> to vector<16x6xf32>
    %34 = vector.extract_strided_slice %32 {offsets = [0, 24], sizes = [16, 6], strides = [1, 1]} : vector<16x152xf32> to vector<16x6xf32>
    %35 = tpu.transpose %34, [1, 0] : vector<16x6xf32> -> vector<6x16xf32>
    %cst_12 = arith.constant dense<0.000000e+00> : vector<16x16xf32>
    %36 = tpu.matmul %33, %35, %cst_12 {dimension_numbers = #tpu.dot_dimension_numbers<[1], [0], [0], [1], [0, 0, 1, 1], [], []>} : vector<16x6xf32>, vector<6x16xf32>, vector<16x16xf32> -> vector<16x16xf32>
    %37 = vector.extract_strided_slice %32 {offsets = [0, 6], sizes = [16, 6], strides = [1, 1]} : vector<16x152xf32> to vector<16x6xf32>
    %38 = vector.extract_strided_slice %32 {offsets = [0, 30], sizes = [16, 6], strides = [1, 1]} : vector<16x152xf32> to vector<16x6xf32>
    %39 = tpu.transpose %38, [1, 0] : vector<16x6xf32> -> vector<6x16xf32>
    %cst_13 = arith.constant dense<0.000000e+00> : vector<16x16xf32>
    %40 = tpu.matmul %37, %39, %cst_13 {dimension_numbers = #tpu.dot_dimension_numbers<[1], [0], [0], [1], [0, 0, 1, 1], [], []>} : vector<16x6xf32>, vector<6x16xf32>, vector<16x16xf32> -> vector<16x16xf32>
    %41 = vector.extract_strided_slice %32 {offsets = [0, 12], sizes = [16, 6], strides = [1, 1]} : vector<16x152xf32> to vector<16x6xf32>
    %42 = vector.extract_strided_slice %32 {offsets = [0, 36], sizes = [16, 6], strides = [1, 1]} : vector<16x152xf32> to vector<16x6xf32>
    %43 = tpu.transpose %42, [1, 0] : vector<16x6xf32> -> vector<6x16xf32>
    %cst_14 = arith.constant dense<0.000000e+00> : vector<16x16xf32>
    %44 = tpu.matmul %41, %43, %cst_14 {dimension_numbers = #tpu.dot_dimension_numbers<[1], [0], [0], [1], [0, 0, 1, 1], [], []>} : vector<16x6xf32>, vector<6x16xf32>, vector<16x16xf32> -> vector<16x16xf32>
    %45 = vector.extract_strided_slice %32 {offsets = [0, 18], sizes = [16, 6], strides = [1, 1]} : vector<16x152xf32> to vector<16x6xf32>
    %46 = vector.extract_strided_slice %32 {offsets = [0, 42], sizes = [16, 6], strides = [1, 1]} : vector<16x152xf32> to vector<16x6xf32>
    %47 = tpu.transpose %46, [1, 0] : vector<16x6xf32> -> vector<6x16xf32>
    %cst_15 = arith.constant dense<0.000000e+00> : vector<16x16xf32>
    %48 = tpu.matmul %45, %47, %cst_15 {dimension_numbers = #tpu.dot_dimension_numbers<[1], [0], [0], [1], [0, 0, 1, 1], [], []>} : vector<16x6xf32>, vector<6x16xf32>, vector<16x16xf32> -> vector<16x16xf32>
    %49 = tpu.concatenate %36, %40, %44, %48 in 0 : vector<16x16xf32>, vector<16x16xf32>, vector<16x16xf32>, vector<16x16xf32> -> vector<64x16xf32>
    %50 = arith.addf %49, %29 : vector<64x16xf32>
    %cst_16 = arith.constant dense<0xFF800000> : vector<64xf32>
    %51 = vector.multi_reduction <maximumf>, %50, %cst_16 [1] : vector<64x16xf32> to vector<64xf32>
    %52 = vector.shape_cast %51 : vector<64xf32> to vector<64x1xf32>
    %53 = vector.broadcast %52 : vector<64x1xf32> to vector<64x16xf32>
    %54 = arith.subf %50, %53 : vector<64x16xf32>
    %55 = math.exp %54 : vector<64x16xf32>
    %cst_17 = arith.constant dense<0.000000e+00> : vector<64xf32>
    %56 = vector.multi_reduction <add>, %55, %cst_17 [1] : vector<64x16xf32> to vector<64xf32>
    %57 = vector.shape_cast %56 : vector<64xf32> to vector<64x1xf32>
    %58 = tpu.reciprocal %57 {approx = true} : vector<64x1xf32> -> vector<64x1xf32>
    %59 = vector.broadcast %58 : vector<64x1xf32> to vector<64x16xf32>
    %60 = arith.mulf %55, %59 : vector<64x16xf32>
    %cst_18 = arith.constant 0.000000e+00 : f32
    %61 = vector.broadcast %cst_18 : f32 to vector<16x24xf32>
    %62 = vector.extract_strided_slice %32 {offsets = [0, 48], sizes = [16, 24], strides = [1, 1]} : vector<16x152xf32> to vector<16x24xf32>
    %63 = vector.extract_strided_slice %60 {offsets = [0, 0], sizes = [16, 16], strides = [1, 1]} : vector<64x16xf32> to vector<16x16xf32>
    %cst_19 = arith.constant dense<0.000000e+00> : vector<16x24xf32>
    %64 = tpu.matmul %63, %62, %cst_19 {dimension_numbers = #tpu.dot_dimension_numbers<[1], [0], [0], [1], [0, 0, 1, 1], [], []>} : vector<16x16xf32>, vector<16x24xf32>, vector<16x24xf32> -> vector<16x24xf32>
    %65 = arith.addf %61, %64 : vector<16x24xf32>
    %66 = vector.extract_strided_slice %32 {offsets = [0, 72], sizes = [16, 24], strides = [1, 1]} : vector<16x152xf32> to vector<16x24xf32>
    %67 = vector.extract_strided_slice %60 {offsets = [16, 0], sizes = [16, 16], strides = [1, 1]} : vector<64x16xf32> to vector<16x16xf32>
    %cst_20 = arith.constant dense<0.000000e+00> : vector<16x24xf32>
    %68 = tpu.matmul %67, %66, %cst_20 {dimension_numbers = #tpu.dot_dimension_numbers<[1], [0], [0], [1], [0, 0, 1, 1], [], []>} : vector<16x16xf32>, vector<16x24xf32>, vector<16x24xf32> -> vector<16x24xf32>
    %69 = arith.addf %65, %68 : vector<16x24xf32>
    %70 = vector.extract_strided_slice %32 {offsets = [0, 96], sizes = [16, 24], strides = [1, 1]} : vector<16x152xf32> to vector<16x24xf32>
    %71 = vector.extract_strided_slice %60 {offsets = [32, 0], sizes = [16, 16], strides = [1, 1]} : vector<64x16xf32> to vector<16x16xf32>
    %cst_21 = arith.constant dense<0.000000e+00> : vector<16x24xf32>
    %72 = tpu.matmul %71, %70, %cst_21 {dimension_numbers = #tpu.dot_dimension_numbers<[1], [0], [0], [1], [0, 0, 1, 1], [], []>} : vector<16x16xf32>, vector<16x24xf32>, vector<16x24xf32> -> vector<16x24xf32>
    %73 = arith.addf %69, %72 : vector<16x24xf32>
    %74 = vector.extract_strided_slice %32 {offsets = [0, 128], sizes = [16, 24], strides = [1, 1]} : vector<16x152xf32> to vector<16x24xf32>
    %75 = vector.extract_strided_slice %60 {offsets = [48, 0], sizes = [16, 16], strides = [1, 1]} : vector<64x16xf32> to vector<16x16xf32>
    %cst_22 = arith.constant dense<0.000000e+00> : vector<16x24xf32>
    %76 = tpu.matmul %75, %74, %cst_22 {dimension_numbers = #tpu.dot_dimension_numbers<[1], [0], [0], [1], [0, 0, 1, 1], [], []>} : vector<16x16xf32>, vector<16x24xf32>, vector<16x24xf32> -> vector<16x24xf32>
    %77 = arith.addf %73, %76 : vector<16x24xf32>
    %c0_23 = arith.constant 0 : index
    %c0_24 = arith.constant 0 : index
    %c0_25 = arith.constant 0 : index
    %78 = vector.load %arg4[%c0_23, %c0_24, %c0_25] : memref<3x120x96xf32, #tpu.memory_space<vmem>>, vector<1x120x96xf32>
    %79 = vector.shape_cast %78 : vector<1x120x96xf32> to vector<120x96xf32>
    %c0_26 = arith.constant 0 : index
    %c0_27 = arith.constant 0 : index
    %c0_28 = arith.constant 0 : index
    %80 = vector.load %arg5[%c0_26, %c0_27, %c0_28] : memref<3x2x96xf32, #tpu.memory_space<vmem>>, vector<1x2x96xf32>
    %81 = vector.shape_cast %80 : vector<1x2x96xf32> to vector<2x96xf32>
    %82 = vector.extract_strided_slice %79 {offsets = [0, 0], sizes = [24, 96], strides = [1, 1]} : vector<120x96xf32> to vector<24x96xf32>
    %83 = vector.extract_strided_slice %79 {offsets = [24, 0], sizes = [96, 24], strides = [1, 1]} : vector<120x96xf32> to vector<96x24xf32>
    %84 = vector.extract_strided_slice %81 {offsets = [0, 0], sizes = [1, 96], strides = [1, 1]} : vector<2x96xf32> to vector<1x96xf32>
    %85 = vector.extract_strided_slice %81 {offsets = [1, 0], sizes = [1, 24], strides = [1, 1]} : vector<2x96xf32> to vector<1x24xf32>
    %cst_29 = arith.constant dense<0.000000e+00> : vector<16x96xf32>
    %86 = tpu.matmul %77, %82, %cst_29 {dimension_numbers = #tpu.dot_dimension_numbers<[1], [0], [0], [1], [0, 0, 1, 1], [], []>} : vector<16x24xf32>, vector<24x96xf32>, vector<16x96xf32> -> vector<16x96xf32>
    %87 = vector.broadcast %84 : vector<1x96xf32> to vector<16x96xf32>
    %88 = arith.addf %86, %87 : vector<16x96xf32>
    %cst_30 = arith.constant 0.000000e+00 : f32
    %89 = vector.broadcast %cst_30 : f32 to vector<16x96xf32>
    %90 = arith.maximumf %88, %89 : vector<16x96xf32>
    %cst_31 = arith.constant dense<0.000000e+00> : vector<16x24xf32>
    %91 = tpu.matmul %90, %83, %cst_31 {dimension_numbers = #tpu.dot_dimension_numbers<[1], [0], [0], [1], [0, 0, 1, 1], [], []>} : vector<16x96xf32>, vector<96x24xf32>, vector<16x24xf32> -> vector<16x24xf32>
    %92 = vector.broadcast %85 : vector<1x24xf32> to vector<16x24xf32>
    %93 = arith.addf %91, %92 : vector<16x24xf32>
    %c1 = arith.constant 1 : index
    %c0_32 = arith.constant 0 : index
    %c0_33 = arith.constant 0 : index
    %94 = vector.load %arg3[%c1, %c0_32, %c0_33] : memref<3x24x152xf32, #tpu.memory_space<vmem>>, vector<1x24x152xf32>
    %95 = vector.shape_cast %94 : vector<1x24x152xf32> to vector<24x152xf32>
    %cst_34 = arith.constant dense<0.000000e+00> : vector<16x152xf32>
    %96 = tpu.matmul %93, %95, %cst_34 {dimension_numbers = #tpu.dot_dimension_numbers<[1], [0], [0], [1], [0, 0, 1, 1], [], []>} : vector<16x24xf32>, vector<24x152xf32>, vector<16x152xf32> -> vector<16x152xf32>
    %97 = vector.extract_strided_slice %96 {offsets = [0, 0], sizes = [16, 6], strides = [1, 1]} : vector<16x152xf32> to vector<16x6xf32>
    %98 = vector.extract_strided_slice %96 {offsets = [0, 24], sizes = [16, 6], strides = [1, 1]} : vector<16x152xf32> to vector<16x6xf32>
    %99 = tpu.transpose %98, [1, 0] : vector<16x6xf32> -> vector<6x16xf32>
    %cst_35 = arith.constant dense<0.000000e+00> : vector<16x16xf32>
    %100 = tpu.matmul %97, %99, %cst_35 {dimension_numbers = #tpu.dot_dimension_numbers<[1], [0], [0], [1], [0, 0, 1, 1], [], []>} : vector<16x6xf32>, vector<6x16xf32>, vector<16x16xf32> -> vector<16x16xf32>
    %101 = vector.extract_strided_slice %96 {offsets = [0, 6], sizes = [16, 6], strides = [1, 1]} : vector<16x152xf32> to vector<16x6xf32>
    %102 = vector.extract_strided_slice %96 {offsets = [0, 30], sizes = [16, 6], strides = [1, 1]} : vector<16x152xf32> to vector<16x6xf32>
    %103 = tpu.transpose %102, [1, 0] : vector<16x6xf32> -> vector<6x16xf32>
    %cst_36 = arith.constant dense<0.000000e+00> : vector<16x16xf32>
    %104 = tpu.matmul %101, %103, %cst_36 {dimension_numbers = #tpu.dot_dimension_numbers<[1], [0], [0], [1], [0, 0, 1, 1], [], []>} : vector<16x6xf32>, vector<6x16xf32>, vector<16x16xf32> -> vector<16x16xf32>
    %105 = vector.extract_strided_slice %96 {offsets = [0, 12], sizes = [16, 6], strides = [1, 1]} : vector<16x152xf32> to vector<16x6xf32>
    %106 = vector.extract_strided_slice %96 {offsets = [0, 36], sizes = [16, 6], strides = [1, 1]} : vector<16x152xf32> to vector<16x6xf32>
    %107 = tpu.transpose %106, [1, 0] : vector<16x6xf32> -> vector<6x16xf32>
    %cst_37 = arith.constant dense<0.000000e+00> : vector<16x16xf32>
    %108 = tpu.matmul %105, %107, %cst_37 {dimension_numbers = #tpu.dot_dimension_numbers<[1], [0], [0], [1], [0, 0, 1, 1], [], []>} : vector<16x6xf32>, vector<6x16xf32>, vector<16x16xf32> -> vector<16x16xf32>
    %109 = vector.extract_strided_slice %96 {offsets = [0, 18], sizes = [16, 6], strides = [1, 1]} : vector<16x152xf32> to vector<16x6xf32>
    %110 = vector.extract_strided_slice %96 {offsets = [0, 42], sizes = [16, 6], strides = [1, 1]} : vector<16x152xf32> to vector<16x6xf32>
    %111 = tpu.transpose %110, [1, 0] : vector<16x6xf32> -> vector<6x16xf32>
    %cst_38 = arith.constant dense<0.000000e+00> : vector<16x16xf32>
    %112 = tpu.matmul %109, %111, %cst_38 {dimension_numbers = #tpu.dot_dimension_numbers<[1], [0], [0], [1], [0, 0, 1, 1], [], []>} : vector<16x6xf32>, vector<6x16xf32>, vector<16x16xf32> -> vector<16x16xf32>
    %113 = tpu.concatenate %100, %104, %108, %112 in 0 : vector<16x16xf32>, vector<16x16xf32>, vector<16x16xf32>, vector<16x16xf32> -> vector<64x16xf32>
    %114 = arith.addf %113, %29 : vector<64x16xf32>
    %cst_39 = arith.constant dense<0xFF800000> : vector<64xf32>
    %115 = vector.multi_reduction <maximumf>, %114, %cst_39 [1] : vector<64x16xf32> to vector<64xf32>
    %116 = vector.shape_cast %115 : vector<64xf32> to vector<64x1xf32>
    %117 = vector.broadcast %116 : vector<64x1xf32> to vector<64x16xf32>
    %118 = arith.subf %114, %117 : vector<64x16xf32>
    %119 = math.exp %118 : vector<64x16xf32>
    %cst_40 = arith.constant dense<0.000000e+00> : vector<64xf32>
    %120 = vector.multi_reduction <add>, %119, %cst_40 [1] : vector<64x16xf32> to vector<64xf32>
    %121 = vector.shape_cast %120 : vector<64xf32> to vector<64x1xf32>
    %122 = tpu.reciprocal %121 {approx = true} : vector<64x1xf32> -> vector<64x1xf32>
    %123 = vector.broadcast %122 : vector<64x1xf32> to vector<64x16xf32>
    %124 = arith.mulf %119, %123 : vector<64x16xf32>
    %cst_41 = arith.constant 0.000000e+00 : f32
    %125 = vector.broadcast %cst_41 : f32 to vector<16x24xf32>
    %126 = vector.extract_strided_slice %96 {offsets = [0, 48], sizes = [16, 24], strides = [1, 1]} : vector<16x152xf32> to vector<16x24xf32>
    %127 = vector.extract_strided_slice %124 {offsets = [0, 0], sizes = [16, 16], strides = [1, 1]} : vector<64x16xf32> to vector<16x16xf32>
    %cst_42 = arith.constant dense<0.000000e+00> : vector<16x24xf32>
    %128 = tpu.matmul %127, %126, %cst_42 {dimension_numbers = #tpu.dot_dimension_numbers<[1], [0], [0], [1], [0, 0, 1, 1], [], []>} : vector<16x16xf32>, vector<16x24xf32>, vector<16x24xf32> -> vector<16x24xf32>
    %129 = arith.addf %125, %128 : vector<16x24xf32>
    %130 = vector.extract_strided_slice %96 {offsets = [0, 72], sizes = [16, 24], strides = [1, 1]} : vector<16x152xf32> to vector<16x24xf32>
    %131 = vector.extract_strided_slice %124 {offsets = [16, 0], sizes = [16, 16], strides = [1, 1]} : vector<64x16xf32> to vector<16x16xf32>
    %cst_43 = arith.constant dense<0.000000e+00> : vector<16x24xf32>
    %132 = tpu.matmul %131, %130, %cst_43 {dimension_numbers = #tpu.dot_dimension_numbers<[1], [0], [0], [1], [0, 0, 1, 1], [], []>} : vector<16x16xf32>, vector<16x24xf32>, vector<16x24xf32> -> vector<16x24xf32>
    %133 = arith.addf %129, %132 : vector<16x24xf32>
    %134 = vector.extract_strided_slice %96 {offsets = [0, 96], sizes = [16, 24], strides = [1, 1]} : vector<16x152xf32> to vector<16x24xf32>
    %135 = vector.extract_strided_slice %124 {offsets = [32, 0], sizes = [16, 16], strides = [1, 1]} : vector<64x16xf32> to vector<16x16xf32>
    %cst_44 = arith.constant dense<0.000000e+00> : vector<16x24xf32>
    %136 = tpu.matmul %135, %134, %cst_44 {dimension_numbers = #tpu.dot_dimension_numbers<[1], [0], [0], [1], [0, 0, 1, 1], [], []>} : vector<16x16xf32>, vector<16x24xf32>, vector<16x24xf32> -> vector<16x24xf32>
    %137 = arith.addf %133, %136 : vector<16x24xf32>
    %138 = vector.extract_strided_slice %96 {offsets = [0, 128], sizes = [16, 24], strides = [1, 1]} : vector<16x152xf32> to vector<16x24xf32>
    %139 = vector.extract_strided_slice %124 {offsets = [48, 0], sizes = [16, 16], strides = [1, 1]} : vector<64x16xf32> to vector<16x16xf32>
    %cst_45 = arith.constant dense<0.000000e+00> : vector<16x24xf32>
    %140 = tpu.matmul %139, %138, %cst_45 {dimension_numbers = #tpu.dot_dimension_numbers<[1], [0], [0], [1], [0, 0, 1, 1], [], []>} : vector<16x16xf32>, vector<16x24xf32>, vector<16x24xf32> -> vector<16x24xf32>
    %141 = arith.addf %137, %140 : vector<16x24xf32>
    %c1_46 = arith.constant 1 : index
    %c0_47 = arith.constant 0 : index
    %c0_48 = arith.constant 0 : index
    %142 = vector.load %arg4[%c1_46, %c0_47, %c0_48] : memref<3x120x96xf32, #tpu.memory_space<vmem>>, vector<1x120x96xf32>
    %143 = vector.shape_cast %142 : vector<1x120x96xf32> to vector<120x96xf32>
    %c1_49 = arith.constant 1 : index
    %c0_50 = arith.constant 0 : index
    %c0_51 = arith.constant 0 : index
    %144 = vector.load %arg5[%c1_49, %c0_50, %c0_51] : memref<3x2x96xf32, #tpu.memory_space<vmem>>, vector<1x2x96xf32>
    %145 = vector.shape_cast %144 : vector<1x2x96xf32> to vector<2x96xf32>
    %146 = vector.extract_strided_slice %143 {offsets = [0, 0], sizes = [24, 96], strides = [1, 1]} : vector<120x96xf32> to vector<24x96xf32>
    %147 = vector.extract_strided_slice %143 {offsets = [24, 0], sizes = [96, 24], strides = [1, 1]} : vector<120x96xf32> to vector<96x24xf32>
    %148 = vector.extract_strided_slice %145 {offsets = [0, 0], sizes = [1, 96], strides = [1, 1]} : vector<2x96xf32> to vector<1x96xf32>
    %149 = vector.extract_strided_slice %145 {offsets = [1, 0], sizes = [1, 24], strides = [1, 1]} : vector<2x96xf32> to vector<1x24xf32>
    %cst_52 = arith.constant dense<0.000000e+00> : vector<16x96xf32>
    %150 = tpu.matmul %141, %146, %cst_52 {dimension_numbers = #tpu.dot_dimension_numbers<[1], [0], [0], [1], [0, 0, 1, 1], [], []>} : vector<16x24xf32>, vector<24x96xf32>, vector<16x96xf32> -> vector<16x96xf32>
    %151 = vector.broadcast %148 : vector<1x96xf32> to vector<16x96xf32>
    %152 = arith.addf %150, %151 : vector<16x96xf32>
    %cst_53 = arith.constant 0.000000e+00 : f32
    %153 = vector.broadcast %cst_53 : f32 to vector<16x96xf32>
    %154 = arith.maximumf %152, %153 : vector<16x96xf32>
    %cst_54 = arith.constant dense<0.000000e+00> : vector<16x24xf32>
    %155 = tpu.matmul %154, %147, %cst_54 {dimension_numbers = #tpu.dot_dimension_numbers<[1], [0], [0], [1], [0, 0, 1, 1], [], []>} : vector<16x96xf32>, vector<96x24xf32>, vector<16x24xf32> -> vector<16x24xf32>
    %156 = vector.broadcast %149 : vector<1x24xf32> to vector<16x24xf32>
    %157 = arith.addf %155, %156 : vector<16x24xf32>
    %c2 = arith.constant 2 : index
    %c0_55 = arith.constant 0 : index
    %c0_56 = arith.constant 0 : index
    %158 = vector.load %arg3[%c2, %c0_55, %c0_56] : memref<3x24x152xf32, #tpu.memory_space<vmem>>, vector<1x24x152xf32>
    %159 = vector.shape_cast %158 : vector<1x24x152xf32> to vector<24x152xf32>
    %cst_57 = arith.constant dense<0.000000e+00> : vector<16x152xf32>
    %160 = tpu.matmul %157, %159, %cst_57 {dimension_numbers = #tpu.dot_dimension_numbers<[1], [0], [0], [1], [0, 0, 1, 1], [], []>} : vector<16x24xf32>, vector<24x152xf32>, vector<16x152xf32> -> vector<16x152xf32>
    %161 = vector.extract_strided_slice %160 {offsets = [0, 0], sizes = [16, 6], strides = [1, 1]} : vector<16x152xf32> to vector<16x6xf32>
    %162 = vector.extract_strided_slice %160 {offsets = [0, 24], sizes = [16, 6], strides = [1, 1]} : vector<16x152xf32> to vector<16x6xf32>
    %163 = tpu.transpose %162, [1, 0] : vector<16x6xf32> -> vector<6x16xf32>
    %cst_58 = arith.constant dense<0.000000e+00> : vector<16x16xf32>
    %164 = tpu.matmul %161, %163, %cst_58 {dimension_numbers = #tpu.dot_dimension_numbers<[1], [0], [0], [1], [0, 0, 1, 1], [], []>} : vector<16x6xf32>, vector<6x16xf32>, vector<16x16xf32> -> vector<16x16xf32>
    %165 = vector.extract_strided_slice %160 {offsets = [0, 6], sizes = [16, 6], strides = [1, 1]} : vector<16x152xf32> to vector<16x6xf32>
    %166 = vector.extract_strided_slice %160 {offsets = [0, 30], sizes = [16, 6], strides = [1, 1]} : vector<16x152xf32> to vector<16x6xf32>
    %167 = tpu.transpose %166, [1, 0] : vector<16x6xf32> -> vector<6x16xf32>
    %cst_59 = arith.constant dense<0.000000e+00> : vector<16x16xf32>
    %168 = tpu.matmul %165, %167, %cst_59 {dimension_numbers = #tpu.dot_dimension_numbers<[1], [0], [0], [1], [0, 0, 1, 1], [], []>} : vector<16x6xf32>, vector<6x16xf32>, vector<16x16xf32> -> vector<16x16xf32>
    %169 = vector.extract_strided_slice %160 {offsets = [0, 12], sizes = [16, 6], strides = [1, 1]} : vector<16x152xf32> to vector<16x6xf32>
    %170 = vector.extract_strided_slice %160 {offsets = [0, 36], sizes = [16, 6], strides = [1, 1]} : vector<16x152xf32> to vector<16x6xf32>
    %171 = tpu.transpose %170, [1, 0] : vector<16x6xf32> -> vector<6x16xf32>
    %cst_60 = arith.constant dense<0.000000e+00> : vector<16x16xf32>
    %172 = tpu.matmul %169, %171, %cst_60 {dimension_numbers = #tpu.dot_dimension_numbers<[1], [0], [0], [1], [0, 0, 1, 1], [], []>} : vector<16x6xf32>, vector<6x16xf32>, vector<16x16xf32> -> vector<16x16xf32>
    %173 = vector.extract_strided_slice %160 {offsets = [0, 18], sizes = [16, 6], strides = [1, 1]} : vector<16x152xf32> to vector<16x6xf32>
    %174 = vector.extract_strided_slice %160 {offsets = [0, 42], sizes = [16, 6], strides = [1, 1]} : vector<16x152xf32> to vector<16x6xf32>
    %175 = tpu.transpose %174, [1, 0] : vector<16x6xf32> -> vector<6x16xf32>
    %cst_61 = arith.constant dense<0.000000e+00> : vector<16x16xf32>
    %176 = tpu.matmul %173, %175, %cst_61 {dimension_numbers = #tpu.dot_dimension_numbers<[1], [0], [0], [1], [0, 0, 1, 1], [], []>} : vector<16x6xf32>, vector<6x16xf32>, vector<16x16xf32> -> vector<16x16xf32>
    %177 = tpu.concatenate %164, %168, %172, %176 in 0 : vector<16x16xf32>, vector<16x16xf32>, vector<16x16xf32>, vector<16x16xf32> -> vector<64x16xf32>
    %178 = arith.addf %177, %29 : vector<64x16xf32>
    %cst_62 = arith.constant dense<0xFF800000> : vector<64xf32>
    %179 = vector.multi_reduction <maximumf>, %178, %cst_62 [1] : vector<64x16xf32> to vector<64xf32>
    %180 = vector.shape_cast %179 : vector<64xf32> to vector<64x1xf32>
    %181 = vector.broadcast %180 : vector<64x1xf32> to vector<64x16xf32>
    %182 = arith.subf %178, %181 : vector<64x16xf32>
    %183 = math.exp %182 : vector<64x16xf32>
    %cst_63 = arith.constant dense<0.000000e+00> : vector<64xf32>
    %184 = vector.multi_reduction <add>, %183, %cst_63 [1] : vector<64x16xf32> to vector<64xf32>
    %185 = vector.shape_cast %184 : vector<64xf32> to vector<64x1xf32>
    %186 = tpu.reciprocal %185 {approx = true} : vector<64x1xf32> -> vector<64x1xf32>
    %187 = vector.broadcast %186 : vector<64x1xf32> to vector<64x16xf32>
    %188 = arith.mulf %183, %187 : vector<64x16xf32>
    %cst_64 = arith.constant 0.000000e+00 : f32
    %189 = vector.broadcast %cst_64 : f32 to vector<16x24xf32>
    %190 = vector.extract_strided_slice %160 {offsets = [0, 48], sizes = [16, 24], strides = [1, 1]} : vector<16x152xf32> to vector<16x24xf32>
    %191 = vector.extract_strided_slice %188 {offsets = [0, 0], sizes = [16, 16], strides = [1, 1]} : vector<64x16xf32> to vector<16x16xf32>
    %cst_65 = arith.constant dense<0.000000e+00> : vector<16x24xf32>
    %192 = tpu.matmul %191, %190, %cst_65 {dimension_numbers = #tpu.dot_dimension_numbers<[1], [0], [0], [1], [0, 0, 1, 1], [], []>} : vector<16x16xf32>, vector<16x24xf32>, vector<16x24xf32> -> vector<16x24xf32>
    %193 = arith.addf %189, %192 : vector<16x24xf32>
    %194 = vector.extract_strided_slice %160 {offsets = [0, 72], sizes = [16, 24], strides = [1, 1]} : vector<16x152xf32> to vector<16x24xf32>
    %195 = vector.extract_strided_slice %188 {offsets = [16, 0], sizes = [16, 16], strides = [1, 1]} : vector<64x16xf32> to vector<16x16xf32>
    %cst_66 = arith.constant dense<0.000000e+00> : vector<16x24xf32>
    %196 = tpu.matmul %195, %194, %cst_66 {dimension_numbers = #tpu.dot_dimension_numbers<[1], [0], [0], [1], [0, 0, 1, 1], [], []>} : vector<16x16xf32>, vector<16x24xf32>, vector<16x24xf32> -> vector<16x24xf32>
    %197 = arith.addf %193, %196 : vector<16x24xf32>
    %198 = vector.extract_strided_slice %160 {offsets = [0, 96], sizes = [16, 24], strides = [1, 1]} : vector<16x152xf32> to vector<16x24xf32>
    %199 = vector.extract_strided_slice %188 {offsets = [32, 0], sizes = [16, 16], strides = [1, 1]} : vector<64x16xf32> to vector<16x16xf32>
    %cst_67 = arith.constant dense<0.000000e+00> : vector<16x24xf32>
    %200 = tpu.matmul %199, %198, %cst_67 {dimension_numbers = #tpu.dot_dimension_numbers<[1], [0], [0], [1], [0, 0, 1, 1], [], []>} : vector<16x16xf32>, vector<16x24xf32>, vector<16x24xf32> -> vector<16x24xf32>
    %201 = arith.addf %197, %200 : vector<16x24xf32>
    %202 = vector.extract_strided_slice %160 {offsets = [0, 128], sizes = [16, 24], strides = [1, 1]} : vector<16x152xf32> to vector<16x24xf32>
    %203 = vector.extract_strided_slice %188 {offsets = [48, 0], sizes = [16, 16], strides = [1, 1]} : vector<64x16xf32> to vector<16x16xf32>
    %cst_68 = arith.constant dense<0.000000e+00> : vector<16x24xf32>
    %204 = tpu.matmul %203, %202, %cst_68 {dimension_numbers = #tpu.dot_dimension_numbers<[1], [0], [0], [1], [0, 0, 1, 1], [], []>} : vector<16x16xf32>, vector<16x24xf32>, vector<16x24xf32> -> vector<16x24xf32>
    %205 = arith.addf %201, %204 : vector<16x24xf32>
    %c2_69 = arith.constant 2 : index
    %c0_70 = arith.constant 0 : index
    %c0_71 = arith.constant 0 : index
    %206 = vector.load %arg4[%c2_69, %c0_70, %c0_71] : memref<3x120x96xf32, #tpu.memory_space<vmem>>, vector<1x120x96xf32>
    %207 = vector.shape_cast %206 : vector<1x120x96xf32> to vector<120x96xf32>
    %c2_72 = arith.constant 2 : index
    %c0_73 = arith.constant 0 : index
    %c0_74 = arith.constant 0 : index
    %208 = vector.load %arg5[%c2_72, %c0_73, %c0_74] : memref<3x2x96xf32, #tpu.memory_space<vmem>>, vector<1x2x96xf32>
    %209 = vector.shape_cast %208 : vector<1x2x96xf32> to vector<2x96xf32>
    %210 = vector.extract_strided_slice %207 {offsets = [0, 0], sizes = [24, 96], strides = [1, 1]} : vector<120x96xf32> to vector<24x96xf32>
    %211 = vector.extract_strided_slice %207 {offsets = [24, 0], sizes = [96, 24], strides = [1, 1]} : vector<120x96xf32> to vector<96x24xf32>
    %212 = vector.extract_strided_slice %209 {offsets = [0, 0], sizes = [1, 96], strides = [1, 1]} : vector<2x96xf32> to vector<1x96xf32>
    %213 = vector.extract_strided_slice %209 {offsets = [1, 0], sizes = [1, 24], strides = [1, 1]} : vector<2x96xf32> to vector<1x24xf32>
    %cst_75 = arith.constant dense<0.000000e+00> : vector<16x96xf32>
    %214 = tpu.matmul %205, %210, %cst_75 {dimension_numbers = #tpu.dot_dimension_numbers<[1], [0], [0], [1], [0, 0, 1, 1], [], []>} : vector<16x24xf32>, vector<24x96xf32>, vector<16x96xf32> -> vector<16x96xf32>
    %215 = vector.broadcast %212 : vector<1x96xf32> to vector<16x96xf32>
    %216 = arith.addf %214, %215 : vector<16x96xf32>
    %cst_76 = arith.constant 0.000000e+00 : f32
    %217 = vector.broadcast %cst_76 : f32 to vector<16x96xf32>
    %218 = arith.maximumf %216, %217 : vector<16x96xf32>
    %cst_77 = arith.constant dense<0.000000e+00> : vector<16x24xf32>
    %219 = tpu.matmul %218, %211, %cst_77 {dimension_numbers = #tpu.dot_dimension_numbers<[1], [0], [0], [1], [0, 0, 1, 1], [], []>} : vector<16x96xf32>, vector<96x24xf32>, vector<16x24xf32> -> vector<16x24xf32>
    %220 = vector.broadcast %213 : vector<1x24xf32> to vector<16x24xf32>
    %221 = arith.addf %219, %220 : vector<16x24xf32>
    %c0_78 = arith.constant 0 : index
    %c0_79 = arith.constant 0 : index
    %222 = vector.load %arg6[%c0_78, %c0_79] : memref<27x128xf32, #tpu.memory_space<vmem>>, vector<27x128xf32>
    %223 = vector.extract_strided_slice %222 {offsets = [25, 0], sizes = [1, 24], strides = [1, 1]} : vector<27x128xf32> to vector<1x24xf32>
    %224 = vector.extract_strided_slice %222 {offsets = [26, 0], sizes = [1, 24], strides = [1, 1]} : vector<27x128xf32> to vector<1x24xf32>
    %cst_80 = arith.constant dense<0.000000e+00> : vector<16xf32>
    %225 = vector.multi_reduction <add>, %221, %cst_80 [1] : vector<16x24xf32> to vector<16xf32>
    %226 = vector.shape_cast %225 : vector<16xf32> to vector<16x1xf32>
    %cst_81 = arith.constant 2.400000e+01 : f32
    %227 = vector.broadcast %cst_81 : f32 to vector<16x1xf32>
    %228 = arith.divf %226, %227 : vector<16x1xf32>
    %229 = vector.broadcast %228 : vector<16x1xf32> to vector<16x24xf32>
    %230 = arith.subf %221, %229 : vector<16x24xf32>
    %231 = arith.mulf %230, %230 : vector<16x24xf32>
    %cst_82 = arith.constant dense<0.000000e+00> : vector<16xf32>
    %232 = vector.multi_reduction <add>, %231, %cst_82 [1] : vector<16x24xf32> to vector<16xf32>
    %233 = vector.shape_cast %232 : vector<16xf32> to vector<16x1xf32>
    %cst_83 = arith.constant 2.400000e+01 : f32
    %234 = vector.broadcast %cst_83 : f32 to vector<16x1xf32>
    %235 = arith.divf %233, %234 : vector<16x1xf32>
    %cst_84 = arith.constant 9.99999974E-6 : f32
    %236 = vector.broadcast %cst_84 : f32 to vector<16x1xf32>
    %237 = arith.addf %235, %236 : vector<16x1xf32>
    %238 = math.rsqrt %237 : vector<16x1xf32>
    %239 = vector.broadcast %238 : vector<16x1xf32> to vector<16x24xf32>
    %240 = arith.mulf %230, %239 : vector<16x24xf32>
    %241 = vector.broadcast %223 : vector<1x24xf32> to vector<16x24xf32>
    %242 = arith.mulf %240, %241 : vector<16x24xf32>
    %243 = vector.broadcast %224 : vector<1x24xf32> to vector<16x24xf32>
    %244 = arith.addf %242, %243 : vector<16x24xf32>
    %245 = vector.extract_strided_slice %222 {offsets = [0, 0], sizes = [24, 128], strides = [1, 1]} : vector<27x128xf32> to vector<24x128xf32>
    %246 = vector.extract_strided_slice %222 {offsets = [24, 0], sizes = [1, 128], strides = [1, 1]} : vector<27x128xf32> to vector<1x128xf32>
    %cst_85 = arith.constant dense<0.000000e+00> : vector<16x128xf32>
    %247 = tpu.matmul %244, %245, %cst_85 {dimension_numbers = #tpu.dot_dimension_numbers<[1], [0], [0], [1], [0, 0, 1, 1], [], []>} : vector<16x24xf32>, vector<24x128xf32>, vector<16x128xf32> -> vector<16x128xf32>
    %248 = vector.broadcast %246 : vector<1x128xf32> to vector<16x128xf32>
    %249 = arith.addf %247, %248 : vector<16x128xf32>
    %c0_86 = arith.constant 0 : index
    %c0_87 = arith.constant 0 : index
    %250 = vector.load %arg7[%c0_86, %c0_87] : memref<16x128xf32, #tpu.memory_space<vmem>>, vector<16x128xf32>
    tpu.vector_store %arg7[%c0_86, %c0_87], %249 {strides = array<i32>} : memref<16x128xf32, #tpu.memory_space<vmem>>, vector<16x128xf32>,
    return
  }
}

</mosaic_0001>

<llo_original>
// kernel: tpu_custom_call.1
$region0: #{tpu_custom_call.1}
  #allocation0 [shape = 'u32[]', space=smem, size = 0x4, offset = 0x4, fixed_abs, tag = 'smem constant byte address 0x4 - core index']
  #allocation1 [shape = 'u32[144,128]{1,0:T(1,128)}', space=vmem, size = 0x12000, scoped, tag = 'internal scratch']
  %s0 = inlined_call_operand.vmem [shape: s32[16,1], index: 0, kind: input, shape index: {}]
  %s1 = inlined_call_operand.vmem [shape: f32[64,16], index: 1, kind: input, shape index: {}]
  %s2 = inlined_call_operand.vmem [shape: f32[73,24], index: 2, kind: input, shape index: {}]
  %s3 = inlined_call_operand.vmem [shape: f32[3,24,152], index: 3, kind: input, shape index: {}]
  %s4 = inlined_call_operand.vmem [shape: f32[3,120,96], index: 4, kind: input, shape index: {}]
  %s5 = inlined_call_operand.vmem [shape: f32[3,2,96], index: 5, kind: input, shape index: {}]
  %s6 = inlined_call_operand.vmem [shape: f32[27,128], index: 6, kind: input, shape index: {}]
  %s7 = inlined_call_operand.hbm [shape: f32[16,128], index: 7, kind: output, shape index: {}]
  %s8 = sld [smem:[#allocation0]]
  $region38: #{tpu_custom_call.1} parent=0
    _
  %s10 = ssub.s32 1, %s8
  %s11 = scalar_select 0, %s10, %s8
  $region1: #{tpu_custom_call.1} parent=0
    #allocation2 [shape = 'u8[8192]{0}', space=vmem, size = 0x2000, scoped, tag = 'output window, operand 0, single buffered']
    #allocation3 [shape = 's32[1]{0}', space=sflag, size = 0x4, scoped, tag = 'scoped memory for tpu_custom_call.1']
    %12 = vsyncpa [#allocation3], 0
    // Predicated region
    $region2: #{tpu_custom_call.1} parent=1 // pred_check
      _
    $region3: #{tpu_custom_call.1} parent=1 // pred_check_branch
      %14 = sbr.rel (0) target = $region5
    $region4: #{tpu_custom_call.1} parent=1 // pred_region
      _
    $region5: #{tpu_custom_call.1} parent=1 // pred_fallthru
      _
    // Predicated region
    $region6: #{tpu_custom_call.1} parent=1 // pred_check
      _
    $region7: #{tpu_custom_call.1} parent=1 // pred_check_branch
      %16 = sbr.rel (0) target = $region9
    $region8: #{tpu_custom_call.1} parent=1 // pred_region
      _
    $region9: #{tpu_custom_call.1} parent=1 // pred_fallthru
      _
    // Predicated region
    $region10: #{tpu_custom_call.1} parent=1 // pred_check
      _
    $region11: #{tpu_custom_call.1} parent=1 // pred_check_branch
      %18 = sbr.rel (0) target = $region13
    $region12: #{tpu_custom_call.1} parent=1 // pred_region
      _
    $region13: #{tpu_custom_call.1} parent=1 // pred_fallthru
      _
    // Predicated region
    $region14: #{tpu_custom_call.1} parent=1 // pred_check
      _
    $region15: #{tpu_custom_call.1} parent=1 // pred_check_branch
      %20 = sbr.rel (0) target = $region17
    $region16: #{tpu_custom_call.1} parent=1 // pred_region
      _
    $region17: #{tpu_custom_call.1} parent=1 // pred_fallthru
      _
    // Predicated region
    $region18: #{tpu_custom_call.1} parent=1 // pred_check
      _
    $region19: #{tpu_custom_call.1} parent=1 // pred_check_branch
      %22 = sbr.rel (0) target = $region21
    $region20: #{tpu_custom_call.1} parent=1 // pred_region
      _
    $region21: #{tpu_custom_call.1} parent=1 // pred_fallthru
      _
    // Predicated region
    $region22: #{tpu_custom_call.1} parent=1 // pred_check
      _
    $region23: #{tpu_custom_call.1} parent=1 // pred_check_branch
      %24 = sbr.rel (0) target = $region25
    $region24: #{tpu_custom_call.1} parent=1 // pred_region
      _
    $region25: #{tpu_custom_call.1} parent=1 // pred_fallthru
      _
    // Predicated region
    $region26: #{tpu_custom_call.1} parent=1 // pred_check
      _
    $region27: #{tpu_custom_call.1} parent=1 // pred_check_branch
      %26 = sbr.rel (0) target = $region29
    $region28: #{tpu_custom_call.1} parent=1 // pred_region
      _
    $region29: #{tpu_custom_call.1} parent=1 // pred_fallthru
      _
    %v27 = vld [vmem:[%s0] sm:$0xff]
    %v28 = vld [vmem:[%s0 + $0x8] sm:$0xff]
    %v29 = vlaneseq
    %v30 = vand.u32 %v29, 127
    %v31 = vlaneseq
    %v32 = vshrl.u32 %v31, 7
    %v33 = vadd.s32 %v32, 8
    %vm34 = vcmp.lt.s32.totalorder %v32, 0
    %v35 = vsub.s32 0, %v32
    %v36 = vsel %vm34, %v35, %v32
    %v37 = vshrl.u32 %v36, 3
    %v38 = vand.u32 %v36, 7
    %v39 = vsub.s32 0, %v38
    %v40 = vsel %vm34, %v39, %v38
    %vm41 = vcmp.lt.s32.totalorder %v33, 0
    %v42 = vsub.s32 0, %v33
    %v43 = vsel %vm41, %v42, %v33
    %v44 = vshrl.u32 %v43, 3
    %v45 = vand.u32 %v43, 7
    %v46 = vsub.s32 0, %v45
    %v47 = vsel %vm41, %v46, %v45
    %vm48 = vcmp.ne.s32.totalorder %v40, 0
    %vm49 = vcmp.ne.s32.totalorder %v47, 0
    %vm50 = vcmp.lt.s32.totalorder %v40, 0
    %vm51 = vcmp.lt.s32.totalorder %v47, 0
    %vm52 = vmand %vm50, %vm48
    %vm53 = vmand %vm51, %vm49
    %v54 = vadd.s32 %v40, 8
    %v55 = vadd.s32 %v47, 8
    %v56 = vsel %vm52, %v54, %v40
    %v57 = vsel %vm53, %v55, %v47
    %v58 = vadd.s32 %v56, 65
    %v59 = vadd.s32 %v57, 65
    %60 = vset.pattern.permute.xlu0 0
    %61 = vperm.xlu0 %60, %v27
    %v62 = vpop.permute.xlu0 %61
    %63 = vset.pattern.permute.xlu0 0
    %64 = vperm.xlu0 %63, %v28
    %v65 = vpop.permute.xlu0 %64
    %vm66 = vcmp.eq.s32.totalorder %v30, %v62
    %vm67 = vcmp.eq.s32.totalorder %v30, %v65
    %vm68 = vcmp.eq.s32.totalorder %v30, %v58
    %vm69 = vcmp.eq.s32.totalorder %v30, %v59
    %vm70 = vmor %vm66, %vm68
    %vm71 = vmor %vm67, %vm69
    %v72 = vsel %vm70, 1, 0
    %v73 = vsel %vm71, 1, 0
    %v74 = vcvt.s32.f32 %v72
    %v75 = vcvt.s32.f32 %v73
    %v76 = vld [vmem:[%s2] sm:$0xff]
    %v77 = vld [vmem:[%s2 + $0x8] sm:$0xff]
    %v78 = vld [vmem:[%s2 + $0x10] sm:$0xff]
    %v79 = vld [vmem:[%s2 + $0x18] sm:$0xff]
    %v80 = vld [vmem:[%s2 + $0x20] sm:$0xff]
    %v81 = vld [vmem:[%s2 + $0x28] sm:$0xff]
    %v82 = vld [vmem:[%s2 + $0x30] sm:$0xff]
    %v83 = vld [vmem:[%s2 + $0x38] sm:$0xff]
    %v84 = vld [vmem:[%s2 + $0x40] sm:$0xff]
    %v85 = vld [vmem:[%s2 + $0x48] sm:$0x1]
    %vm86 = vcmask 596992
    %v88 = vsel %vm86, %v74, 0
    %v91 = vsel %vm86, %v75, 0
    %vm93 = vcmask 1040384
    %v95 = vsel %vm93, %v85, 0
    %97 = vmatprep.subr.mxu0 0.0
    %98 = vmatpush1.msra.mxu0 %v76
    %99 = vmatprep.subr.mxu0 0.0
    %100 = vmatpush1.msra.mxu0 %v77
    %101 = vmatprep.subr.mxu0 0.0
    %102 = vmatpush1.msra.mxu0 %v78
    %103 = vmatprep.subr.mxu0 0.0
    %104 = vmatpush1.msra.mxu0 %v79
    %105 = vmatprep.subr.mxu0 0.0
    %106 = vmatpush1.msra.mxu0 %v80
    %107 = vmatprep.subr.mxu0 0.0
    %108 = vmatpush1.msra.mxu0 %v81
    %109 = vmatprep.subr.mxu0 0.0
    %110 = vmatpush1.msra.mxu0 %v82
    %111 = vmatprep.subr.mxu0 0.0
    %112 = vmatpush1.msra.mxu0 %v83
    %113 = vmatprep.subr.mxu0 0.0
    %114 = vmatpush1.msra.mxu0 %v84
    %115 = vmatprep.subr.mxu0 0.0
    %116 = vmatpush1.msra.mxu0 %v95
    %117 = vmatprep.subr.mxu0 0.0
    %118 = vmatpush1.msra.mxu0 0.0
    %119 = vmatprep.subr.mxu0 0.0
    %120 = vmatpush1.msra.mxu0 0.0
    %121 = vmatprep.subr.mxu0 0.0
    %122 = vmatpush1.msra.mxu0 0.0
    %123 = vmatprep.subr.mxu0 0.0
    %124 = vmatpush1.msra.mxu0 0.0
    %125 = vmatprep.subr.mxu0 0.0
    %126 = vmatpush1.msra.mxu0 0.0
    %127 = vmatprep.subr.mxu0 0.0
    %128 = vmatpush1.msra.mxu0 0.0
    %129 = vmatprep.subr.mxu0 0.0
    %130 = vmatpush1.msra.mxu0 0.0
    %131 = vmatprep.subr.mxu0 0.0
    %132 = vmatpush1.msra.mxu0 0.0
    %133 = vmatprep.subr.mxu0 0.0
    %134 = vmatpush1.msra.mxu0 0.0
    %135 = vmatprep.subr.mxu0 0.0
    %136 = vmatpush1.msra.mxu0 0.0
    %137 = vmatprep.subr.mxu0 0.0
    %138 = vmatpush1.msra.mxu0 0.0
    %139 = vmatprep.subr.mxu0 0.0
    %140 = vmatpush1.msra.mxu0 0.0
    %141 = vmatprep.subr.mxu0 0.0
    %142 = vmatpush1.msra.mxu0 0.0
    %143 = vmatprep.subr.mxu0 0.0
    %144 = vmatpush1.msra.mxu0 0.0
    %145 = vmatprep.subr.mxu0 0.0
    %146 = vmatpush1.msra.mxu0 0.0
    %147 = vmatprep.subr.mxu0 0.0
    %148 = vmatpush1.msra.mxu0 0.0
    %149 = vmatprep.subr.mxu0 0.0
    %150 = vmatpush1.msra.mxu0 0.0
    %151 = vmatprep.subr.mxu0 0.0
    %152 = vmatpush1.msra.mxu0 0.0
    %153 = vmatprep.subr.mxu0 0.0
    %154 = vmatpush1.msra.mxu0 0.0
    %155 = vmatprep.subr.mxu0 0.0
    %156 = vmatpush1.msra.mxu0 0.0
    %157 = vmatprep.subr.mxu0 0.0
    %158 = vmatpush1.msra.mxu0 0.0
    %159 = vmatprep.subr.mxu0 0.0
    %160 = vmatpush1.msra.mxu0 0.0
    %161 = vmatprep.mubr.f32.mxu0 0.0
    %162 = vmatmul.mubr.f32.gmra.mrb[0].mxu0 %v88
    %v163 = vpop.f32.mrb[0].mxu0
    %v164 = vadd.f32 0.0, %v163
    %v165 = vpop.f32.mrb[0].mxu0
    %166 = vmatprep.mubr.f32.mxu0 0.0
    %167 = vmatmul.mubr.f32.gmra.mrb[0].mxu0 %v91
    %v168 = vpop.f32.mrb[0].mxu0
    %v169 = vadd.f32 0.0, %v168
    %v170 = vpop.f32.mrb[0].mxu0
    %171 = vdwg.mxu0
    %v172 = vld [vmem:[%s1] sm:$0xff]
    %v173 = vld [vmem:[%s1 + $0x8] sm:$0xff]
    %v174 = vld [vmem:[%s1 + $0x10] sm:$0xff]
    %v175 = vld [vmem:[%s1 + $0x18] sm:$0xff]
    %v176 = vld [vmem:[%s1 + $0x20] sm:$0xff]
    %v177 = vld [vmem:[%s1 + $0x28] sm:$0xff]
    %v178 = vld [vmem:[%s1 + $0x30] sm:$0xff]
    %v179 = vld [vmem:[%s1 + $0x38] sm:$0xff]
    %v180 = vld [vmem:[%s3] sm:$0xff]
    %v181 = vld [vmem:[%s3 + $0x8] sm:$0xff]
    %v182 = vld [vmem:[%s3 + $0x10] sm:$0xff]
    %v183 = vld [vmem:[%s3 + $0x18] sm:$0xff]
    %v184 = vld [vmem:[%s3 + $0x20] sm:$0xff]
    %v185 = vld [vmem:[%s3 + $0x28] sm:$0xff]
    %vm186 = vcmask 195584
    %v188 = vsel %vm186, %v164, 0
    %v191 = vsel %vm186, %v169, 0
    %193 = vmatprep.subr.mxu0 %v181
    %194 = vmatpush1.msra.mxu0 %v180
    %195 = vmatprep.subr.mxu0 %v183
    %196 = vmatpush1.msra.mxu0 %v182
    %197 = vmatprep.subr.mxu0 %v185
    %198 = vmatpush1.msra.mxu0 %v184
    %199 = vmatprep.subr.mxu0 0.0
    %200 = vmatpush1.msra.mxu0 0.0
    %201 = vmatprep.subr.mxu0 0.0
    %202 = vmatpush1.msra.mxu0 0.0
    %203 = vmatprep.subr.mxu0 0.0
    %204 = vmatpush1.msra.mxu0 0.0
    %205 = vmatprep.subr.mxu0 0.0
    %206 = vmatpush1.msra.mxu0 0.0
    %207 = vmatprep.subr.mxu0 0.0
    %208 = vmatpush1.msra.mxu0 0.0
    %209 = vmatprep.subr.mxu0 0.0
    %210 = vmatpush1.msra.mxu0 0.0
    %211 = vmatprep.subr.mxu0 0.0
    %212 = vmatpush1.msra.mxu0 0.0
    %213 = vmatprep.subr.mxu0 0.0
    %214 = vmatpush1.msra.mxu0 0.0
    %215 = vmatprep.subr.mxu0 0.0
    %216 = vmatpush1.msra.mxu0 0.0
    %217 = vmatprep.subr.mxu0 0.0
    %218 = vmatpush1.msra.mxu0 0.0
    %219 = vmatprep.subr.mxu0 0.0
    %220 = vmatpush1.msra.mxu0 0.0
    %221 = vmatprep.subr.mxu0 0.0
    %222 = vmatpush1.msra.mxu0 0.0
    %223 = vmatprep.subr.mxu0 0.0
    %224 = vmatpush1.msra.mxu0 0.0
    %225 = vmatprep.subr.mxu0 0.0
    %226 = vmatpush1.msra.mxu0 0.0
    %227 = vmatprep.subr.mxu0 0.0
    %228 = vmatpush1.msra.mxu0 0.0
    %229 = vmatprep.subr.mxu0 0.0
    %230 = vmatpush1.msra.mxu0 0.0
    %231 = vmatprep.subr.mxu0 0.0
    %232 = vmatpush1.msra.mxu0 0.0
    %233 = vmatprep.subr.mxu0 0.0
    %234 = vmatpush1.msra.mxu0 0.0
    %235 = vmatprep.subr.mxu0 0.0
    %236 = vmatpush1.msra.mxu0 0.0
    %237 = vmatprep.subr.mxu0 0.0
    %238 = vmatpush1.msra.mxu0 0.0
    %239 = vmatprep.subr.mxu0 0.0
    %240 = vmatpush1.msra.mxu0 0.0
    %241 = vmatprep.subr.mxu0 0.0
    %242 = vmatpush1.msra.mxu0 0.0
    %243 = vmatprep.subr.mxu0 0.0
    %244 = vmatpush1.msra.mxu0 0.0
    %245 = vmatprep.subr.mxu0 0.0
    %246 = vmatpush1.msra.mxu0 0.0
    %247 = vmatprep.subr.mxu0 0.0
    %248 = vmatpush1.msra.mxu0 0.0
    %249 = vmatprep.subr.mxu0 0.0
    %250 = vmatpush1.msra.mxu0 0.0
    %251 = vmatprep.subr.mxu0 0.0
    %252 = vmatpush1.msra.mxu0 0.0
    %253 = vmatprep.subr.mxu0 0.0
    %254 = vmatpush1.msra.mxu0 0.0
    %255 = vmatprep.subr.mxu0 0.0
    %256 = vmatpush1.msra.mxu0 0.0
    %257 = vmatprep.mubr.f32.mxu0 0.0
    %258 = vmatmul.mubr.f32.gmra.mrb[0].mxu0 %v188
    %v259 = vpop.f32.mrb[0].mxu0
    %v260 = vadd.f32 0.0, %v259
    %v261 = vpop.f32.mrb[0].mxu0
    %v262 = vadd.f32 0.0, %v261
    %263 = vmatprep.mubr.f32.mxu0 0.0
    %264 = vmatmul.mubr.f32.gmra.mrb[0].mxu0 %v191
    %v265 = vpop.f32.mrb[0].mxu0
    %v266 = vadd.f32 0.0, %v265
    %v267 = vpop.f32.mrb[0].mxu0
    %v268 = vadd.f32 0.0, %v267
    %269 = vdwg.mxu0
    %272 = vrot.lane.b32.xlu0 %v260, 104
    %v273 = vpop.permute.xlu0 %272
    %274 = vrot.lane.b32.xlu0 %v266, 104
    %v275 = vpop.permute.xlu0 %274
    %vm276 = vcmask 48128
    %v277 = vsel %vm276, %v260, 0
    %v279 = vsel %vm276, %v266, 0
    %v281 = vsel %vm276, %v273, 0
    %v283 = vsel %vm276, %v275, 0
    %285 = vmatprep.subr.mxu0 0.0
    %286 = vmatpush1.xpose.msra.mxu0 %v281
    %287 = vmatprep.subr.mxu0 0.0
    %288 = vmatpush1.xpose.msra.mxu0 %v283
    %289 = vmatprep.subr.mxu0 0.0
    %290 = vmatpush1.xpose.msra.mxu0 0.0
    %291 = vmatprep.subr.mxu0 0.0
    %292 = vmatpush1.xpose.msra.mxu0 0.0
    %293 = vmatprep.subr.mxu0 0.0
    %294 = vmatpush1.xpose.msra.mxu0 0.0
    %295 = vmatprep.subr.mxu0 0.0
    %296 = vmatpush1.xpose.msra.mxu0 0.0
    %297 = vmatprep.subr.mxu0 0.0
    %298 = vmatpush1.xpose.msra.mxu0 0.0
    %299 = vmatprep.subr.mxu0 0.0
    %300 = vmatpush1.xpose.msra.mxu0 0.0
    %301 = vmatprep.subr.mxu0 0.0
    %302 = vmatpush1.xpose.msra.mxu0 0.0
    %303 = vmatprep.subr.mxu0 0.0
    %304 = vmatpush1.xpose.msra.mxu0 0.0
    %305 = vmatprep.subr.mxu0 0.0
    %306 = vmatpush1.xpose.msra.mxu0 0.0
    %307 = vmatprep.subr.mxu0 0.0
    %308 = vmatpush1.xpose.msra.mxu0 0.0
    %309 = vmatprep.subr.mxu0 0.0
    %310 = vmatpush1.xpose.msra.mxu0 0.0
    %311 = vmatprep.subr.mxu0 0.0
    %312 = vmatpush1.xpose.msra.mxu0 0.0
    %313 = vmatprep.subr.mxu0 0.0
    %314 = vmatpush1.xpose.msra.mxu0 0.0
    %315 = vmatprep.subr.mxu0 0.0
    %316 = vmatpush1.xpose.msra.mxu0 0.0
    %317 = vmatprep.subr.mxu0 0.0
    %318 = vmatpush1.xpose.msra.mxu0 0.0
    %319 = vmatprep.subr.mxu0 0.0
    %320 = vmatpush1.xpose.msra.mxu0 0.0
    %321 = vmatprep.subr.mxu0 0.0
    %322 = vmatpush1.xpose.msra.mxu0 0.0
    %323 = vmatprep.subr.mxu0 0.0
    %324 = vmatpush1.xpose.msra.mxu0 0.0
    %325 = vmatprep.subr.mxu0 0.0
    %326 = vmatpush1.xpose.msra.mxu0 0.0
    %327 = vmatprep.subr.mxu0 0.0
    %328 = vmatpush1.xpose.msra.mxu0 0.0
    %329 = vmatprep.subr.mxu0 0.0
    %330 = vmatpush1.xpose.msra.mxu0 0.0
    %331 = vmatprep.subr.mxu0 0.0
    %332 = vmatpush1.xpose.msra.mxu0 0.0
    %333 = vmatprep.subr.mxu0 0.0
    %334 = vmatpush1.xpose.msra.mxu0 0.0
    %335 = vmatprep.subr.mxu0 0.0
    %336 = vmatpush1.xpose.msra.mxu0 0.0
    %337 = vmatprep.subr.mxu0 0.0
    %338 = vmatpush1.xpose.msra.mxu0 0.0
    %339 = vmatprep.subr.mxu0 0.0
    %340 = vmatpush1.xpose.msra.mxu0 0.0
    %341 = vmatprep.subr.mxu0 0.0
    %342 = vmatpush1.xpose.msra.mxu0 0.0
    %343 = vmatprep.subr.mxu0 0.0
    %344 = vmatpush1.xpose.msra.mxu0 0.0
    %345 = vmatprep.subr.mxu0 0.0
    %346 = vmatpush1.xpose.msra.mxu0 0.0
    %347 = vmatprep.subr.mxu0 0.0
    %348 = vmatpush1.xpose.msra.mxu0 0.0
    %349 = vmatprep.mubr.f32.mxu0 0.0
    %350 = vmatmul.mubr.f32.gmra.mrb[0].mxu0 %v277
    %v351 = vpop.f32.mrb[0].mxu0
    %v352 = vadd.f32 0.0, %v351
    %v353 = vpop.f32.mrb[0].mxu0
    %354 = vmatprep.mubr.f32.mxu0 0.0
    %355 = vmatmul.mubr.f32.gmra.mrb[0].mxu0 %v279
    %v356 = vpop.f32.mrb[0].mxu0
    %v357 = vadd.f32 0.0, %v356
    %v358 = vpop.f32.mrb[0].mxu0
    %359 = vdwg.mxu0
    %360 = vrot.lane.b32.xlu0 %v260, 122
    %v361 = vpop.permute.xlu0 %360
    %362 = vrot.lane.b32.xlu0 %v266, 122
    %v363 = vpop.permute.xlu0 %362
    %364 = vrot.lane.b32.xlu0 %v260, 98
    %v365 = vpop.permute.xlu0 %364
    %366 = vrot.lane.b32.xlu0 %v266, 98
    %v367 = vpop.permute.xlu0 %366
    %v368 = vsel %vm276, %v361, 0
    %v370 = vsel %vm276, %v363, 0
    %v372 = vsel %vm276, %v365, 0
    %v374 = vsel %vm276, %v367, 0
    %376 = vmatprep.subr.mxu0 0.0
    %377 = vmatpush1.xpose.msra.mxu0 %v372
    %378 = vmatprep.subr.mxu0 0.0
    %379 = vmatpush1.xpose.msra.mxu0 %v374
    %380 = vmatprep.subr.mxu0 0.0
    %381 = vmatpush1.xpose.msra.mxu0 0.0
    %382 = vmatprep.subr.mxu0 0.0
    %383 = vmatpush1.xpose.msra.mxu0 0.0
    %384 = vmatprep.subr.mxu0 0.0
    %385 = vmatpush1.xpose.msra.mxu0 0.0
    %386 = vmatprep.subr.mxu0 0.0
    %387 = vmatpush1.xpose.msra.mxu0 0.0
    %388 = vmatprep.subr.mxu0 0.0
    %389 = vmatpush1.xpose.msra.mxu0 0.0
    %390 = vmatprep.subr.mxu0 0.0
    %391 = vmatpush1.xpose.msra.mxu0 0.0
    %392 = vmatprep.subr.mxu0 0.0
    %393 = vmatpush1.xpose.msra.mxu0 0.0
    %394 = vmatprep.subr.mxu0 0.0
    %395 = vmatpush1.xpose.msra.mxu0 0.0
    %396 = vmatprep.subr.mxu0 0.0
    %397 = vmatpush1.xpose.msra.mxu0 0.0
    %398 = vmatprep.subr.mxu0 0.0
    %399 = vmatpush1.xpose.msra.mxu0 0.0
    %400 = vmatprep.subr.mxu0 0.0
    %401 = vmatpush1.xpose.msra.mxu0 0.0
    %402 = vmatprep.subr.mxu0 0.0
    %403 = vmatpush1.xpose.msra.mxu0 0.0
    %404 = vmatprep.subr.mxu0 0.0
    %405 = vmatpush1.xpose.msra.mxu0 0.0
    %406 = vmatprep.subr.mxu0 0.0
    %407 = vmatpush1.xpose.msra.mxu0 0.0
    %408 = vmatprep.subr.mxu0 0.0
    %409 = vmatpush1.xpose.msra.mxu0 0.0
    %410 = vmatprep.subr.mxu0 0.0
    %411 = vmatpush1.xpose.msra.mxu0 0.0
    %412 = vmatprep.subr.mxu0 0.0
    %413 = vmatpush1.xpose.msra.mxu0 0.0
    %414 = vmatprep.subr.mxu0 0.0
    %415 = vmatpush1.xpose.msra.mxu0 0.0
    %416 = vmatprep.subr.mxu0 0.0
    %417 = vmatpush1.xpose.msra.mxu0 0.0
    %418 = vmatprep.subr.mxu0 0.0
    %419 = vmatpush1.xpose.msra.mxu0 0.0
    %420 = vmatprep.subr.mxu0 0.0
    %421 = vmatpush1.xpose.msra.mxu0 0.0
    %422 = vmatprep.subr.mxu0 0.0
    %423 = vmatpush1.xpose.msra.mxu0 0.0
    %424 = vmatprep.subr.mxu0 0.0
    %425 = vmatpush1.xpose.msra.mxu0 0.0
    %426 = vmatprep.subr.mxu0 0.0
    %427 = vmatpush1.xpose.msra.mxu0 0.0
    %428 = vmatprep.subr.mxu0 0.0
    %429 = vmatpush1.xpose.msra.mxu0 0.0
    %430 = vmatprep.subr.mxu0 0.0
    %431 = vmatpush1.xpose.msra.mxu0 0.0
    %432 = vmatprep.subr.mxu0 0.0
    %433 = vmatpush1.xpose.msra.mxu0 0.0
    %434 = vmatprep.subr.mxu0 0.0
    %435 = vmatpush1.xpose.msra.mxu0 0.0
    %436 = vmatprep.subr.mxu0 0.0
    %437 = vmatpush1.xpose.msra.mxu0 0.0
    %438 = vmatprep.subr.mxu0 0.0
    %439 = vmatpush1.xpose.msra.mxu0 0.0
    %440 = vmatprep.mubr.f32.mxu0 0.0
    %441 = vmatmul.mubr.f32.gmra.mrb[0].mxu0 %v368
    %v442 = vpop.f32.mrb[0].mxu0
    %v443 = vadd.f32 0.0, %v442
    %v444 = vpop.f32.mrb[0].mxu0
    %445 = vmatprep.mubr.f32.mxu0 0.0
    %446 = vmatmul.mubr.f32.gmra.mrb[0].mxu0 %v370
    %v447 = vpop.f32.mrb[0].mxu0
    %v448 = vadd.f32 0.0, %v447
    %v449 = vpop.f32.mrb[0].mxu0
    %450 = vdwg.mxu0
    %451 = vrot.lane.b32.xlu0 %v260, 116
    %v452 = vpop.permute.xlu0 %451
    %453 = vrot.lane.b32.xlu0 %v266, 116
    %v454 = vpop.permute.xlu0 %453
    %455 = vrot.lane.b32.xlu0 %v260, 92
    %v456 = vpop.permute.xlu0 %455
    %457 = vrot.lane.b32.xlu0 %v266, 92
    %v458 = vpop.permute.xlu0 %457
    %v459 = vsel %vm276, %v452, 0
    %v461 = vsel %vm276, %v454, 0
    %v463 = vsel %vm276, %v456, 0
    %v465 = vsel %vm276, %v458, 0
    %467 = vmatprep.subr.mxu0 0.0
    %468 = vmatpush1.xpose.msra.mxu0 %v463
    %469 = vmatprep.subr.mxu0 0.0
    %470 = vmatpush1.xpose.msra.mxu0 %v465
    %471 = vmatprep.subr.mxu0 0.0
    %472 = vmatpush1.xpose.msra.mxu0 0.0
    %473 = vmatprep.subr.mxu0 0.0
    %474 = vmatpush1.xpose.msra.mxu0 0.0
    %475 = vmatprep.subr.mxu0 0.0
    %476 = vmatpush1.xpose.msra.mxu0 0.0
    %477 = vmatprep.subr.mxu0 0.0
    %478 = vmatpush1.xpose.msra.mxu0 0.0
    %479 = vmatprep.subr.mxu0 0.0
    %480 = vmatpush1.xpose.msra.mxu0 0.0
    %481 = vmatprep.subr.mxu0 0.0
    %482 = vmatpush1.xpose.msra.mxu0 0.0
    %483 = vmatprep.subr.mxu0 0.0
    %484 = vmatpush1.xpose.msra.mxu0 0.0
    %485 = vmatprep.subr.mxu0 0.0
    %486 = vmatpush1.xpose.msra.mxu0 0.0
    %487 = vmatprep.subr.mxu0 0.0
    %488 = vmatpush1.xpose.msra.mxu0 0.0
    %489 = vmatprep.subr.mxu0 0.0
    %490 = vmatpush1.xpose.msra.mxu0 0.0
    %491 = vmatprep.subr.mxu0 0.0
    %492 = vmatpush1.xpose.msra.mxu0 0.0
    %493 = vmatprep.subr.mxu0 0.0
    %494 = vmatpush1.xpose.msra.mxu0 0.0
    %495 = vmatprep.subr.mxu0 0.0
    %496 = vmatpush1.xpose.msra.mxu0 0.0
    %497 = vmatprep.subr.mxu0 0.0
    %498 = vmatpush1.xpose.msra.mxu0 0.0
    %499 = vmatprep.subr.mxu0 0.0
    %500 = vmatpush1.xpose.msra.mxu0 0.0
    %501 = vmatprep.subr.mxu0 0.0
    %502 = vmatpush1.xpose.msra.mxu0 0.0
    %503 = vmatprep.subr.mxu0 0.0
    %504 = vmatpush1.xpose.msra.mxu0 0.0
    %505 = vmatprep.subr.mxu0 0.0
    %506 = vmatpush1.xpose.msra.mxu0 0.0
    %507 = vmatprep.subr.mxu0 0.0
    %508 = vmatpush1.xpose.msra.mxu0 0.0
    %509 = vmatprep.subr.mxu0 0.0
    %510 = vmatpush1.xpose.msra.mxu0 0.0
    %511 = vmatprep.subr.mxu0 0.0
    %512 = vmatpush1.xpose.msra.mxu0 0.0
    %513 = vmatprep.subr.mxu0 0.0
    %514 = vmatpush1.xpose.msra.mxu0 0.0
    %515 = vmatprep.subr.mxu0 0.0
    %516 = vmatpush1.xpose.msra.mxu0 0.0
    %517 = vmatprep.subr.mxu0 0.0
    %518 = vmatpush1.xpose.msra.mxu0 0.0
    %519 = vmatprep.subr.mxu0 0.0
    %520 = vmatpush1.xpose.msra.mxu0 0.0
    %521 = vmatprep.subr.mxu0 0.0
    %522 = vmatpush1.xpose.msra.mxu0 0.0
    %523 = vmatprep.subr.mxu0 0.0
    %524 = vmatpush1.xpose.msra.mxu0 0.0
    %525 = vmatprep.subr.mxu0 0.0
    %526 = vmatpush1.xpose.msra.mxu0 0.0
    %527 = vmatprep.subr.mxu0 0.0
    %528 = vmatpush1.xpose.msra.mxu0 0.0
    %529 = vmatprep.subr.mxu0 0.0
    %530 = vmatpush1.xpose.msra.mxu0 0.0
    %531 = vmatprep.mubr.f32.mxu0 0.0
    %532 = vmatmul.mubr.f32.gmra.mrb[0].mxu0 %v459
    %v533 = vpop.f32.mrb[0].mxu0
    %v534 = vadd.f32 0.0, %v533
    %v535 = vpop.f32.mrb[0].mxu0
    %536 = vmatprep.mubr.f32.mxu0 0.0
    %537 = vmatmul.mubr.f32.gmra.mrb[0].mxu0 %v461
    %v538 = vpop.f32.mrb[0].mxu0
    %v539 = vadd.f32 0.0, %v538
    %v540 = vpop.f32.mrb[0].mxu0
    %541 = vdwg.mxu0
    %542 = vrot.lane.b32.xlu0 %v260, 110
    %v543 = vpop.permute.xlu0 %542
    %544 = vrot.lane.b32.xlu0 %v266, 110
    %v545 = vpop.permute.xlu0 %544
    %546 = vrot.lane.b32.xlu0 %v260, 86
    %v547 = vpop.permute.xlu0 %546
    %548 = vrot.lane.b32.xlu0 %v266, 86
    %v549 = vpop.permute.xlu0 %548
    %v550 = vsel %vm276, %v543, 0
    %v552 = vsel %vm276, %v545, 0
    %v554 = vsel %vm276, %v547, 0
    %v556 = vsel %vm276, %v549, 0
    %558 = vmatprep.subr.mxu0 0.0
    %559 = vmatpush1.xpose.msra.mxu0 %v554
    %560 = vmatprep.subr.mxu0 0.0
    %561 = vmatpush1.xpose.msra.mxu0 %v556
    %562 = vmatprep.subr.mxu0 0.0
    %563 = vmatpush1.xpose.msra.mxu0 0.0
    %564 = vmatprep.subr.mxu0 0.0
    %565 = vmatpush1.xpose.msra.mxu0 0.0
    %566 = vmatprep.subr.mxu0 0.0
    %567 = vmatpush1.xpose.msra.mxu0 0.0
    %568 = vmatprep.subr.mxu0 0.0
    %569 = vmatpush1.xpose.msra.mxu0 0.0
    %570 = vmatprep.subr.mxu0 0.0
    %571 = vmatpush1.xpose.msra.mxu0 0.0
    %572 = vmatprep.subr.mxu0 0.0
    %573 = vmatpush1.xpose.msra.mxu0 0.0
    %574 = vmatprep.subr.mxu0 0.0
    %575 = vmatpush1.xpose.msra.mxu0 0.0
    %576 = vmatprep.subr.mxu0 0.0
    %577 = vmatpush1.xpose.msra.mxu0 0.0
    %578 = vmatprep.subr.mxu0 0.0
    %579 = vmatpush1.xpose.msra.mxu0 0.0
    %580 = vmatprep.subr.mxu0 0.0
    %581 = vmatpush1.xpose.msra.mxu0 0.0
    %582 = vmatprep.subr.mxu0 0.0
    %583 = vmatpush1.xpose.msra.mxu0 0.0
    %584 = vmatprep.subr.mxu0 0.0
    %585 = vmatpush1.xpose.msra.mxu0 0.0
    %586 = vmatprep.subr.mxu0 0.0
    %587 = vmatpush1.xpose.msra.mxu0 0.0
    %588 = vmatprep.subr.mxu0 0.0
    %589 = vmatpush1.xpose.msra.mxu0 0.0
    %590 = vmatprep.subr.mxu0 0.0
    %591 = vmatpush1.xpose.msra.mxu0 0.0
    %592 = vmatprep.subr.mxu0 0.0
    %593 = vmatpush1.xpose.msra.mxu0 0.0
    %594 = vmatprep.subr.mxu0 0.0
    %595 = vmatpush1.xpose.msra.mxu0 0.0
    %596 = vmatprep.subr.mxu0 0.0
    %597 = vmatpush1.xpose.msra.mxu0 0.0
    %598 = vmatprep.subr.mxu0 0.0
    %599 = vmatpush1.xpose.msra.mxu0 0.0
    %600 = vmatprep.subr.mxu0 0.0
    %601 = vmatpush1.xpose.msra.mxu0 0.0
    %602 = vmatprep.subr.mxu0 0.0
    %603 = vmatpush1.xpose.msra.mxu0 0.0
    %604 = vmatprep.subr.mxu0 0.0
    %605 = vmatpush1.xpose.msra.mxu0 0.0
    %606 = vmatprep.subr.mxu0 0.0
    %607 = vmatpush1.xpose.msra.mxu0 0.0
    %608 = vmatprep.subr.mxu0 0.0
    %609 = vmatpush1.xpose.msra.mxu0 0.0
    %610 = vmatprep.subr.mxu0 0.0
    %611 = vmatpush1.xpose.msra.mxu0 0.0
    %612 = vmatprep.subr.mxu0 0.0
    %613 = vmatpush1.xpose.msra.mxu0 0.0
    %614 = vmatprep.subr.mxu0 0.0
    %615 = vmatpush1.xpose.msra.mxu0 0.0
    %616 = vmatprep.subr.mxu0 0.0
    %617 = vmatpush1.xpose.msra.mxu0 0.0
    %618 = vmatprep.subr.mxu0 0.0
    %619 = vmatpush1.xpose.msra.mxu0 0.0
    %620 = vmatprep.subr.mxu0 0.0
    %621 = vmatpush1.xpose.msra.mxu0 0.0
    %622 = vmatprep.mubr.f32.mxu0 0.0
    %623 = vmatmul.mubr.f32.gmra.mrb[0].mxu0 %v550
    %v624 = vpop.f32.mrb[0].mxu0
    %v625 = vadd.f32 0.0, %v624
    %v626 = vpop.f32.mrb[0].mxu0
    %627 = vmatprep.mubr.f32.mxu0 0.0
    %628 = vmatmul.mubr.f32.gmra.mrb[0].mxu0 %v552
    %v629 = vpop.f32.mrb[0].mxu0
    %v630 = vadd.f32 0.0, %v629
    %v631 = vpop.f32.mrb[0].mxu0
    %632 = vdwg.mxu0
    %v633 = vadd.f32 %v352, %v172
    %v634 = vadd.f32 %v357, %v173
    %v635 = vadd.f32 %v443, %v174
    %v636 = vadd.f32 %v448, %v175
    %v637 = vadd.f32 %v534, %v176
    %v638 = vadd.f32 %v539, %v177
    %v639 = vadd.f32 %v625, %v178
    %v640 = vadd.f32 %v630, %v179
    %vm641 = vcmask 130048
    %v642 = vsel %vm641, %v633, -inf
    %643 = vmax.xlane.f32.xlu0 %v642
    %v644 = vpop.xlane.xlu0 %643
    %v645 = vsel %vm641, %v634, -inf
    %646 = vmax.xlane.f32.xlu0 %v645
    %v647 = vpop.xlane.xlu0 %646
    %v648 = vsel %vm641, %v635, -inf
    %649 = vmax.xlane.f32.xlu0 %v648
    %v650 = vpop.xlane.xlu0 %649
    %v651 = vsel %vm641, %v636, -inf
    %652 = vmax.xlane.f32.xlu0 %v651
    %v653 = vpop.xlane.xlu0 %652
    %v654 = vsel %vm641, %v637, -inf
    %655 = vmax.xlane.f32.xlu0 %v654
    %v656 = vpop.xlane.xlu0 %655
    %v657 = vsel %vm641, %v638, -inf
    %658 = vmax.xlane.f32.xlu0 %v657
    %v659 = vpop.xlane.xlu0 %658
    %v660 = vsel %vm641, %v639, -inf
    %661 = vmax.xlane.f32.xlu0 %v660
    %v662 = vpop.xlane.xlu0 %661
    %v663 = vsel %vm641, %v640, -inf
    %664 = vmax.xlane.f32.xlu0 %v663
    %v665 = vpop.xlane.xlu0 %664
    %v666 = vsub.f32 %v633, %v644
    %v667 = vsub.f32 %v634, %v647
    %v668 = vsub.f32 %v635, %v650
    %v669 = vsub.f32 %v636, %v653
    %v670 = vsub.f32 %v637, %v656
    %v671 = vsub.f32 %v638, %v659
    %v672 = vsub.f32 %v639, %v662
    %v673 = vsub.f32 %v640, %v665
    %v674 = vmul.f32 %v666, 1.442695
    %v675 = vpow.pop %v674
    %v676 = vmul.f32 %v667, 1.442695
    %v677 = vpow.pop %v676
    %v678 = vmul.f32 %v668, 1.442695
    %v679 = vpow.pop %v678
    %v680 = vmul.f32 %v669, 1.442695
    %v681 = vpow.pop %v680
    %v682 = vmul.f32 %v670, 1.442695
    %v683 = vpow.pop %v682
    %v684 = vmul.f32 %v671, 1.442695
    %v685 = vpow.pop %v684
    %v686 = vmul.f32 %v672, 1.442695
    %v687 = vpow.pop %v686
    %v688 = vmul.f32 %v673, 1.442695
    %v689 = vpow.pop %v688
    %v690 = vsel %vm641, %v675, 0.0
    %691 = vadd.xlane.f32.xlu0 %v690
    %v692 = vpop.xlane.xlu0 %691
    %v693 = vsel %vm641, %v677, 0.0
    %694 = vadd.xlane.f32.xlu0 %v693
    %v695 = vpop.xlane.xlu0 %694
    %v696 = vsel %vm641, %v679, 0.0
    %697 = vadd.xlane.f32.xlu0 %v696
    %v698 = vpop.xlane.xlu0 %697
    %v699 = vsel %vm641, %v681, 0.0
    %700 = vadd.xlane.f32.xlu0 %v699
    %v701 = vpop.xlane.xlu0 %700
    %v702 = vsel %vm641, %v683, 0.0
    %703 = vadd.xlane.f32.xlu0 %v702
    %v704 = vpop.xlane.xlu0 %703
    %v705 = vsel %vm641, %v685, 0.0
    %706 = vadd.xlane.f32.xlu0 %v705
    %v707 = vpop.xlane.xlu0 %706
    %v708 = vsel %vm641, %v687, 0.0
    %709 = vadd.xlane.f32.xlu0 %v708
    %v710 = vpop.xlane.xlu0 %709
    %v711 = vsel %vm641, %v689, 0.0
    %712 = vadd.xlane.f32.xlu0 %v711
    %v713 = vpop.xlane.xlu0 %712
    %v714 = vrcp.pop %v692
    %v715 = vrcp.pop %v695
    %v716 = vrcp.pop %v698
    %v717 = vrcp.pop %v701
    %v718 = vrcp.pop %v704
    %v719 = vrcp.pop %v707
    %v720 = vrcp.pop %v710
    %v721 = vrcp.pop %v713
    %v722 = vmul.f32 %v675, %v714
    %v723 = vmul.f32 %v677, %v715
    %v724 = vmul.f32 %v679, %v716
    %v725 = vmul.f32 %v681, %v717
    %v726 = vmul.f32 %v683, %v718
    %v727 = vmul.f32 %v685, %v719
    %v728 = vmul.f32 %v687, %v720
    %v729 = vmul.f32 %v689, %v721
    %730 = vrot.lane.b32.xlu0 %v260, 56
    %v731 = vpop.permute.xlu0 %730
    %732 = vrot.lane.b32.xlu0 %v266, 56
    %v733 = vpop.permute.xlu0 %732
    %v737 = vsel %vm641, %v724, 0
    %v740 = vsel %vm641, %v725, 0
    %742 = vmatprep.subr.mxu0 0.0
    %743 = vmatpush1.msra.mxu0 %v731
    %744 = vmatprep.subr.mxu0 0.0
    %745 = vmatpush1.msra.mxu0 %v733
    %746 = vmatprep.subr.mxu0 0.0
    %747 = vmatpush1.msra.mxu0 0.0
    %748 = vmatprep.subr.mxu0 0.0
    %749 = vmatpush1.msra.mxu0 0.0
    %750 = vmatprep.subr.mxu0 0.0
    %751 = vmatpush1.msra.mxu0 0.0
    %752 = vmatprep.subr.mxu0 0.0
    %753 = vmatpush1.msra.mxu0 0.0
    %754 = vmatprep.subr.mxu0 0.0
    %755 = vmatpush1.msra.mxu0 0.0
    %756 = vmatprep.subr.mxu0 0.0
    %757 = vmatpush1.msra.mxu0 0.0
    %758 = vmatprep.subr.mxu0 0.0
    %759 = vmatpush1.msra.mxu0 0.0
    %760 = vmatprep.subr.mxu0 0.0
    %761 = vmatpush1.msra.mxu0 0.0
    %762 = vmatprep.subr.mxu0 0.0
    %763 = vmatpush1.msra.mxu0 0.0
    %764 = vmatprep.subr.mxu0 0.0
    %765 = vmatpush1.msra.mxu0 0.0
    %766 = vmatprep.subr.mxu0 0.0
    %767 = vmatpush1.msra.mxu0 0.0
    %768 = vmatprep.subr.mxu0 0.0
    %769 = vmatpush1.msra.mxu0 0.0
    %770 = vmatprep.subr.mxu0 0.0
    %771 = vmatpush1.msra.mxu0 0.0
    %772 = vmatprep.subr.mxu0 0.0
    %773 = vmatpush1.msra.mxu0 0.0
    %774 = vmatprep.subr.mxu0 0.0
    %775 = vmatpush1.msra.mxu0 0.0
    %776 = vmatprep.subr.mxu0 0.0
    %777 = vmatpush1.msra.mxu0 0.0
    %778 = vmatprep.subr.mxu0 0.0
    %779 = vmatpush1.msra.mxu0 0.0
    %780 = vmatprep.subr.mxu0 0.0
    %781 = vmatpush1.msra.mxu0 0.0
    %782 = vmatprep.subr.mxu0 0.0
    %783 = vmatpush1.msra.mxu0 0.0
    %784 = vmatprep.subr.mxu0 0.0
    %785 = vmatpush1.msra.mxu0 0.0
    %786 = vmatprep.subr.mxu0 0.0
    %787 = vmatpush1.msra.mxu0 0.0
    %788 = vmatprep.subr.mxu0 0.0
    %789 = vmatpush1.msra.mxu0 0.0
    %790 = vmatprep.subr.mxu0 0.0
    %791 = vmatpush1.msra.mxu0 0.0
    %792 = vmatprep.subr.mxu0 0.0
    %793 = vmatpush1.msra.mxu0 0.0
    %794 = vmatprep.subr.mxu0 0.0
    %795 = vmatpush1.msra.mxu0 0.0
    %796 = vmatprep.subr.mxu0 0.0
    %797 = vmatpush1.msra.mxu0 0.0
    %798 = vmatprep.subr.mxu0 0.0
    %799 = vmatpush1.msra.mxu0 0.0
    %800 = vmatprep.subr.mxu0 0.0
    %801 = vmatpush1.msra.mxu0 0.0
    %802 = vmatprep.subr.mxu0 0.0
    %803 = vmatpush1.msra.mxu0 0.0
    %804 = vmatprep.subr.mxu0 0.0
    %805 = vmatpush1.msra.mxu0 0.0
    %806 = vmatprep.mubr.f32.mxu0 0.0
    %807 = vmatmul.mubr.f32.gmra.mrb[0].mxu0 %v737
    %v808 = vpop.f32.mrb[0].mxu0
    %v809 = vadd.f32 0.0, %v808
    %v810 = vpop.f32.mrb[0].mxu0
    %811 = vmatprep.mubr.f32.mxu0 0.0
    %812 = vmatmul.mubr.f32.gmra.mrb[0].mxu0 %v740
    %v813 = vpop.f32.mrb[0].mxu0
    %v814 = vadd.f32 0.0, %v813
    %v815 = vpop.f32.mrb[0].mxu0
    %816 = vdwg.mxu0
    %817 = vrot.lane.b32.xlu0 %v260, 80
    %v818 = vpop.permute.xlu0 %817
    %819 = vrot.lane.b32.xlu0 %v266, 80
    %v820 = vpop.permute.xlu0 %819
    %v824 = vsel %vm641, %v722, 0
    %v827 = vsel %vm641, %v723, 0
    %829 = vmatprep.subr.mxu0 0.0
    %830 = vmatpush1.msra.mxu0 %v818
    %831 = vmatprep.subr.mxu0 0.0
    %832 = vmatpush1.msra.mxu0 %v820
    %833 = vmatprep.subr.mxu0 0.0
    %834 = vmatpush1.msra.mxu0 0.0
    %835 = vmatprep.subr.mxu0 0.0
    %836 = vmatpush1.msra.mxu0 0.0
    %837 = vmatprep.subr.mxu0 0.0
    %838 = vmatpush1.msra.mxu0 0.0
    %839 = vmatprep.subr.mxu0 0.0
    %840 = vmatpush1.msra.mxu0 0.0
    %841 = vmatprep.subr.mxu0 0.0
    %842 = vmatpush1.msra.mxu0 0.0
    %843 = vmatprep.subr.mxu0 0.0
    %844 = vmatpush1.msra.mxu0 0.0
    %845 = vmatprep.subr.mxu0 0.0
    %846 = vmatpush1.msra.mxu0 0.0
    %847 = vmatprep.subr.mxu0 0.0
    %848 = vmatpush1.msra.mxu0 0.0
    %849 = vmatprep.subr.mxu0 0.0
    %850 = vmatpush1.msra.mxu0 0.0
    %851 = vmatprep.subr.mxu0 0.0
    %852 = vmatpush1.msra.mxu0 0.0
    %853 = vmatprep.subr.mxu0 0.0
    %854 = vmatpush1.msra.mxu0 0.0
    %855 = vmatprep.subr.mxu0 0.0
    %856 = vmatpush1.msra.mxu0 0.0
    %857 = vmatprep.subr.mxu0 0.0
    %858 = vmatpush1.msra.mxu0 0.0
    %859 = vmatprep.subr.mxu0 0.0
    %860 = vmatpush1.msra.mxu0 0.0
    %861 = vmatprep.subr.mxu0 0.0
    %862 = vmatpush1.msra.mxu0 0.0
    %863 = vmatprep.subr.mxu0 0.0
    %864 = vmatpush1.msra.mxu0 0.0
    %865 = vmatprep.subr.mxu0 0.0
    %866 = vmatpush1.msra.mxu0 0.0
    %867 = vmatprep.subr.mxu0 0.0
    %868 = vmatpush1.msra.mxu0 0.0
    %869 = vmatprep.subr.mxu0 0.0
    %870 = vmatpush1.msra.mxu0 0.0
    %871 = vmatprep.subr.mxu0 0.0
    %872 = vmatpush1.msra.mxu0 0.0
    %873 = vmatprep.subr.mxu0 0.0
    %874 = vmatpush1.msra.mxu0 0.0
    %875 = vmatprep.subr.mxu0 0.0
    %876 = vmatpush1.msra.mxu0 0.0
    %877 = vmatprep.subr.mxu0 0.0
    %878 = vmatpush1.msra.mxu0 0.0
    %879 = vmatprep.subr.mxu0 0.0
    %880 = vmatpush1.msra.mxu0 0.0
    %881 = vmatprep.subr.mxu0 0.0
    %882 = vmatpush1.msra.mxu0 0.0
    %883 = vmatprep.subr.mxu0 0.0
    %884 = vmatpush1.msra.mxu0 0.0
    %885 = vmatprep.subr.mxu0 0.0
    %886 = vmatpush1.msra.mxu0 0.0
    %887 = vmatprep.subr.mxu0 0.0
    %888 = vmatpush1.msra.mxu0 0.0
    %889 = vmatprep.subr.mxu0 0.0
    %890 = vmatpush1.msra.mxu0 0.0
    %891 = vmatprep.subr.mxu0 0.0
    %892 = vmatpush1.msra.mxu0 0.0
    %893 = vmatprep.mubr.f32.mxu0 0.0
    %894 = vmatmul.mubr.f32.gmra.mrb[0].mxu0 %v824
    %v895 = vpop.f32.mrb[0].mxu0
    %v896 = vadd.f32 %v809, %v895
    %v897 = vpop.f32.mrb[0].mxu0
    %898 = vmatprep.mubr.f32.mxu0 0.0
    %899 = vmatmul.mubr.f32.gmra.mrb[0].mxu0 %v827
    %v900 = vpop.f32.mrb[0].mxu0
    %v901 = vadd.f32 %v814, %v900
    %v902 = vpop.f32.mrb[0].mxu0
    %903 = vdwg.mxu0
    %904 = vrot.lane.b32.xlu0 %v260, 32
    %v905 = vpop.permute.xlu0 %904
    %906 = vrot.lane.b32.xlu0 %v266, 32
    %v907 = vpop.permute.xlu0 %906
    %v911 = vsel %vm641, %v726, 0
    %v914 = vsel %vm641, %v727, 0
    %916 = vmatprep.subr.mxu0 0.0
    %917 = vmatpush1.msra.mxu0 %v905
    %918 = vmatprep.subr.mxu0 0.0
    %919 = vmatpush1.msra.mxu0 %v907
    %920 = vmatprep.subr.mxu0 0.0
    %921 = vmatpush1.msra.mxu0 0.0
    %922 = vmatprep.subr.mxu0 0.0
    %923 = vmatpush1.msra.mxu0 0.0
    %924 = vmatprep.subr.mxu0 0.0
    %925 = vmatpush1.msra.mxu0 0.0
    %926 = vmatprep.subr.mxu0 0.0
    %927 = vmatpush1.msra.mxu0 0.0
    %928 = vmatprep.subr.mxu0 0.0
    %929 = vmatpush1.msra.mxu0 0.0
    %930 = vmatprep.subr.mxu0 0.0
    %931 = vmatpush1.msra.mxu0 0.0
    %932 = vmatprep.subr.mxu0 0.0
    %933 = vmatpush1.msra.mxu0 0.0
    %934 = vmatprep.subr.mxu0 0.0
    %935 = vmatpush1.msra.mxu0 0.0
    %936 = vmatprep.subr.mxu0 0.0
    %937 = vmatpush1.msra.mxu0 0.0
    %938 = vmatprep.subr.mxu0 0.0
    %939 = vmatpush1.msra.mxu0 0.0
    %940 = vmatprep.subr.mxu0 0.0
    %941 = vmatpush1.msra.mxu0 0.0
    %942 = vmatprep.subr.mxu0 0.0
    %943 = vmatpush1.msra.mxu0 0.0
    %944 = vmatprep.subr.mxu0 0.0
    %945 = vmatpush1.msra.mxu0 0.0
    %946 = vmatprep.subr.mxu0 0.0
    %947 = vmatpush1.msra.mxu0 0.0
    %948 = vmatprep.subr.mxu0 0.0
    %949 = vmatpush1.msra.mxu0 0.0
    %950 = vmatprep.subr.mxu0 0.0
    %951 = vmatpush1.msra.mxu0 0.0
    %952 = vmatprep.subr.mxu0 0.0
    %953 = vmatpush1.msra.mxu0 0.0
    %954 = vmatprep.subr.mxu0 0.0
    %955 = vmatpush1.msra.mxu0 0.0
    %956 = vmatprep.subr.mxu0 0.0
    %957 = vmatpush1.msra.mxu0 0.0
    %958 = vmatprep.subr.mxu0 0.0
    %959 = vmatpush1.msra.mxu0 0.0
    %960 = vmatprep.subr.mxu0 0.0
    %961 = vmatpush1.msra.mxu0 0.0
    %962 = vmatprep.subr.mxu0 0.0
    %963 = vmatpush1.msra.mxu0 0.0
    %964 = vmatprep.subr.mxu0 0.0
    %965 = vmatpush1.msra.mxu0 0.0
    %966 = vmatprep.subr.mxu0 0.0
    %967 = vmatpush1.msra.mxu0 0.0
    %968 = vmatprep.subr.mxu0 0.0
    %969 = vmatpush1.msra.mxu0 0.0
    %970 = vmatprep.subr.mxu0 0.0
    %971 = vmatpush1.msra.mxu0 0.0
    %972 = vmatprep.subr.mxu0 0.0
    %973 = vmatpush1.msra.mxu0 0.0
    %974 = vmatprep.subr.mxu0 0.0
    %975 = vmatpush1.msra.mxu0 0.0
    %976 = vmatprep.subr.mxu0 0.0
    %977 = vmatpush1.msra.mxu0 0.0
    %978 = vmatprep.subr.mxu0 0.0
    %979 = vmatpush1.msra.mxu0 0.0
    %980 = vmatprep.mubr.f32.mxu0 0.0
    %981 = vmatmul.mubr.f32.gmra.mrb[0].mxu0 %v911
    %v982 = vpop.f32.mrb[0].mxu0
    %v983 = vadd.f32 0.0, %v982
    %v984 = vpop.f32.mrb[0].mxu0
    %985 = vmatprep.mubr.f32.mxu0 0.0
    %986 = vmatmul.mubr.f32.gmra.mrb[0].mxu0 %v914
    %v987 = vpop.f32.mrb[0].mxu0
    %v988 = vadd.f32 0.0, %v987
    %v989 = vpop.f32.mrb[0].mxu0
    %990 = vdwg.mxu0
    %v991 = vadd.f32 %v896, %v983
    %v992 = vadd.f32 %v901, %v988
    %v994 = vsel %vm641, %v728, 0
    %v997 = vsel %vm641, %v729, 0
    %999 = vmatprep.subr.mxu0 0.0
    %1000 = vmatpush1.msra.mxu0 %v262
    %1001 = vmatprep.subr.mxu0 0.0
    %1002 = vmatpush1.msra.mxu0 %v268
    %1003 = vmatprep.subr.mxu0 0.0
    %1004 = vmatpush1.msra.mxu0 0.0
    %1005 = vmatprep.subr.mxu0 0.0
    %1006 = vmatpush1.msra.mxu0 0.0
    %1007 = vmatprep.subr.mxu0 0.0
    %1008 = vmatpush1.msra.mxu0 0.0
    %1009 = vmatprep.subr.mxu0 0.0
    %1010 = vmatpush1.msra.mxu0 0.0
    %1011 = vmatprep.subr.mxu0 0.0
    %1012 = vmatpush1.msra.mxu0 0.0
    %1013 = vmatprep.subr.mxu0 0.0
    %1014 = vmatpush1.msra.mxu0 0.0
    %1015 = vmatprep.subr.mxu0 0.0
    %1016 = vmatpush1.msra.mxu0 0.0
    %1017 = vmatprep.subr.mxu0 0.0
    %1018 = vmatpush1.msra.mxu0 0.0
    %1019 = vmatprep.subr.mxu0 0.0
    %1020 = vmatpush1.msra.mxu0 0.0
    %1021 = vmatprep.subr.mxu0 0.0
    %1022 = vmatpush1.msra.mxu0 0.0
    %1023 = vmatprep.subr.mxu0 0.0
    %1024 = vmatpush1.msra.mxu0 0.0
    %1025 = vmatprep.subr.mxu0 0.0
    %1026 = vmatpush1.msra.mxu0 0.0
    %1027 = vmatprep.subr.mxu0 0.0
    %1028 = vmatpush1.msra.mxu0 0.0
    %1029 = vmatprep.subr.mxu0 0.0
    %1030 = vmatpush1.msra.mxu0 0.0
    %1031 = vmatprep.subr.mxu0 0.0
    %1032 = vmatpush1.msra.mxu0 0.0
    %1033 = vmatprep.subr.mxu0 0.0
    %1034 = vmatpush1.msra.mxu0 0.0
    %1035 = vmatprep.subr.mxu0 0.0
    %1036 = vmatpush1.msra.mxu0 0.0
    %1037 = vmatprep.subr.mxu0 0.0
    %1038 = vmatpush1.msra.mxu0 0.0
    %1039 = vmatprep.subr.mxu0 0.0
    %1040 = vmatpush1.msra.mxu0 0.0
    %1041 = vmatprep.subr.mxu0 0.0
    %1042 = vmatpush1.msra.mxu0 0.0
    %1043 = vmatprep.subr.mxu0 0.0
    %1044 = vmatpush1.msra.mxu0 0.0
    %1045 = vmatprep.subr.mxu0 0.0
    %1046 = vmatpush1.msra.mxu0 0.0
    %1047 = vmatprep.subr.mxu0 0.0
    %1048 = vmatpush1.msra.mxu0 0.0
    %1049 = vmatprep.subr.mxu0 0.0
    %1050 = vmatpush1.msra.mxu0 0.0
    %1051 = vmatprep.subr.mxu0 0.0
    %1052 = vmatpush1.msra.mxu0 0.0
    %1053 = vmatprep.subr.mxu0 0.0
    %1054 = vmatpush1.msra.mxu0 0.0
    %1055 = vmatprep.subr.mxu0 0.0
    %1056 = vmatpush1.msra.mxu0 0.0
    %1057 = vmatprep.subr.mxu0 0.0
    %1058 = vmatpush1.msra.mxu0 0.0
    %1059 = vmatprep.subr.mxu0 0.0
    %1060 = vmatpush1.msra.mxu0 0.0
    %1061 = vmatprep.subr.mxu0 0.0
    %1062 = vmatpush1.msra.mxu0 0.0
    %1063 = vmatprep.mubr.f32.mxu0 0.0
    %1064 = vmatmul.mubr.f32.gmra.mrb[0].mxu0 %v994
    %v1065 = vpop.f32.mrb[0].mxu0
    %v1066 = vadd.f32 0.0, %v1065
    %v1067 = vpop.f32.mrb[0].mxu0
    %1068 = vmatprep.mubr.f32.mxu0 0.0
    %1069 = vmatmul.mubr.f32.gmra.mrb[0].mxu0 %v997
    %v1070 = vpop.f32.mrb[0].mxu0
    %v1071 = vadd.f32 0.0, %v1070
    %v1072 = vpop.f32.mrb[0].mxu0
    %1073 = vdwg.mxu0
    %v1074 = vadd.f32 %v991, %v1066
    %v1075 = vadd.f32 %v992, %v1071
    %v1076 = vld [vmem:[%s4] sm:$0xff]
    %v1077 = vld [vmem:[%s4 + $0x8] sm:$0xff]
    %v1078 = vld [vmem:[%s4 + $0x10] sm:$0xff]
    %v1079 = vld [vmem:[%s4 + $0x18] sm:$0xff]
    %v1080 = vld [vmem:[%s4 + $0x20] sm:$0xff]
    %v1081 = vld [vmem:[%s4 + $0x28] sm:$0xff]
    %v1082 = vld [vmem:[%s4 + $0x30] sm:$0xff]
    %v1083 = vld [vmem:[%s4 + $0x38] sm:$0xff]
    %v1084 = vld [vmem:[%s4 + $0x40] sm:$0xff]
    %v1085 = vld [vmem:[%s4 + $0x48] sm:$0xff]
    %v1086 = vld [vmem:[%s4 + $0x50] sm:$0xff]
    %v1087 = vld [vmem:[%s4 + $0x58] sm:$0xff]
    %v1088 = vld [vmem:[%s4 + $0x60] sm:$0xff]
    %v1089 = vld [vmem:[%s4 + $0x68] sm:$0xff]
    %v1090 = vld [vmem:[%s4 + $0x70] sm:$0xff]
    %v1091 = vld [vmem:[%s5] sm:$0x3]
    %v1092 = vlaneseq
    %v1093 = vshrl.u32 %v1092, 7
    %v1094 = vsub.s32 0, %v1093
    %v1095 = vrot.slane %v1091, %v1094
    %v1097 = vsel %vm186, %v1074, 0
    %v1100 = vsel %vm186, %v1075, 0
    %1102 = vmatprep.subr.mxu0 0.0
    %1103 = vmatpush1.msra.mxu0 %v1076
    %1104 = vmatprep.subr.mxu0 0.0
    %1105 = vmatpush1.msra.mxu0 %v1077
    %1106 = vmatprep.subr.mxu0 0.0
    %1107 = vmatpush1.msra.mxu0 %v1078
    %1108 = vmatprep.subr.mxu0 0.0
    %1109 = vmatpush1.msra.mxu0 0.0
    %1110 = vmatprep.subr.mxu0 0.0
    %1111 = vmatpush1.msra.mxu0 0.0
    %1112 = vmatprep.subr.mxu0 0.0
    %1113 = vmatpush1.msra.mxu0 0.0
    %1114 = vmatprep.subr.mxu0 0.0
    %1115 = vmatpush1.msra.mxu0 0.0
    %1116 = vmatprep.subr.mxu0 0.0
    %1117 = vmatpush1.msra.mxu0 0.0
    %1118 = vmatprep.subr.mxu0 0.0
    %1119 = vmatpush1.msra.mxu0 0.0
    %1120 = vmatprep.subr.mxu0 0.0
    %1121 = vmatpush1.msra.mxu0 0.0
    %1122 = vmatprep.subr.mxu0 0.0
    %1123 = vmatpush1.msra.mxu0 0.0
    %1124 = vmatprep.subr.mxu0 0.0
    %1125 = vmatpush1.msra.mxu0 0.0
    %1126 = vmatprep.subr.mxu0 0.0
    %1127 = vmatpush1.msra.mxu0 0.0
    %1128 = vmatprep.subr.mxu0 0.0
    %1129 = vmatpush1.msra.mxu0 0.0
    %1130 = vmatprep.subr.mxu0 0.0
    %1131 = vmatpush1.msra.mxu0 0.0
    %1132 = vmatprep.subr.mxu0 0.0
    %1133 = vmatpush1.msra.mxu0 0.0
    %1134 = vmatprep.subr.mxu0 0.0
    %1135 = vmatpush1.msra.mxu0 0.0
    %1136 = vmatprep.subr.mxu0 0.0
    %1137 = vmatpush1.msra.mxu0 0.0
    %1138 = vmatprep.subr.mxu0 0.0
    %1139 = vmatpush1.msra.mxu0 0.0
    %1140 = vmatprep.subr.mxu0 0.0
    %1141 = vmatpush1.msra.mxu0 0.0
    %1142 = vmatprep.subr.mxu0 0.0
    %1143 = vmatpush1.msra.mxu0 0.0
    %1144 = vmatprep.subr.mxu0 0.0
    %1145 = vmatpush1.msra.mxu0 0.0
    %1146 = vmatprep.subr.mxu0 0.0
    %1147 = vmatpush1.msra.mxu0 0.0
    %1148 = vmatprep.subr.mxu0 0.0
    %1149 = vmatpush1.msra.mxu0 0.0
    %1150 = vmatprep.subr.mxu0 0.0
    %1151 = vmatpush1.msra.mxu0 0.0
    %1152 = vmatprep.subr.mxu0 0.0
    %1153 = vmatpush1.msra.mxu0 0.0
    %1154 = vmatprep.subr.mxu0 0.0
    %1155 = vmatpush1.msra.mxu0 0.0
    %1156 = vmatprep.subr.mxu0 0.0
    %1157 = vmatpush1.msra.mxu0 0.0
    %1158 = vmatprep.subr.mxu0 0.0
    %1159 = vmatpush1.msra.mxu0 0.0
    %1160 = vmatprep.subr.mxu0 0.0
    %1161 = vmatpush1.msra.mxu0 0.0
    %1162 = vmatprep.subr.mxu0 0.0
    %1163 = vmatpush1.msra.mxu0 0.0
    %1164 = vmatprep.subr.mxu0 0.0
    %1165 = vmatpush1.msra.mxu0 0.0
    %1166 = vmatprep.mubr.f32.mxu0 0.0
    %1167 = vmatmul.mubr.f32.gmra.mrb[0].mxu0 %v1097
    %v1168 = vpop.f32.mrb[0].mxu0
    %v1169 = vadd.f32 %v1095, %v1168
    %v1170 = vpop.f32.mrb[0].mxu0
    %1171 = vmatprep.mubr.f32.mxu0 0.0
    %1172 = vmatmul.mubr.f32.gmra.mrb[0].mxu0 %v1100
    %v1173 = vpop.f32.mrb[0].mxu0
    %v1174 = vadd.f32 %v1095, %v1173
    %v1175 = vpop.f32.mrb[0].mxu0
    %1176 = vdwg.mxu0
    %v1177 = vmax.f32 %v1169, 0.0
    %v1178 = vmax.f32 %v1174, 0.0
    %v1179 = vlaneseq
    %v1180 = vshrl.u32 %v1179, 7
    %v1181 = vsub.s32 1, %v1180
    %v1182 = vrot.slane %v1091, %v1181
    %vm1183 = vcmask 785408
    %v1185 = vsel %vm1183, %v1177, 0
    %v1188 = vsel %vm1183, %v1178, 0
    %1190 = vmatprep.subr.mxu0 0.0
    %1191 = vmatpush1.msra.mxu0 %v1079
    %1192 = vmatprep.subr.mxu0 0.0
    %1193 = vmatpush1.msra.mxu0 %v1080
    %1194 = vmatprep.subr.mxu0 0.0
    %1195 = vmatpush1.msra.mxu0 %v1081
    %1196 = vmatprep.subr.mxu0 0.0
    %1197 = vmatpush1.msra.mxu0 %v1082
    %1198 = vmatprep.subr.mxu0 0.0
    %1199 = vmatpush1.msra.mxu0 %v1083
    %1200 = vmatprep.subr.mxu0 0.0
    %1201 = vmatpush1.msra.mxu0 %v1084
    %1202 = vmatprep.subr.mxu0 0.0
    %1203 = vmatpush1.msra.mxu0 %v1085
    %1204 = vmatprep.subr.mxu0 0.0
    %1205 = vmatpush1.msra.mxu0 %v1086
    %1206 = vmatprep.subr.mxu0 0.0
    %1207 = vmatpush1.msra.mxu0 %v1087
    %1208 = vmatprep.subr.mxu0 0.0
    %1209 = vmatpush1.msra.mxu0 %v1088
    %1210 = vmatprep.subr.mxu0 0.0
    %1211 = vmatpush1.msra.mxu0 %v1089
    %1212 = vmatprep.subr.mxu0 0.0
    %1213 = vmatpush1.msra.mxu0 %v1090
    %1214 = vmatprep.subr.mxu0 0.0
    %1215 = vmatpush1.msra.mxu0 0.0
    %1216 = vmatprep.subr.mxu0 0.0
    %1217 = vmatpush1.msra.mxu0 0.0
    %1218 = vmatprep.subr.mxu0 0.0
    %1219 = vmatpush1.msra.mxu0 0.0
    %1220 = vmatprep.subr.mxu0 0.0
    %1221 = vmatpush1.msra.mxu0 0.0
    %1222 = vmatprep.subr.mxu0 0.0
    %1223 = vmatpush1.msra.mxu0 0.0
    %1224 = vmatprep.subr.mxu0 0.0
    %1225 = vmatpush1.msra.mxu0 0.0
    %1226 = vmatprep.subr.mxu0 0.0
    %1227 = vmatpush1.msra.mxu0 0.0
    %1228 = vmatprep.subr.mxu0 0.0
    %1229 = vmatpush1.msra.mxu0 0.0
    %1230 = vmatprep.subr.mxu0 0.0
    %1231 = vmatpush1.msra.mxu0 0.0
    %1232 = vmatprep.subr.mxu0 0.0
    %1233 = vmatpush1.msra.mxu0 0.0
    %1234 = vmatprep.subr.mxu0 0.0
    %1235 = vmatpush1.msra.mxu0 0.0
    %1236 = vmatprep.subr.mxu0 0.0
    %1237 = vmatpush1.msra.mxu0 0.0
    %1238 = vmatprep.subr.mxu0 0.0
    %1239 = vmatpush1.msra.mxu0 0.0
    %1240 = vmatprep.subr.mxu0 0.0
    %1241 = vmatpush1.msra.mxu0 0.0
    %1242 = vmatprep.subr.mxu0 0.0
    %1243 = vmatpush1.msra.mxu0 0.0
    %1244 = vmatprep.subr.mxu0 0.0
    %1245 = vmatpush1.msra.mxu0 0.0
    %1246 = vmatprep.subr.mxu0 0.0
    %1247 = vmatpush1.msra.mxu0 0.0
    %1248 = vmatprep.subr.mxu0 0.0
    %1249 = vmatpush1.msra.mxu0 0.0
    %1250 = vmatprep.subr.mxu0 0.0
    %1251 = vmatpush1.msra.mxu0 0.0
    %1252 = vmatprep.subr.mxu0 0.0
    %1253 = vmatpush1.msra.mxu0 0.0
    %1254 = vmatprep.mubr.f32.mxu0 0.0
    %1255 = vmatmul.mubr.f32.gmra.mrb[0].mxu0 %v1185
    %v1256 = vpop.f32.mrb[0].mxu0
    %v1257 = vadd.f32 %v1182, %v1256
    %v1258 = vpop.f32.mrb[0].mxu0
    %1259 = vmatprep.mubr.f32.mxu0 0.0
    %1260 = vmatmul.mubr.f32.gmra.mrb[0].mxu0 %v1188
    %v1261 = vpop.f32.mrb[0].mxu0
    %v1262 = vadd.f32 %v1182, %v1261
    %v1263 = vpop.f32.mrb[0].mxu0
    %1264 = vdwg.mxu0
    %s1265 = scalar_lea.vmem %s3, 48
    %v1266 = vld [vmem:[%s1265] sm:$0xff]
    %v1267 = vld [vmem:[%s1265 + $0x8] sm:$0xff]
    %v1268 = vld [vmem:[%s1265 + $0x10] sm:$0xff]
    %v1269 = vld [vmem:[%s1265 + $0x18] sm:$0xff]
    %v1270 = vld [vmem:[%s1265 + $0x20] sm:$0xff]
    %v1271 = vld [vmem:[%s1265 + $0x28] sm:$0xff]
    %v1273 = vsel %vm186, %v1257, 0
    %v1276 = vsel %vm186, %v1262, 0
    %1278 = vmatprep.subr.mxu0 %v1267
    %1279 = vmatpush1.msra.mxu0 %v1266
    %1280 = vmatprep.subr.mxu0 %v1269
    %1281 = vmatpush1.msra.mxu0 %v1268
    %1282 = vmatprep.subr.mxu0 %v1271
    %1283 = vmatpush1.msra.mxu0 %v1270
    %1284 = vmatprep.subr.mxu0 0.0
    %1285 = vmatpush1.msra.mxu0 0.0
    %1286 = vmatprep.subr.mxu0 0.0
    %1287 = vmatpush1.msra.mxu0 0.0
    %1288 = vmatprep.subr.mxu0 0.0
    %1289 = vmatpush1.msra.mxu0 0.0
    %1290 = vmatprep.subr.mxu0 0.0
    %1291 = vmatpush1.msra.mxu0 0.0
    %1292 = vmatprep.subr.mxu0 0.0
    %1293 = vmatpush1.msra.mxu0 0.0
    %1294 = vmatprep.subr.mxu0 0.0
    %1295 = vmatpush1.msra.mxu0 0.0
    %1296 = vmatprep.subr.mxu0 0.0
    %1297 = vmatpush1.msra.mxu0 0.0
    %1298 = vmatprep.subr.mxu0 0.0
    %1299 = vmatpush1.msra.mxu0 0.0
    %1300 = vmatprep.subr.mxu0 0.0
    %1301 = vmatpush1.msra.mxu0 0.0
    %1302 = vmatprep.subr.mxu0 0.0
    %1303 = vmatpush1.msra.mxu0 0.0
    %1304 = vmatprep.subr.mxu0 0.0
    %1305 = vmatpush1.msra.mxu0 0.0
    %1306 = vmatprep.subr.mxu0 0.0
    %1307 = vmatpush1.msra.mxu0 0.0
    %1308 = vmatprep.subr.mxu0 0.0
    %1309 = vmatpush1.msra.mxu0 0.0
    %1310 = vmatprep.subr.mxu0 0.0
    %1311 = vmatpush1.msra.mxu0 0.0
    %1312 = vmatprep.subr.mxu0 0.0
    %1313 = vmatpush1.msra.mxu0 0.0
    %1314 = vmatprep.subr.mxu0 0.0
    %1315 = vmatpush1.msra.mxu0 0.0
    %1316 = vmatprep.subr.mxu0 0.0
    %1317 = vmatpush1.msra.mxu0 0.0
    %1318 = vmatprep.subr.mxu0 0.0
    %1319 = vmatpush1.msra.mxu0 0.0
    %1320 = vmatprep.subr.mxu0 0.0
    %1321 = vmatpush1.msra.mxu0 0.0
    %1322 = vmatprep.subr.mxu0 0.0
    %1323 = vmatpush1.msra.mxu0 0.0
    %1324 = vmatprep.subr.mxu0 0.0
    %1325 = vmatpush1.msra.mxu0 0.0
    %1326 = vmatprep.subr.mxu0 0.0
    %1327 = vmatpush1.msra.mxu0 0.0
    %1328 = vmatprep.subr.mxu0 0.0
    %1329 = vmatpush1.msra.mxu0 0.0
    %1330 = vmatprep.subr.mxu0 0.0
    %1331 = vmatpush1.msra.mxu0 0.0
    %1332 = vmatprep.subr.mxu0 0.0
    %1333 = vmatpush1.msra.mxu0 0.0
    %1334 = vmatprep.subr.mxu0 0.0
    %1335 = vmatpush1.msra.mxu0 0.0
    %1336 = vmatprep.subr.mxu0 0.0
    %1337 = vmatpush1.msra.mxu0 0.0
    %1338 = vmatprep.subr.mxu0 0.0
    %1339 = vmatpush1.msra.mxu0 0.0
    %1340 = vmatprep.subr.mxu0 0.0
    %1341 = vmatpush1.msra.mxu0 0.0
    %1342 = vmatprep.mubr.f32.mxu0 0.0
    %1343 = vmatmul.mubr.f32.gmra.mrb[0].mxu0 %v1273
    %v1344 = vpop.f32.mrb[0].mxu0
    %v1345 = vadd.f32 0.0, %v1344
    %v1346 = vpop.f32.mrb[0].mxu0
    %v1347 = vadd.f32 0.0, %v1346
    %1348 = vmatprep.mubr.f32.mxu0 0.0
    %1349 = vmatmul.mubr.f32.gmra.mrb[0].mxu0 %v1276
    %v1350 = vpop.f32.mrb[0].mxu0
    %v1351 = vadd.f32 0.0, %v1350
    %v1352 = vpop.f32.mrb[0].mxu0
    %v1353 = vadd.f32 0.0, %v1352
    %1354 = vdwg.mxu0
    %1357 = vrot.lane.b32.xlu0 %v1345, 104
    %v1358 = vpop.permute.xlu0 %1357
    %1359 = vrot.lane.b32.xlu0 %v1351, 104
    %v1360 = vpop.permute.xlu0 %1359
    %v1361 = vsel %vm276, %v1345, 0
    %v1363 = vsel %vm276, %v1351, 0
    %v1365 = vsel %vm276, %v1358, 0
    %v1367 = vsel %vm276, %v1360, 0
    %1369 = vmatprep.subr.mxu0 0.0
    %1370 = vmatpush1.xpose.msra.mxu0 %v1365
    %1371 = vmatprep.subr.mxu0 0.0
    %1372 = vmatpush1.xpose.msra.mxu0 %v1367
    %1373 = vmatprep.subr.mxu0 0.0
    %1374 = vmatpush1.xpose.msra.mxu0 0.0
    %1375 = vmatprep.subr.mxu0 0.0
    %1376 = vmatpush1.xpose.msra.mxu0 0.0
    %1377 = vmatprep.subr.mxu0 0.0
    %1378 = vmatpush1.xpose.msra.mxu0 0.0
    %1379 = vmatprep.subr.mxu0 0.0
    %1380 = vmatpush1.xpose.msra.mxu0 0.0
    %1381 = vmatprep.subr.mxu0 0.0
    %1382 = vmatpush1.xpose.msra.mxu0 0.0
    %1383 = vmatprep.subr.mxu0 0.0
    %1384 = vmatpush1.xpose.msra.mxu0 0.0
    %1385 = vmatprep.subr.mxu0 0.0
    %1386 = vmatpush1.xpose.msra.mxu0 0.0
    %1387 = vmatprep.subr.mxu0 0.0
    %1388 = vmatpush1.xpose.msra.mxu0 0.0
    %1389 = vmatprep.subr.mxu0 0.0
    %1390 = vmatpush1.xpose.msra.mxu0 0.0
    %1391 = vmatprep.subr.mxu0 0.0
    %1392 = vmatpush1.xpose.msra.mxu0 0.0
    %1393 = vmatprep.subr.mxu0 0.0
    %1394 = vmatpush1.xpose.msra.mxu0 0.0
    %1395 = vmatprep.subr.mxu0 0.0
    %1396 = vmatpush1.xpose.msra.mxu0 0.0
    %1397 = vmatprep.subr.mxu0 0.0
    %1398 = vmatpush1.xpose.msra.mxu0 0.0
    %1399 = vmatprep.subr.mxu0 0.0
    %1400 = vmatpush1.xpose.msra.mxu0 0.0
    %1401 = vmatprep.subr.mxu0 0.0
    %1402 = vmatpush1.xpose.msra.mxu0 0.0
    %1403 = vmatprep.subr.mxu0 0.0
    %1404 = vmatpush1.xpose.msra.mxu0 0.0
    %1405 = vmatprep.subr.mxu0 0.0
    %1406 = vmatpush1.xpose.msra.mxu0 0.0
    %1407 = vmatprep.subr.mxu0 0.0
    %1408 = vmatpush1.xpose.msra.mxu0 0.0
    %1409 = vmatprep.subr.mxu0 0.0
    %1410 = vmatpush1.xpose.msra.mxu0 0.0
    %1411 = vmatprep.subr.mxu0 0.0
    %1412 = vmatpush1.xpose.msra.mxu0 0.0
    %1413 = vmatprep.subr.mxu0 0.0
    %1414 = vmatpush1.xpose.msra.mxu0 0.0
    %1415 = vmatprep.subr.mxu0 0.0
    %1416 = vmatpush1.xpose.msra.mxu0 0.0
    %1417 = vmatprep.subr.mxu0 0.0
    %1418 = vmatpush1.xpose.msra.mxu0 0.0
    %1419 = vmatprep.subr.mxu0 0.0
    %1420 = vmatpush1.xpose.msra.mxu0 0.0
    %1421 = vmatprep.subr.mxu0 0.0
    %1422 = vmatpush1.xpose.msra.mxu0 0.0
    %1423 = vmatprep.subr.mxu0 0.0
    %1424 = vmatpush1.xpose.msra.mxu0 0.0
    %1425 = vmatprep.subr.mxu0 0.0
    %1426 = vmatpush1.xpose.msra.mxu0 0.0
    %1427 = vmatprep.subr.mxu0 0.0
    %1428 = vmatpush1.xpose.msra.mxu0 0.0
    %1429 = vmatprep.subr.mxu0 0.0
    %1430 = vmatpush1.xpose.msra.mxu0 0.0
    %1431 = vmatprep.subr.mxu0 0.0
    %1432 = vmatpush1.xpose.msra.mxu0 0.0
    %1433 = vmatprep.mubr.f32.mxu0 0.0
    %1434 = vmatmul.mubr.f32.gmra.mrb[0].mxu0 %v1361
    %v1435 = vpop.f32.mrb[0].mxu0
    %v1436 = vadd.f32 0.0, %v1435
    %v1437 = vpop.f32.mrb[0].mxu0
    %1438 = vmatprep.mubr.f32.mxu0 0.0
    %1439 = vmatmul.mubr.f32.gmra.mrb[0].mxu0 %v1363
    %v1440 = vpop.f32.mrb[0].mxu0
    %v1441 = vadd.f32 0.0, %v1440
    %v1442 = vpop.f32.mrb[0].mxu0
    %1443 = vdwg.mxu0
    %1444 = vrot.lane.b32.xlu0 %v1345, 122
    %v1445 = vpop.permute.xlu0 %1444
    %1446 = vrot.lane.b32.xlu0 %v1351, 122
    %v1447 = vpop.permute.xlu0 %1446
    %1448 = vrot.lane.b32.xlu0 %v1345, 98
    %v1449 = vpop.permute.xlu0 %1448
    %1450 = vrot.lane.b32.xlu0 %v1351, 98
    %v1451 = vpop.permute.xlu0 %1450
    %v1452 = vsel %vm276, %v1445, 0
    %v1454 = vsel %vm276, %v1447, 0
    %v1456 = vsel %vm276, %v1449, 0
    %v1458 = vsel %vm276, %v1451, 0
    %1460 = vmatprep.subr.mxu0 0.0
    %1461 = vmatpush1.xpose.msra.mxu0 %v1456
    %1462 = vmatprep.subr.mxu0 0.0
    %1463 = vmatpush1.xpose.msra.mxu0 %v1458
    %1464 = vmatprep.subr.mxu0 0.0
    %1465 = vmatpush1.xpose.msra.mxu0 0.0
    %1466 = vmatprep.subr.mxu0 0.0
    %1467 = vmatpush1.xpose.msra.mxu0 0.0
    %1468 = vmatprep.subr.mxu0 0.0
    %1469 = vmatpush1.xpose.msra.mxu0 0.0
    %1470 = vmatprep.subr.mxu0 0.0
    %1471 = vmatpush1.xpose.msra.mxu0 0.0
    %1472 = vmatprep.subr.mxu0 0.0
    %1473 = vmatpush1.xpose.msra.mxu0 0.0
    %1474 = vmatprep.subr.mxu0 0.0
    %1475 = vmatpush1.xpose.msra.mxu0 0.0
    %1476 = vmatprep.subr.mxu0 0.0
    %1477 = vmatpush1.xpose.msra.mxu0 0.0
    %1478 = vmatprep.subr.mxu0 0.0
    %1479 = vmatpush1.xpose.msra.mxu0 0.0
    %1480 = vmatprep.subr.mxu0 0.0
    %1481 = vmatpush1.xpose.msra.mxu0 0.0
    %1482 = vmatprep.subr.mxu0 0.0
    %1483 = vmatpush1.xpose.msra.mxu0 0.0
    %1484 = vmatprep.subr.mxu0 0.0
    %1485 = vmatpush1.xpose.msra.mxu0 0.0
    %1486 = vmatprep.subr.mxu0 0.0
    %1487 = vmatpush1.xpose.msra.mxu0 0.0
    %1488 = vmatprep.subr.mxu0 0.0
    %1489 = vmatpush1.xpose.msra.mxu0 0.0
    %1490 = vmatprep.subr.mxu0 0.0
    %1491 = vmatpush1.xpose.msra.mxu0 0.0
    %1492 = vmatprep.subr.mxu0 0.0
    %1493 = vmatpush1.xpose.msra.mxu0 0.0
    %1494 = vmatprep.subr.mxu0 0.0
    %1495 = vmatpush1.xpose.msra.mxu0 0.0
    %1496 = vmatprep.subr.mxu0 0.0
    %1497 = vmatpush1.xpose.msra.mxu0 0.0
    %1498 = vmatprep.subr.mxu0 0.0
    %1499 = vmatpush1.xpose.msra.mxu0 0.0
    %1500 = vmatprep.subr.mxu0 0.0
    %1501 = vmatpush1.xpose.msra.mxu0 0.0
    %1502 = vmatprep.subr.mxu0 0.0
    %1503 = vmatpush1.xpose.msra.mxu0 0.0
    %1504 = vmatprep.subr.mxu0 0.0
    %1505 = vmatpush1.xpose.msra.mxu0 0.0
    %1506 = vmatprep.subr.mxu0 0.0
    %1507 = vmatpush1.xpose.msra.mxu0 0.0
    %1508 = vmatprep.subr.mxu0 0.0
    %1509 = vmatpush1.xpose.msra.mxu0 0.0
    %1510 = vmatprep.subr.mxu0 0.0
    %1511 = vmatpush1.xpose.msra.mxu0 0.0
    %1512 = vmatprep.subr.mxu0 0.0
    %1513 = vmatpush1.xpose.msra.mxu0 0.0
    %1514 = vmatprep.subr.mxu0 0.0
    %1515 = vmatpush1.xpose.msra.mxu0 0.0
    %1516 = vmatprep.subr.mxu0 0.0
    %1517 = vmatpush1.xpose.msra.mxu0 0.0
    %1518 = vmatprep.subr.mxu0 0.0
    %1519 = vmatpush1.xpose.msra.mxu0 0.0
    %1520 = vmatprep.subr.mxu0 0.0
    %1521 = vmatpush1.xpose.msra.mxu0 0.0
    %1522 = vmatprep.subr.mxu0 0.0
    %1523 = vmatpush1.xpose.msra.mxu0 0.0
    %1524 = vmatprep.mubr.f32.mxu0 0.0
    %1525 = vmatmul.mubr.f32.gmra.mrb[0].mxu0 %v1452
    %v1526 = vpop.f32.mrb[0].mxu0
    %v1527 = vadd.f32 0.0, %v1526
    %v1528 = vpop.f32.mrb[0].mxu0
    %1529 = vmatprep.mubr.f32.mxu0 0.0
    %1530 = vmatmul.mubr.f32.gmra.mrb[0].mxu0 %v1454
    %v1531 = vpop.f32.mrb[0].mxu0
    %v1532 = vadd.f32 0.0, %v1531
    %v1533 = vpop.f32.mrb[0].mxu0
    %1534 = vdwg.mxu0
    %1535 = vrot.lane.b32.xlu0 %v1345, 116
    %v1536 = vpop.permute.xlu0 %1535
    %1537 = vrot.lane.b32.xlu0 %v1351, 116
    %v1538 = vpop.permute.xlu0 %1537
    %1539 = vrot.lane.b32.xlu0 %v1345, 92
    %v1540 = vpop.permute.xlu0 %1539
    %1541 = vrot.lane.b32.xlu0 %v1351, 92
    %v1542 = vpop.permute.xlu0 %1541
    %v1543 = vsel %vm276, %v1536, 0
    %v1545 = vsel %vm276, %v1538, 0
    %v1547 = vsel %vm276, %v1540, 0
    %v1549 = vsel %vm276, %v1542, 0
    %1551 = vmatprep.subr.mxu0 0.0
    %1552 = vmatpush1.xpose.msra.mxu0 %v1547
    %1553 = vmatprep.subr.mxu0 0.0
    %1554 = vmatpush1.xpose.msra.mxu0 %v1549
    %1555 = vmatprep.subr.mxu0 0.0
    %1556 = vmatpush1.xpose.msra.mxu0 0.0
    %1557 = vmatprep.subr.mxu0 0.0
    %1558 = vmatpush1.xpose.msra.mxu0 0.0
    %1559 = vmatprep.subr.mxu0 0.0
    %1560 = vmatpush1.xpose.msra.mxu0 0.0
    %1561 = vmatprep.subr.mxu0 0.0
    %1562 = vmatpush1.xpose.msra.mxu0 0.0
    %1563 = vmatprep.subr.mxu0 0.0
    %1564 = vmatpush1.xpose.msra.mxu0 0.0
    %1565 = vmatprep.subr.mxu0 0.0
    %1566 = vmatpush1.xpose.msra.mxu0 0.0
    %1567 = vmatprep.subr.mxu0 0.0
    %1568 = vmatpush1.xpose.msra.mxu0 0.0
    %1569 = vmatprep.subr.mxu0 0.0
    %1570 = vmatpush1.xpose.msra.mxu0 0.0
    %1571 = vmatprep.subr.mxu0 0.0
    %1572 = vmatpush1.xpose.msra.mxu0 0.0
    %1573 = vmatprep.subr.mxu0 0.0
    %1574 = vmatpush1.xpose.msra.mxu0 0.0
    %1575 = vmatprep.subr.mxu0 0.0
    %1576 = vmatpush1.xpose.msra.mxu0 0.0
    %1577 = vmatprep.subr.mxu0 0.0
    %1578 = vmatpush1.xpose.msra.mxu0 0.0
    %1579 = vmatprep.subr.mxu0 0.0
    %1580 = vmatpush1.xpose.msra.mxu0 0.0
    %1581 = vmatprep.subr.mxu0 0.0
    %1582 = vmatpush1.xpose.msra.mxu0 0.0
    %1583 = vmatprep.subr.mxu0 0.0
    %1584 = vmatpush1.xpose.msra.mxu0 0.0
    %1585 = vmatprep.subr.mxu0 0.0
    %1586 = vmatpush1.xpose.msra.mxu0 0.0
    %1587 = vmatprep.subr.mxu0 0.0
    %1588 = vmatpush1.xpose.msra.mxu0 0.0
    %1589 = vmatprep.subr.mxu0 0.0
    %1590 = vmatpush1.xpose.msra.mxu0 0.0
    %1591 = vmatprep.subr.mxu0 0.0
    %1592 = vmatpush1.xpose.msra.mxu0 0.0
    %1593 = vmatprep.subr.mxu0 0.0
    %1594 = vmatpush1.xpose.msra.mxu0 0.0
    %1595 = vmatprep.subr.mxu0 0.0
    %1596 = vmatpush1.xpose.msra.mxu0 0.0
    %1597 = vmatprep.subr.mxu0 0.0
    %1598 = vmatpush1.xpose.msra.mxu0 0.0
    %1599 = vmatprep.subr.mxu0 0.0
    %1600 = vmatpush1.xpose.msra.mxu0 0.0
    %1601 = vmatprep.subr.mxu0 0.0
    %1602 = vmatpush1.xpose.msra.mxu0 0.0
    %1603 = vmatprep.subr.mxu0 0.0
    %1604 = vmatpush1.xpose.msra.mxu0 0.0
    %1605 = vmatprep.subr.mxu0 0.0
    %1606 = vmatpush1.xpose.msra.mxu0 0.0
    %1607 = vmatprep.subr.mxu0 0.0
    %1608 = vmatpush1.xpose.msra.mxu0 0.0
    %1609 = vmatprep.subr.mxu0 0.0
    %1610 = vmatpush1.xpose.msra.mxu0 0.0
    %1611 = vmatprep.subr.mxu0 0.0
    %1612 = vmatpush1.xpose.msra.mxu0 0.0
    %1613 = vmatprep.subr.mxu0 0.0
    %1614 = vmatpush1.xpose.msra.mxu0 0.0
    %1615 = vmatprep.mubr.f32.mxu0 0.0
    %1616 = vmatmul.mubr.f32.gmra.mrb[0].mxu0 %v1543
    %v1617 = vpop.f32.mrb[0].mxu0
    %v1618 = vadd.f32 0.0, %v1617
    %v1619 = vpop.f32.mrb[0].mxu0
    %1620 = vmatprep.mubr.f32.mxu0 0.0
    %1621 = vmatmul.mubr.f32.gmra.mrb[0].mxu0 %v1545
    %v1622 = vpop.f32.mrb[0].mxu0
    %v1623 = vadd.f32 0.0, %v1622
    %v1624 = vpop.f32.mrb[0].mxu0
    %1625 = vdwg.mxu0
    %1626 = vrot.lane.b32.xlu0 %v1345, 110
    %v1627 = vpop.permute.xlu0 %1626
    %1628 = vrot.lane.b32.xlu0 %v1351, 110
    %v1629 = vpop.permute.xlu0 %1628
    %1630 = vrot.lane.b32.xlu0 %v1345, 86
    %v1631 = vpop.permute.xlu0 %1630
    %1632 = vrot.lane.b32.xlu0 %v1351, 86
    %v1633 = vpop.permute.xlu0 %1632
    %v1634 = vsel %vm276, %v1627, 0
    %v1636 = vsel %vm276, %v1629, 0
    %v1638 = vsel %vm276, %v1631, 0
    %v1640 = vsel %vm276, %v1633, 0
    %1642 = vmatprep.subr.mxu0 0.0
    %1643 = vmatpush1.xpose.msra.mxu0 %v1638
    %1644 = vmatprep.subr.mxu0 0.0
    %1645 = vmatpush1.xpose.msra.mxu0 %v1640
    %1646 = vmatprep.subr.mxu0 0.0
    %1647 = vmatpush1.xpose.msra.mxu0 0.0
    %1648 = vmatprep.subr.mxu0 0.0
    %1649 = vmatpush1.xpose.msra.mxu0 0.0
    %1650 = vmatprep.subr.mxu0 0.0
    %1651 = vmatpush1.xpose.msra.mxu0 0.0
    %1652 = vmatprep.subr.mxu0 0.0
    %1653 = vmatpush1.xpose.msra.mxu0 0.0
    %1654 = vmatprep.subr.mxu0 0.0
    %1655 = vmatpush1.xpose.msra.mxu0 0.0
    %1656 = vmatprep.subr.mxu0 0.0
    %1657 = vmatpush1.xpose.msra.mxu0 0.0
    %1658 = vmatprep.subr.mxu0 0.0
    %1659 = vmatpush1.xpose.msra.mxu0 0.0
    %1660 = vmatprep.subr.mxu0 0.0
    %1661 = vmatpush1.xpose.msra.mxu0 0.0
    %1662 = vmatprep.subr.mxu0 0.0
    %1663 = vmatpush1.xpose.msra.mxu0 0.0
    %1664 = vmatprep.subr.mxu0 0.0
    %1665 = vmatpush1.xpose.msra.mxu0 0.0
    %1666 = vmatprep.subr.mxu0 0.0
    %1667 = vmatpush1.xpose.msra.mxu0 0.0
    %1668 = vmatprep.subr.mxu0 0.0
    %1669 = vmatpush1.xpose.msra.mxu0 0.0
    %1670 = vmatprep.subr.mxu0 0.0
    %1671 = vmatpush1.xpose.msra.mxu0 0.0
    %1672 = vmatprep.subr.mxu0 0.0
    %1673 = vmatpush1.xpose.msra.mxu0 0.0
    %1674 = vmatprep.subr.mxu0 0.0
    %1675 = vmatpush1.xpose.msra.mxu0 0.0
    %1676 = vmatprep.subr.mxu0 0.0
    %1677 = vmatpush1.xpose.msra.mxu0 0.0
    %1678 = vmatprep.subr.mxu0 0.0
    %1679 = vmatpush1.xpose.msra.mxu0 0.0
    %1680 = vmatprep.subr.mxu0 0.0
    %1681 = vmatpush1.xpose.msra.mxu0 0.0
    %1682 = vmatprep.subr.mxu0 0.0
    %1683 = vmatpush1.xpose.msra.mxu0 0.0
    %1684 = vmatprep.subr.mxu0 0.0
    %1685 = vmatpush1.xpose.msra.mxu0 0.0
    %1686 = vmatprep.subr.mxu0 0.0
    %1687 = vmatpush1.xpose.msra.mxu0 0.0
    %1688 = vmatprep.subr.mxu0 0.0
    %1689 = vmatpush1.xpose.msra.mxu0 0.0
    %1690 = vmatprep.subr.mxu0 0.0
    %1691 = vmatpush1.xpose.msra.mxu0 0.0
    %1692 = vmatprep.subr.mxu0 0.0
    %1693 = vmatpush1.xpose.msra.mxu0 0.0
    %1694 = vmatprep.subr.mxu0 0.0
    %1695 = vmatpush1.xpose.msra.mxu0 0.0
    %1696 = vmatprep.subr.mxu0 0.0
    %1697 = vmatpush1.xpose.msra.mxu0 0.0
    %1698 = vmatprep.subr.mxu0 0.0
    %1699 = vmatpush1.xpose.msra.mxu0 0.0
    %1700 = vmatprep.subr.mxu0 0.0
    %1701 = vmatpush1.xpose.msra.mxu0 0.0
    %1702 = vmatprep.subr.mxu0 0.0
    %1703 = vmatpush1.xpose.msra.mxu0 0.0
    %1704 = vmatprep.subr.mxu0 0.0
    %1705 = vmatpush1.xpose.msra.mxu0 0.0
    %1706 = vmatprep.mubr.f32.mxu0 0.0
    %1707 = vmatmul.mubr.f32.gmra.mrb[0].mxu0 %v1634
    %v1708 = vpop.f32.mrb[0].mxu0
    %v1709 = vadd.f32 0.0, %v1708
    %v1710 = vpop.f32.mrb[0].mxu0
    %1711 = vmatprep.mubr.f32.mxu0 0.0
    %1712 = vmatmul.mubr.f32.gmra.mrb[0].mxu0 %v1636
    %v1713 = vpop.f32.mrb[0].mxu0
    %v1714 = vadd.f32 0.0, %v1713
    %v1715 = vpop.f32.mrb[0].mxu0
    %1716 = vdwg.mxu0
    %v1717 = vadd.f32 %v1436, %v172
    %v1718 = vadd.f32 %v1441, %v173
    %v1719 = vadd.f32 %v1527, %v174
    %v1720 = vadd.f32 %v1532, %v175
    %v1721 = vadd.f32 %v1618, %v176
    %v1722 = vadd.f32 %v1623, %v177
    %v1723 = vadd.f32 %v1709, %v178
    %v1724 = vadd.f32 %v1714, %v179
    %v1725 = vsel %vm641, %v1717, -inf
    %1726 = vmax.xlane.f32.xlu0 %v1725
    %v1727 = vpop.xlane.xlu0 %1726
    %v1728 = vsel %vm641, %v1718, -inf
    %1729 = vmax.xlane.f32.xlu0 %v1728
    %v1730 = vpop.xlane.xlu0 %1729
    %v1731 = vsel %vm641, %v1719, -inf
    %1732 = vmax.xlane.f32.xlu0 %v1731
    %v1733 = vpop.xlane.xlu0 %1732
    %v1734 = vsel %vm641, %v1720, -inf
    %1735 = vmax.xlane.f32.xlu0 %v1734
    %v1736 = vpop.xlane.xlu0 %1735
    %v1737 = vsel %vm641, %v1721, -inf
    %1738 = vmax.xlane.f32.xlu0 %v1737
    %v1739 = vpop.xlane.xlu0 %1738
    %v1740 = vsel %vm641, %v1722, -inf
    %1741 = vmax.xlane.f32.xlu0 %v1740
    %v1742 = vpop.xlane.xlu0 %1741
    %v1743 = vsel %vm641, %v1723, -inf
    %1744 = vmax.xlane.f32.xlu0 %v1743
    %v1745 = vpop.xlane.xlu0 %1744
    %v1746 = vsel %vm641, %v1724, -inf
    %1747 = vmax.xlane.f32.xlu0 %v1746
    %v1748 = vpop.xlane.xlu0 %1747
    %v1749 = vsub.f32 %v1717, %v1727
    %v1750 = vsub.f32 %v1718, %v1730
    %v1751 = vsub.f32 %v1719, %v1733
    %v1752 = vsub.f32 %v1720, %v1736
    %v1753 = vsub.f32 %v1721, %v1739
    %v1754 = vsub.f32 %v1722, %v1742
    %v1755 = vsub.f32 %v1723, %v1745
    %v1756 = vsub.f32 %v1724, %v1748
    %v1757 = vmul.f32 %v1749, 1.442695
    %v1758 = vpow.pop %v1757
    %v1759 = vmul.f32 %v1750, 1.442695
    %v1760 = vpow.pop %v1759
    %v1761 = vmul.f32 %v1751, 1.442695
    %v1762 = vpow.pop %v1761
    %v1763 = vmul.f32 %v1752, 1.442695
    %v1764 = vpow.pop %v1763
    %v1765 = vmul.f32 %v1753, 1.442695
    %v1766 = vpow.pop %v1765
    %v1767 = vmul.f32 %v1754, 1.442695
    %v1768 = vpow.pop %v1767
    %v1769 = vmul.f32 %v1755, 1.442695
    %v1770 = vpow.pop %v1769
    %v1771 = vmul.f32 %v1756, 1.442695
    %v1772 = vpow.pop %v1771
    %v1773 = vsel %vm641, %v1758, 0.0
    %1774 = vadd.xlane.f32.xlu0 %v1773
    %v1775 = vpop.xlane.xlu0 %1774
    %v1776 = vsel %vm641, %v1760, 0.0
    %1777 = vadd.xlane.f32.xlu0 %v1776
    %v1778 = vpop.xlane.xlu0 %1777
    %v1779 = vsel %vm641, %v1762, 0.0
    %1780 = vadd.xlane.f32.xlu0 %v1779
    %v1781 = vpop.xlane.xlu0 %1780
    %v1782 = vsel %vm641, %v1764, 0.0
    %1783 = vadd.xlane.f32.xlu0 %v1782
    %v1784 = vpop.xlane.xlu0 %1783
    %v1785 = vsel %vm641, %v1766, 0.0
    %1786 = vadd.xlane.f32.xlu0 %v1785
    %v1787 = vpop.xlane.xlu0 %1786
    %v1788 = vsel %vm641, %v1768, 0.0
    %1789 = vadd.xlane.f32.xlu0 %v1788
    %v1790 = vpop.xlane.xlu0 %1789
    %v1791 = vsel %vm641, %v1770, 0.0
    %1792 = vadd.xlane.f32.xlu0 %v1791
    %v1793 = vpop.xlane.xlu0 %1792
    %v1794 = vsel %vm641, %v1772, 0.0
    %1795 = vadd.xlane.f32.xlu0 %v1794
    %v1796 = vpop.xlane.xlu0 %1795
    %v1797 = vrcp.pop %v1775
    %v1798 = vrcp.pop %v1778
    %v1799 = vrcp.pop %v1781
    %v1800 = vrcp.pop %v1784
    %v1801 = vrcp.pop %v1787
    %v1802 = vrcp.pop %v1790
    %v1803 = vrcp.pop %v1793
    %v1804 = vrcp.pop %v1796
    %v1805 = vmul.f32 %v1758, %v1797
    %v1806 = vmul.f32 %v1760, %v1798
    %v1807 = vmul.f32 %v1762, %v1799
    %v1808 = vmul.f32 %v1764, %v1800
    %v1809 = vmul.f32 %v1766, %v1801
    %v1810 = vmul.f32 %v1768, %v1802
    %v1811 = vmul.f32 %v1770, %v1803
    %v1812 = vmul.f32 %v1772, %v1804
    %1813 = vrot.lane.b32.xlu0 %v1345, 56
    %v1814 = vpop.permute.xlu0 %1813
    %1815 = vrot.lane.b32.xlu0 %v1351, 56
    %v1816 = vpop.permute.xlu0 %1815
    %v1820 = vsel %vm641, %v1807, 0
    %v1823 = vsel %vm641, %v1808, 0
    %1825 = vmatprep.subr.mxu0 0.0
    %1826 = vmatpush1.msra.mxu0 %v1814
    %1827 = vmatprep.subr.mxu0 0.0
    %1828 = vmatpush1.msra.mxu0 %v1816
    %1829 = vmatprep.subr.mxu0 0.0
    %1830 = vmatpush1.msra.mxu0 0.0
    %1831 = vmatprep.subr.mxu0 0.0
    %1832 = vmatpush1.msra.mxu0 0.0
    %1833 = vmatprep.subr.mxu0 0.0
    %1834 = vmatpush1.msra.mxu0 0.0
    %1835 = vmatprep.subr.mxu0 0.0
    %1836 = vmatpush1.msra.mxu0 0.0
    %1837 = vmatprep.subr.mxu0 0.0
    %1838 = vmatpush1.msra.mxu0 0.0
    %1839 = vmatprep.subr.mxu0 0.0
    %1840 = vmatpush1.msra.mxu0 0.0
    %1841 = vmatprep.subr.mxu0 0.0
    %1842 = vmatpush1.msra.mxu0 0.0
    %1843 = vmatprep.subr.mxu0 0.0
    %1844 = vmatpush1.msra.mxu0 0.0
    %1845 = vmatprep.subr.mxu0 0.0
    %1846 = vmatpush1.msra.mxu0 0.0
    %1847 = vmatprep.subr.mxu0 0.0
    %1848 = vmatpush1.msra.mxu0 0.0
    %1849 = vmatprep.subr.mxu0 0.0
    %1850 = vmatpush1.msra.mxu0 0.0
    %1851 = vmatprep.subr.mxu0 0.0
    %1852 = vmatpush1.msra.mxu0 0.0
    %1853 = vmatprep.subr.mxu0 0.0
    %1854 = vmatpush1.msra.mxu0 0.0
    %1855 = vmatprep.subr.mxu0 0.0
    %1856 = vmatpush1.msra.mxu0 0.0
    %1857 = vmatprep.subr.mxu0 0.0
    %1858 = vmatpush1.msra.mxu0 0.0
    %1859 = vmatprep.subr.mxu0 0.0
    %1860 = vmatpush1.msra.mxu0 0.0
    %1861 = vmatprep.subr.mxu0 0.0
    %1862 = vmatpush1.msra.mxu0 0.0
    %1863 = vmatprep.subr.mxu0 0.0
    %1864 = vmatpush1.msra.mxu0 0.0
    %1865 = vmatprep.subr.mxu0 0.0
    %1866 = vmatpush1.msra.mxu0 0.0
    %1867 = vmatprep.subr.mxu0 0.0
    %1868 = vmatpush1.msra.mxu0 0.0
    %1869 = vmatprep.subr.mxu0 0.0
    %1870 = vmatpush1.msra.mxu0 0.0
    %1871 = vmatprep.subr.mxu0 0.0
    %1872 = vmatpush1.msra.mxu0 0.0
    %1873 = vmatprep.subr.mxu0 0.0
    %1874 = vmatpush1.msra.mxu0 0.0
    %1875 = vmatprep.subr.mxu0 0.0
    %1876 = vmatpush1.msra.mxu0 0.0
    %1877 = vmatprep.subr.mxu0 0.0
    %1878 = vmatpush1.msra.mxu0 0.0
    %1879 = vmatprep.subr.mxu0 0.0
    %1880 = vmatpush1.msra.mxu0 0.0
    %1881 = vmatprep.subr.mxu0 0.0
    %1882 = vmatpush1.msra.mxu0 0.0
    %1883 = vmatprep.subr.mxu0 0.0
    %1884 = vmatpush1.msra.mxu0 0.0
    %1885 = vmatprep.subr.mxu0 0.0
    %1886 = vmatpush1.msra.mxu0 0.0
    %1887 = vmatprep.subr.mxu0 0.0
    %1888 = vmatpush1.msra.mxu0 0.0
    %1889 = vmatprep.mubr.f32.mxu0 0.0
    %1890 = vmatmul.mubr.f32.gmra.mrb[0].mxu0 %v1820
    %v1891 = vpop.f32.mrb[0].mxu0
    %v1892 = vadd.f32 0.0, %v1891
    %v1893 = vpop.f32.mrb[0].mxu0
    %1894 = vmatprep.mubr.f32.mxu0 0.0
    %1895 = vmatmul.mubr.f32.gmra.mrb[0].mxu0 %v1823
    %v1896 = vpop.f32.mrb[0].mxu0
    %v1897 = vadd.f32 0.0, %v1896
    %v1898 = vpop.f32.mrb[0].mxu0
    %1899 = vdwg.mxu0
    %1900 = vrot.lane.b32.xlu0 %v1345, 80
    %v1901 = vpop.permute.xlu0 %1900
    %1902 = vrot.lane.b32.xlu0 %v1351, 80
    %v1903 = vpop.permute.xlu0 %1902
    %v1907 = vsel %vm641, %v1805, 0
    %v1910 = vsel %vm641, %v1806, 0
    %1912 = vmatprep.subr.mxu0 0.0
    %1913 = vmatpush1.msra.mxu0 %v1901
    %1914 = vmatprep.subr.mxu0 0.0
    %1915 = vmatpush1.msra.mxu0 %v1903
    %1916 = vmatprep.subr.mxu0 0.0
    %1917 = vmatpush1.msra.mxu0 0.0
    %1918 = vmatprep.subr.mxu0 0.0
    %1919 = vmatpush1.msra.mxu0 0.0
    %1920 = vmatprep.subr.mxu0 0.0
    %1921 = vmatpush1.msra.mxu0 0.0
    %1922 = vmatprep.subr.mxu0 0.0
    %1923 = vmatpush1.msra.mxu0 0.0
    %1924 = vmatprep.subr.mxu0 0.0
    %1925 = vmatpush1.msra.mxu0 0.0
    %1926 = vmatprep.subr.mxu0 0.0
    %1927 = vmatpush1.msra.mxu0 0.0
    %1928 = vmatprep.subr.mxu0 0.0
    %1929 = vmatpush1.msra.mxu0 0.0
    %1930 = vmatprep.subr.mxu0 0.0
    %1931 = vmatpush1.msra.mxu0 0.0
    %1932 = vmatprep.subr.mxu0 0.0
    %1933 = vmatpush1.msra.mxu0 0.0
    %1934 = vmatprep.subr.mxu0 0.0
    %1935 = vmatpush1.msra.mxu0 0.0
    %1936 = vmatprep.subr.mxu0 0.0
    %1937 = vmatpush1.msra.mxu0 0.0
    %1938 = vmatprep.subr.mxu0 0.0
    %1939 = vmatpush1.msra.mxu0 0.0
    %1940 = vmatprep.subr.mxu0 0.0
    %1941 = vmatpush1.msra.mxu0 0.0
    %1942 = vmatprep.subr.mxu0 0.0
    %1943 = vmatpush1.msra.mxu0 0.0
    %1944 = vmatprep.subr.mxu0 0.0
    %1945 = vmatpush1.msra.mxu0 0.0
    %1946 = vmatprep.subr.mxu0 0.0
    %1947 = vmatpush1.msra.mxu0 0.0
    %1948 = vmatprep.subr.mxu0 0.0
    %1949 = vmatpush1.msra.mxu0 0.0
    %1950 = vmatprep.subr.mxu0 0.0
    %1951 = vmatpush1.msra.mxu0 0.0
    %1952 = vmatprep.subr.mxu0 0.0
    %1953 = vmatpush1.msra.mxu0 0.0
    %1954 = vmatprep.subr.mxu0 0.0
    %1955 = vmatpush1.msra.mxu0 0.0
    %1956 = vmatprep.subr.mxu0 0.0
    %1957 = vmatpush1.msra.mxu0 0.0
    %1958 = vmatprep.subr.mxu0 0.0
    %1959 = vmatpush1.msra.mxu0 0.0
    %1960 = vmatprep.subr.mxu0 0.0
    %1961 = vmatpush1.msra.mxu0 0.0
    %1962 = vmatprep.subr.mxu0 0.0
    %1963 = vmatpush1.msra.mxu0 0.0
    %1964 = vmatprep.subr.mxu0 0.0
    %1965 = vmatpush1.msra.mxu0 0.0
    %1966 = vmatprep.subr.mxu0 0.0
    %1967 = vmatpush1.msra.mxu0 0.0
    %1968 = vmatprep.subr.mxu0 0.0
    %1969 = vmatpush1.msra.mxu0 0.0
    %1970 = vmatprep.subr.mxu0 0.0
    %1971 = vmatpush1.msra.mxu0 0.0
    %1972 = vmatprep.subr.mxu0 0.0
    %1973 = vmatpush1.msra.mxu0 0.0
    %1974 = vmatprep.subr.mxu0 0.0
    %1975 = vmatpush1.msra.mxu0 0.0
    %1976 = vmatprep.mubr.f32.mxu0 0.0
    %1977 = vmatmul.mubr.f32.gmra.mrb[0].mxu0 %v1907
    %v1978 = vpop.f32.mrb[0].mxu0
    %v1979 = vadd.f32 %v1892, %v1978
    %v1980 = vpop.f32.mrb[0].mxu0
    %1981 = vmatprep.mubr.f32.mxu0 0.0
    %1982 = vmatmul.mubr.f32.gmra.mrb[0].mxu0 %v1910
    %v1983 = vpop.f32.mrb[0].mxu0
    %v1984 = vadd.f32 %v1897, %v1983
    %v1985 = vpop.f32.mrb[0].mxu0
    %1986 = vdwg.mxu0
    %1987 = vrot.lane.b32.xlu0 %v1345, 32
    %v1988 = vpop.permute.xlu0 %1987
    %1989 = vrot.lane.b32.xlu0 %v1351, 32
    %v1990 = vpop.permute.xlu0 %1989
    %v1994 = vsel %vm641, %v1809, 0
    %v1997 = vsel %vm641, %v1810, 0
    %1999 = vmatprep.subr.mxu0 0.0
    %2000 = vmatpush1.msra.mxu0 %v1988
    %2001 = vmatprep.subr.mxu0 0.0
    %2002 = vmatpush1.msra.mxu0 %v1990
    %2003 = vmatprep.subr.mxu0 0.0
    %2004 = vmatpush1.msra.mxu0 0.0
    %2005 = vmatprep.subr.mxu0 0.0
    %2006 = vmatpush1.msra.mxu0 0.0
    %2007 = vmatprep.subr.mxu0 0.0
    %2008 = vmatpush1.msra.mxu0 0.0
    %2009 = vmatprep.subr.mxu0 0.0
    %2010 = vmatpush1.msra.mxu0 0.0
    %2011 = vmatprep.subr.mxu0 0.0
    %2012 = vmatpush1.msra.mxu0 0.0
    %2013 = vmatprep.subr.mxu0 0.0
    %2014 = vmatpush1.msra.mxu0 0.0
    %2015 = vmatprep.subr.mxu0 0.0
    %2016 = vmatpush1.msra.mxu0 0.0
    %2017 = vmatprep.subr.mxu0 0.0
    %2018 = vmatpush1.msra.mxu0 0.0
    %2019 = vmatprep.subr.mxu0 0.0
    %2020 = vmatpush1.msra.mxu0 0.0
    %2021 = vmatprep.subr.mxu0 0.0
    %2022 = vmatpush1.msra.mxu0 0.0
    %2023 = vmatprep.subr.mxu0 0.0
    %2024 = vmatpush1.msra.mxu0 0.0
    %2025 = vmatprep.subr.mxu0 0.0
    %2026 = vmatpush1.msra.mxu0 0.0
    %2027 = vmatprep.subr.mxu0 0.0
    %2028 = vmatpush1.msra.mxu0 0.0
    %2029 = vmatprep.subr.mxu0 0.0
    %2030 = vmatpush1.msra.mxu0 0.0
    %2031 = vmatprep.subr.mxu0 0.0
    %2032 = vmatpush1.msra.mxu0 0.0
    %2033 = vmatprep.subr.mxu0 0.0
    %2034 = vmatpush1.msra.mxu0 0.0
    %2035 = vmatprep.subr.mxu0 0.0
    %2036 = vmatpush1.msra.mxu0 0.0
    %2037 = vmatprep.subr.mxu0 0.0
    %2038 = vmatpush1.msra.mxu0 0.0
    %2039 = vmatprep.subr.mxu0 0.0
    %2040 = vmatpush1.msra.mxu0 0.0
    %2041 = vmatprep.subr.mxu0 0.0
    %2042 = vmatpush1.msra.mxu0 0.0
    %2043 = vmatprep.subr.mxu0 0.0
    %2044 = vmatpush1.msra.mxu0 0.0
    %2045 = vmatprep.subr.mxu0 0.0
    %2046 = vmatpush1.msra.mxu0 0.0
    %2047 = vmatprep.subr.mxu0 0.0
    %2048 = vmatpush1.msra.mxu0 0.0
    %2049 = vmatprep.subr.mxu0 0.0
    %2050 = vmatpush1.msra.mxu0 0.0
    %2051 = vmatprep.subr.mxu0 0.0
    %2052 = vmatpush1.msra.mxu0 0.0
    %2053 = vmatprep.subr.mxu0 0.0
    %2054 = vmatpush1.msra.mxu0 0.0
    %2055 = vmatprep.subr.mxu0 0.0
    %2056 = vmatpush1.msra.mxu0 0.0
    %2057 = vmatprep.subr.mxu0 0.0
    %2058 = vmatpush1.msra.mxu0 0.0
    %2059 = vmatprep.subr.mxu0 0.0
    %2060 = vmatpush1.msra.mxu0 0.0
    %2061 = vmatprep.subr.mxu0 0.0
    %2062 = vmatpush1.msra.mxu0 0.0
    %2063 = vmatprep.mubr.f32.mxu0 0.0
    %2064 = vmatmul.mubr.f32.gmra.mrb[0].mxu0 %v1994
    %v2065 = vpop.f32.mrb[0].mxu0
    %v2066 = vadd.f32 0.0, %v2065
    %v2067 = vpop.f32.mrb[0].mxu0
    %2068 = vmatprep.mubr.f32.mxu0 0.0
    %2069 = vmatmul.mubr.f32.gmra.mrb[0].mxu0 %v1997
    %v2070 = vpop.f32.mrb[0].mxu0
    %v2071 = vadd.f32 0.0, %v2070
    %v2072 = vpop.f32.mrb[0].mxu0
    %2073 = vdwg.mxu0
    %v2074 = vadd.f32 %v1979, %v2066
    %v2075 = vadd.f32 %v1984, %v2071
    %v2077 = vsel %vm641, %v1811, 0
    %v2080 = vsel %vm641, %v1812, 0
    %2082 = vmatprep.subr.mxu0 0.0
    %2083 = vmatpush1.msra.mxu0 %v1347
    %2084 = vmatprep.subr.mxu0 0.0
    %2085 = vmatpush1.msra.mxu0 %v1353
    %2086 = vmatprep.subr.mxu0 0.0
    %2087 = vmatpush1.msra.mxu0 0.0
    %2088 = vmatprep.subr.mxu0 0.0
    %2089 = vmatpush1.msra.mxu0 0.0
    %2090 = vmatprep.subr.mxu0 0.0
    %2091 = vmatpush1.msra.mxu0 0.0
    %2092 = vmatprep.subr.mxu0 0.0
    %2093 = vmatpush1.msra.mxu0 0.0
    %2094 = vmatprep.subr.mxu0 0.0
    %2095 = vmatpush1.msra.mxu0 0.0
    %2096 = vmatprep.subr.mxu0 0.0
    %2097 = vmatpush1.msra.mxu0 0.0
    %2098 = vmatprep.subr.mxu0 0.0
    %2099 = vmatpush1.msra.mxu0 0.0
    %2100 = vmatprep.subr.mxu0 0.0
    %2101 = vmatpush1.msra.mxu0 0.0
    %2102 = vmatprep.subr.mxu0 0.0
    %2103 = vmatpush1.msra.mxu0 0.0
    %2104 = vmatprep.subr.mxu0 0.0
    %2105 = vmatpush1.msra.mxu0 0.0
    %2106 = vmatprep.subr.mxu0 0.0
    %2107 = vmatpush1.msra.mxu0 0.0
    %2108 = vmatprep.subr.mxu0 0.0
    %2109 = vmatpush1.msra.mxu0 0.0
    %2110 = vmatprep.subr.mxu0 0.0
    %2111 = vmatpush1.msra.mxu0 0.0
    %2112 = vmatprep.subr.mxu0 0.0
    %2113 = vmatpush1.msra.mxu0 0.0
    %2114 = vmatprep.subr.mxu0 0.0
    %2115 = vmatpush1.msra.mxu0 0.0
    %2116 = vmatprep.subr.mxu0 0.0
    %2117 = vmatpush1.msra.mxu0 0.0
    %2118 = vmatprep.subr.mxu0 0.0
    %2119 = vmatpush1.msra.mxu0 0.0
    %2120 = vmatprep.subr.mxu0 0.0
    %2121 = vmatpush1.msra.mxu0 0.0
    %2122 = vmatprep.subr.mxu0 0.0
    %2123 = vmatpush1.msra.mxu0 0.0
    %2124 = vmatprep.subr.mxu0 0.0
    %2125 = vmatpush1.msra.mxu0 0.0
    %2126 = vmatprep.subr.mxu0 0.0
    %2127 = vmatpush1.msra.mxu0 0.0
    %2128 = vmatprep.subr.mxu0 0.0
    %2129 = vmatpush1.msra.mxu0 0.0
    %2130 = vmatprep.subr.mxu0 0.0
    %2131 = vmatpush1.msra.mxu0 0.0
    %2132 = vmatprep.subr.mxu0 0.0
    %2133 = vmatpush1.msra.mxu0 0.0
    %2134 = vmatprep.subr.mxu0 0.0
    %2135 = vmatpush1.msra.mxu0 0.0
    %2136 = vmatprep.subr.mxu0 0.0
    %2137 = vmatpush1.msra.mxu0 0.0
    %2138 = vmatprep.subr.mxu0 0.0
    %2139 = vmatpush1.msra.mxu0 0.0
    %2140 = vmatprep.subr.mxu0 0.0
    %2141 = vmatpush1.msra.mxu0 0.0
    %2142 = vmatprep.subr.mxu0 0.0
    %2143 = vmatpush1.msra.mxu0 0.0
    %2144 = vmatprep.subr.mxu0 0.0
    %2145 = vmatpush1.msra.mxu0 0.0
    %2146 = vmatprep.mubr.f32.mxu0 0.0
    %2147 = vmatmul.mubr.f32.gmra.mrb[0].mxu0 %v2077
    %v2148 = vpop.f32.mrb[0].mxu0
    %v2149 = vadd.f32 0.0, %v2148
    %v2150 = vpop.f32.mrb[0].mxu0
    %2151 = vmatprep.mubr.f32.mxu0 0.0
    %2152 = vmatmul.mubr.f32.gmra.mrb[0].mxu0 %v2080
    %v2153 = vpop.f32.mrb[0].mxu0
    %v2154 = vadd.f32 0.0, %v2153
    %v2155 = vpop.f32.mrb[0].mxu0
    %2156 = vdwg.mxu0
    %v2157 = vadd.f32 %v2074, %v2149
    %v2158 = vadd.f32 %v2075, %v2154
    %s2159 = scalar_lea.vmem %s4, 120
    %v2160 = vld [vmem:[%s2159] sm:$0xff]
    %v2161 = vld [vmem:[%s2159 + $0x8] sm:$0xff]
    %v2162 = vld [vmem:[%s2159 + $0x10] sm:$0xff]
    %v2163 = vld [vmem:[%s2159 + $0x18] sm:$0xff]
    %v2164 = vld [vmem:[%s2159 + $0x20] sm:$0xff]
    %v2165 = vld [vmem:[%s2159 + $0x28] sm:$0xff]
    %v2166 = vld [vmem:[%s2159 + $0x30] sm:$0xff]
    %v2167 = vld [vmem:[%s2159 + $0x38] sm:$0xff]
    %v2168 = vld [vmem:[%s2159 + $0x40] sm:$0xff]
    %v2169 = vld [vmem:[%s2159 + $0x48] sm:$0xff]
    %v2170 = vld [vmem:[%s2159 + $0x50] sm:$0xff]
    %v2171 = vld [vmem:[%s2159 + $0x58] sm:$0xff]
    %v2172 = vld [vmem:[%s2159 + $0x60] sm:$0xff]
    %v2173 = vld [vmem:[%s2159 + $0x68] sm:$0xff]
    %v2174 = vld [vmem:[%s2159 + $0x70] sm:$0xff]
    %s2175 = scalar_lea.vmem %s5, 2
    %v2176 = vld [vmem:[%s2175] sm:$0x3]
    %v2177 = vlaneseq
    %v2178 = vshrl.u32 %v2177, 7
    %v2179 = vsub.s32 0, %v2178
    %v2180 = vrot.slane %v2176, %v2179
    %v2182 = vsel %vm186, %v2157, 0
    %v2185 = vsel %vm186, %v2158, 0
    %2187 = vmatprep.subr.mxu0 0.0
    %2188 = vmatpush1.msra.mxu0 %v2160
    %2189 = vmatprep.subr.mxu0 0.0
    %2190 = vmatpush1.msra.mxu0 %v2161
    %2191 = vmatprep.subr.mxu0 0.0
    %2192 = vmatpush1.msra.mxu0 %v2162
    %2193 = vmatprep.subr.mxu0 0.0
    %2194 = vmatpush1.msra.mxu0 0.0
    %2195 = vmatprep.subr.mxu0 0.0
    %2196 = vmatpush1.msra.mxu0 0.0
    %2197 = vmatprep.subr.mxu0 0.0
    %2198 = vmatpush1.msra.mxu0 0.0
    %2199 = vmatprep.subr.mxu0 0.0
    %2200 = vmatpush1.msra.mxu0 0.0
    %2201 = vmatprep.subr.mxu0 0.0
    %2202 = vmatpush1.msra.mxu0 0.0
    %2203 = vmatprep.subr.mxu0 0.0
    %2204 = vmatpush1.msra.mxu0 0.0
    %2205 = vmatprep.subr.mxu0 0.0
    %2206 = vmatpush1.msra.mxu0 0.0
    %2207 = vmatprep.subr.mxu0 0.0
    %2208 = vmatpush1.msra.mxu0 0.0
    %2209 = vmatprep.subr.mxu0 0.0
    %2210 = vmatpush1.msra.mxu0 0.0
    %2211 = vmatprep.subr.mxu0 0.0
    %2212 = vmatpush1.msra.mxu0 0.0
    %2213 = vmatprep.subr.mxu0 0.0
    %2214 = vmatpush1.msra.mxu0 0.0
    %2215 = vmatprep.subr.mxu0 0.0
    %2216 = vmatpush1.msra.mxu0 0.0
    %2217 = vmatprep.subr.mxu0 0.0
    %2218 = vmatpush1.msra.mxu0 0.0
    %2219 = vmatprep.subr.mxu0 0.0
    %2220 = vmatpush1.msra.mxu0 0.0
    %2221 = vmatprep.subr.mxu0 0.0
    %2222 = vmatpush1.msra.mxu0 0.0
    %2223 = vmatprep.subr.mxu0 0.0
    %2224 = vmatpush1.msra.mxu0 0.0
    %2225 = vmatprep.subr.mxu0 0.0
    %2226 = vmatpush1.msra.mxu0 0.0
    %2227 = vmatprep.subr.mxu0 0.0
    %2228 = vmatpush1.msra.mxu0 0.0
    %2229 = vmatprep.subr.mxu0 0.0
    %2230 = vmatpush1.msra.mxu0 0.0
    %2231 = vmatprep.subr.mxu0 0.0
    %2232 = vmatpush1.msra.mxu0 0.0
    %2233 = vmatprep.subr.mxu0 0.0
    %2234 = vmatpush1.msra.mxu0 0.0
    %2235 = vmatprep.subr.mxu0 0.0
    %2236 = vmatpush1.msra.mxu0 0.0
    %2237 = vmatprep.subr.mxu0 0.0
    %2238 = vmatpush1.msra.mxu0 0.0
    %2239 = vmatprep.subr.mxu0 0.0
    %2240 = vmatpush1.msra.mxu0 0.0
    %2241 = vmatprep.subr.mxu0 0.0
    %2242 = vmatpush1.msra.mxu0 0.0
    %2243 = vmatprep.subr.mxu0 0.0
    %2244 = vmatpush1.msra.mxu0 0.0
    %2245 = vmatprep.subr.mxu0 0.0
    %2246 = vmatpush1.msra.mxu0 0.0
    %2247 = vmatprep.subr.mxu0 0.0
    %2248 = vmatpush1.msra.mxu0 0.0
    %2249 = vmatprep.subr.mxu0 0.0
    %2250 = vmatpush1.msra.mxu0 0.0
    %2251 = vmatprep.mubr.f32.mxu0 0.0
    %2252 = vmatmul.mubr.f32.gmra.mrb[0].mxu0 %v2182
    %v2253 = vpop.f32.mrb[0].mxu0
    %v2254 = vadd.f32 %v2180, %v2253
    %v2255 = vpop.f32.mrb[0].mxu0
    %2256 = vmatprep.mubr.f32.mxu0 0.0
    %2257 = vmatmul.mubr.f32.gmra.mrb[0].mxu0 %v2185
    %v2258 = vpop.f32.mrb[0].mxu0
    %v2259 = vadd.f32 %v2180, %v2258
    %v2260 = vpop.f32.mrb[0].mxu0
    %2261 = vdwg.mxu0
    %v2262 = vmax.f32 %v2254, 0.0
    %v2263 = vmax.f32 %v2259, 0.0
    %v2264 = vlaneseq
    %v2265 = vshrl.u32 %v2264, 7
    %v2266 = vsub.s32 1, %v2265
    %v2267 = vrot.slane %v2176, %v2266
    %v2269 = vsel %vm1183, %v2262, 0
    %v2272 = vsel %vm1183, %v2263, 0
    %2274 = vmatprep.subr.mxu0 0.0
    %2275 = vmatpush1.msra.mxu0 %v2163
    %2276 = vmatprep.subr.mxu0 0.0
    %2277 = vmatpush1.msra.mxu0 %v2164
    %2278 = vmatprep.subr.mxu0 0.0
    %2279 = vmatpush1.msra.mxu0 %v2165
    %2280 = vmatprep.subr.mxu0 0.0
    %2281 = vmatpush1.msra.mxu0 %v2166
    %2282 = vmatprep.subr.mxu0 0.0
    %2283 = vmatpush1.msra.mxu0 %v2167
    %2284 = vmatprep.subr.mxu0 0.0
    %2285 = vmatpush1.msra.mxu0 %v2168
    %2286 = vmatprep.subr.mxu0 0.0
    %2287 = vmatpush1.msra.mxu0 %v2169
    %2288 = vmatprep.subr.mxu0 0.0
    %2289 = vmatpush1.msra.mxu0 %v2170
    %2290 = vmatprep.subr.mxu0 0.0
    %2291 = vmatpush1.msra.mxu0 %v2171
    %2292 = vmatprep.subr.mxu0 0.0
    %2293 = vmatpush1.msra.mxu0 %v2172
    %2294 = vmatprep.subr.mxu0 0.0
    %2295 = vmatpush1.msra.mxu0 %v2173
    %2296 = vmatprep.subr.mxu0 0.0
    %2297 = vmatpush1.msra.mxu0 %v2174
    %2298 = vmatprep.subr.mxu0 0.0
    %2299 = vmatpush1.msra.mxu0 0.0
    %2300 = vmatprep.subr.mxu0 0.0
    %2301 = vmatpush1.msra.mxu0 0.0
    %2302 = vmatprep.subr.mxu0 0.0
    %2303 = vmatpush1.msra.mxu0 0.0
    %2304 = vmatprep.subr.mxu0 0.0
    %2305 = vmatpush1.msra.mxu0 0.0
    %2306 = vmatprep.subr.mxu0 0.0
    %2307 = vmatpush1.msra.mxu0 0.0
    %2308 = vmatprep.subr.mxu0 0.0
    %2309 = vmatpush1.msra.mxu0 0.0
    %2310 = vmatprep.subr.mxu0 0.0
    %2311 = vmatpush1.msra.mxu0 0.0
    %2312 = vmatprep.subr.mxu0 0.0
    %2313 = vmatpush1.msra.mxu0 0.0
    %2314 = vmatprep.subr.mxu0 0.0
    %2315 = vmatpush1.msra.mxu0 0.0
    %2316 = vmatprep.subr.mxu0 0.0
    %2317 = vmatpush1.msra.mxu0 0.0
    %2318 = vmatprep.subr.mxu0 0.0
    %2319 = vmatpush1.msra.mxu0 0.0
    %2320 = vmatprep.subr.mxu0 0.0
    %2321 = vmatpush1.msra.mxu0 0.0
    %2322 = vmatprep.subr.mxu0 0.0
    %2323 = vmatpush1.msra.mxu0 0.0
    %2324 = vmatprep.subr.mxu0 0.0
    %2325 = vmatpush1.msra.mxu0 0.0
    %2326 = vmatprep.subr.mxu0 0.0
    %2327 = vmatpush1.msra.mxu0 0.0
    %2328 = vmatprep.subr.mxu0 0.0
    %2329 = vmatpush1.msra.mxu0 0.0
    %2330 = vmatprep.subr.mxu0 0.0
    %2331 = vmatpush1.msra.mxu0 0.0
    %2332 = vmatprep.subr.mxu0 0.0
    %2333 = vmatpush1.msra.mxu0 0.0
    %2334 = vmatprep.subr.mxu0 0.0
    %2335 = vmatpush1.msra.mxu0 0.0
    %2336 = vmatprep.subr.mxu0 0.0
    %2337 = vmatpush1.msra.mxu0 0.0
    %2338 = vmatprep.mubr.f32.mxu0 0.0
    %2339 = vmatmul.mubr.f32.gmra.mrb[0].mxu0 %v2269
    %v2340 = vpop.f32.mrb[0].mxu0
    %v2341 = vadd.f32 %v2267, %v2340
    %v2342 = vpop.f32.mrb[0].mxu0
    %2343 = vmatprep.mubr.f32.mxu0 0.0
    %2344 = vmatmul.mubr.f32.gmra.mrb[0].mxu0 %v2272
    %v2345 = vpop.f32.mrb[0].mxu0
    %v2346 = vadd.f32 %v2267, %v2345
    %v2347 = vpop.f32.mrb[0].mxu0
    %2348 = vdwg.mxu0
    %s2349 = scalar_lea.vmem %s3, 96
    %v2350 = vld [vmem:[%s2349] sm:$0xff]
    %v2351 = vld [vmem:[%s2349 + $0x8] sm:$0xff]
    %v2352 = vld [vmem:[%s2349 + $0x10] sm:$0xff]
    %v2353 = vld [vmem:[%s2349 + $0x18] sm:$0xff]
    %v2354 = vld [vmem:[%s2349 + $0x20] sm:$0xff]
    %v2355 = vld [vmem:[%s2349 + $0x28] sm:$0xff]
    %v2357 = vsel %vm186, %v2341, 0
    %v2360 = vsel %vm186, %v2346, 0
    %2362 = vmatprep.subr.mxu0 %v2351
    %2363 = vmatpush1.msra.mxu0 %v2350
    %2364 = vmatprep.subr.mxu0 %v2353
    %2365 = vmatpush1.msra.mxu0 %v2352
    %2366 = vmatprep.subr.mxu0 %v2355
    %2367 = vmatpush1.msra.mxu0 %v2354
    %2368 = vmatprep.subr.mxu0 0.0
    %2369 = vmatpush1.msra.mxu0 0.0
    %2370 = vmatprep.subr.mxu0 0.0
    %2371 = vmatpush1.msra.mxu0 0.0
    %2372 = vmatprep.subr.mxu0 0.0
    %2373 = vmatpush1.msra.mxu0 0.0
    %2374 = vmatprep.subr.mxu0 0.0
    %2375 = vmatpush1.msra.mxu0 0.0
    %2376 = vmatprep.subr.mxu0 0.0
    %2377 = vmatpush1.msra.mxu0 0.0
    %2378 = vmatprep.subr.mxu0 0.0
    %2379 = vmatpush1.msra.mxu0 0.0
    %2380 = vmatprep.subr.mxu0 0.0
    %2381 = vmatpush1.msra.mxu0 0.0
    %2382 = vmatprep.subr.mxu0 0.0
    %2383 = vmatpush1.msra.mxu0 0.0
    %2384 = vmatprep.subr.mxu0 0.0
    %2385 = vmatpush1.msra.mxu0 0.0
    %2386 = vmatprep.subr.mxu0 0.0
    %2387 = vmatpush1.msra.mxu0 0.0
    %2388 = vmatprep.subr.mxu0 0.0
    %2389 = vmatpush1.msra.mxu0 0.0
    %2390 = vmatprep.subr.mxu0 0.0
    %2391 = vmatpush1.msra.mxu0 0.0
    %2392 = vmatprep.subr.mxu0 0.0
    %2393 = vmatpush1.msra.mxu0 0.0
    %2394 = vmatprep.subr.mxu0 0.0
    %2395 = vmatpush1.msra.mxu0 0.0
    %2396 = vmatprep.subr.mxu0 0.0
    %2397 = vmatpush1.msra.mxu0 0.0
    %2398 = vmatprep.subr.mxu0 0.0
    %2399 = vmatpush1.msra.mxu0 0.0
    %2400 = vmatprep.subr.mxu0 0.0
    %2401 = vmatpush1.msra.mxu0 0.0
    %2402 = vmatprep.subr.mxu0 0.0
    %2403 = vmatpush1.msra.mxu0 0.0
    %2404 = vmatprep.subr.mxu0 0.0
    %2405 = vmatpush1.msra.mxu0 0.0
    %2406 = vmatprep.subr.mxu0 0.0
    %2407 = vmatpush1.msra.mxu0 0.0
    %2408 = vmatprep.subr.mxu0 0.0
    %2409 = vmatpush1.msra.mxu0 0.0
    %2410 = vmatprep.subr.mxu0 0.0
    %2411 = vmatpush1.msra.mxu0 0.0
    %2412 = vmatprep.subr.mxu0 0.0
    %2413 = vmatpush1.msra.mxu0 0.0
    %2414 = vmatprep.subr.mxu0 0.0
    %2415 = vmatpush1.msra.mxu0 0.0
    %2416 = vmatprep.subr.mxu0 0.0
    %2417 = vmatpush1.msra.mxu0 0.0
    %2418 = vmatprep.subr.mxu0 0.0
    %2419 = vmatpush1.msra.mxu0 0.0
    %2420 = vmatprep.subr.mxu0 0.0
    %2421 = vmatpush1.msra.mxu0 0.0
    %2422 = vmatprep.subr.mxu0 0.0
    %2423 = vmatpush1.msra.mxu0 0.0
    %2424 = vmatprep.subr.mxu0 0.0
    %2425 = vmatpush1.msra.mxu0 0.0
    %2426 = vmatprep.mubr.f32.mxu0 0.0
    %2427 = vmatmul.mubr.f32.gmra.mrb[0].mxu0 %v2357
    %v2428 = vpop.f32.mrb[0].mxu0
    %v2429 = vadd.f32 0.0, %v2428
    %v2430 = vpop.f32.mrb[0].mxu0
    %v2431 = vadd.f32 0.0, %v2430
    %2432 = vmatprep.mubr.f32.mxu0 0.0
    %2433 = vmatmul.mubr.f32.gmra.mrb[0].mxu0 %v2360
    %v2434 = vpop.f32.mrb[0].mxu0
    %v2435 = vadd.f32 0.0, %v2434
    %v2436 = vpop.f32.mrb[0].mxu0
    %v2437 = vadd.f32 0.0, %v2436
    %2438 = vdwg.mxu0
    %2441 = vrot.lane.b32.xlu0 %v2429, 104
    %v2442 = vpop.permute.xlu0 %2441
    %2443 = vrot.lane.b32.xlu0 %v2435, 104
    %v2444 = vpop.permute.xlu0 %2443
    %v2445 = vsel %vm276, %v2429, 0
    %v2447 = vsel %vm276, %v2435, 0
    %v2449 = vsel %vm276, %v2442, 0
    %v2451 = vsel %vm276, %v2444, 0
    %2453 = vmatprep.subr.mxu0 0.0
    %2454 = vmatpush1.xpose.msra.mxu0 %v2449
    %2455 = vmatprep.subr.mxu0 0.0
    %2456 = vmatpush1.xpose.msra.mxu0 %v2451
    %2457 = vmatprep.subr.mxu0 0.0
    %2458 = vmatpush1.xpose.msra.mxu0 0.0
    %2459 = vmatprep.subr.mxu0 0.0
    %2460 = vmatpush1.xpose.msra.mxu0 0.0
    %2461 = vmatprep.subr.mxu0 0.0
    %2462 = vmatpush1.xpose.msra.mxu0 0.0
    %2463 = vmatprep.subr.mxu0 0.0
    %2464 = vmatpush1.xpose.msra.mxu0 0.0
    %2465 = vmatprep.subr.mxu0 0.0
    %2466 = vmatpush1.xpose.msra.mxu0 0.0
    %2467 = vmatprep.subr.mxu0 0.0
    %2468 = vmatpush1.xpose.msra.mxu0 0.0
    %2469 = vmatprep.subr.mxu0 0.0
    %2470 = vmatpush1.xpose.msra.mxu0 0.0
    %2471 = vmatprep.subr.mxu0 0.0
    %2472 = vmatpush1.xpose.msra.mxu0 0.0
    %2473 = vmatprep.subr.mxu0 0.0
    %2474 = vmatpush1.xpose.msra.mxu0 0.0
    %2475 = vmatprep.subr.mxu0 0.0
    %2476 = vmatpush1.xpose.msra.mxu0 0.0
    %2477 = vmatprep.subr.mxu0 0.0
    %2478 = vmatpush1.xpose.msra.mxu0 0.0
    %2479 = vmatprep.subr.mxu0 0.0
    %2480 = vmatpush1.xpose.msra.mxu0 0.0
    %2481 = vmatprep.subr.mxu0 0.0
    %2482 = vmatpush1.xpose.msra.mxu0 0.0
    %2483 = vmatprep.subr.mxu0 0.0
    %2484 = vmatpush1.xpose.msra.mxu0 0.0
    %2485 = vmatprep.subr.mxu0 0.0
    %2486 = vmatpush1.xpose.msra.mxu0 0.0
    %2487 = vmatprep.subr.mxu0 0.0
    %2488 = vmatpush1.xpose.msra.mxu0 0.0
    %2489 = vmatprep.subr.mxu0 0.0
    %2490 = vmatpush1.xpose.msra.mxu0 0.0
    %2491 = vmatprep.subr.mxu0 0.0
    %2492 = vmatpush1.xpose.msra.mxu0 0.0
    %2493 = vmatprep.subr.mxu0 0.0
    %2494 = vmatpush1.xpose.msra.mxu0 0.0
    %2495 = vmatprep.subr.mxu0 0.0
    %2496 = vmatpush1.xpose.msra.mxu0 0.0
    %2497 = vmatprep.subr.mxu0 0.0
    %2498 = vmatpush1.xpose.msra.mxu0 0.0
    %2499 = vmatprep.subr.mxu0 0.0
    %2500 = vmatpush1.xpose.msra.mxu0 0.0
    %2501 = vmatprep.subr.mxu0 0.0
    %2502 = vmatpush1.xpose.msra.mxu0 0.0
    %2503 = vmatprep.subr.mxu0 0.0
    %2504 = vmatpush1.xpose.msra.mxu0 0.0
    %2505 = vmatprep.subr.mxu0 0.0
    %2506 = vmatpush1.xpose.msra.mxu0 0.0
    %2507 = vmatprep.subr.mxu0 0.0
    %2508 = vmatpush1.xpose.msra.mxu0 0.0
    %2509 = vmatprep.subr.mxu0 0.0
    %2510 = vmatpush1.xpose.msra.mxu0 0.0
    %2511 = vmatprep.subr.mxu0 0.0
    %2512 = vmatpush1.xpose.msra.mxu0 0.0
    %2513 = vmatprep.subr.mxu0 0.0
    %2514 = vmatpush1.xpose.msra.mxu0 0.0
    %2515 = vmatprep.subr.mxu0 0.0
    %2516 = vmatpush1.xpose.msra.mxu0 0.0
    %2517 = vmatprep.mubr.f32.mxu0 0.0
    %2518 = vmatmul.mubr.f32.gmra.mrb[0].mxu0 %v2445
    %v2519 = vpop.f32.mrb[0].mxu0
    %v2520 = vadd.f32 0.0, %v2519
    %v2521 = vpop.f32.mrb[0].mxu0
    %2522 = vmatprep.mubr.f32.mxu0 0.0
    %2523 = vmatmul.mubr.f32.gmra.mrb[0].mxu0 %v2447
    %v2524 = vpop.f32.mrb[0].mxu0
    %v2525 = vadd.f32 0.0, %v2524
    %v2526 = vpop.f32.mrb[0].mxu0
    %2527 = vdwg.mxu0
    %2528 = vrot.lane.b32.xlu0 %v2429, 122
    %v2529 = vpop.permute.xlu0 %2528
    %2530 = vrot.lane.b32.xlu0 %v2435, 122
    %v2531 = vpop.permute.xlu0 %2530
    %2532 = vrot.lane.b32.xlu0 %v2429, 98
    %v2533 = vpop.permute.xlu0 %2532
    %2534 = vrot.lane.b32.xlu0 %v2435, 98
    %v2535 = vpop.permute.xlu0 %2534
    %v2536 = vsel %vm276, %v2529, 0
    %v2538 = vsel %vm276, %v2531, 0
    %v2540 = vsel %vm276, %v2533, 0
    %v2542 = vsel %vm276, %v2535, 0
    %2544 = vmatprep.subr.mxu0 0.0
    %2545 = vmatpush1.xpose.msra.mxu0 %v2540
    %2546 = vmatprep.subr.mxu0 0.0
    %2547 = vmatpush1.xpose.msra.mxu0 %v2542
    %2548 = vmatprep.subr.mxu0 0.0
    %2549 = vmatpush1.xpose.msra.mxu0 0.0
    %2550 = vmatprep.subr.mxu0 0.0
    %2551 = vmatpush1.xpose.msra.mxu0 0.0
    %2552 = vmatprep.subr.mxu0 0.0
    %2553 = vmatpush1.xpose.msra.mxu0 0.0
    %2554 = vmatprep.subr.mxu0 0.0
    %2555 = vmatpush1.xpose.msra.mxu0 0.0
    %2556 = vmatprep.subr.mxu0 0.0
    %2557 = vmatpush1.xpose.msra.mxu0 0.0
    %2558 = vmatprep.subr.mxu0 0.0
    %2559 = vmatpush1.xpose.msra.mxu0 0.0
    %2560 = vmatprep.subr.mxu0 0.0
    %2561 = vmatpush1.xpose.msra.mxu0 0.0
    %2562 = vmatprep.subr.mxu0 0.0
    %2563 = vmatpush1.xpose.msra.mxu0 0.0
    %2564 = vmatprep.subr.mxu0 0.0
    %2565 = vmatpush1.xpose.msra.mxu0 0.0
    %2566 = vmatprep.subr.mxu0 0.0
    %2567 = vmatpush1.xpose.msra.mxu0 0.0
    %2568 = vmatprep.subr.mxu0 0.0
    %2569 = vmatpush1.xpose.msra.mxu0 0.0
    %2570 = vmatprep.subr.mxu0 0.0
    %2571 = vmatpush1.xpose.msra.mxu0 0.0
    %2572 = vmatprep.subr.mxu0 0.0
    %2573 = vmatpush1.xpose.msra.mxu0 0.0
    %2574 = vmatprep.subr.mxu0 0.0
    %2575 = vmatpush1.xpose.msra.mxu0 0.0
    %2576 = vmatprep.subr.mxu0 0.0
    %2577 = vmatpush1.xpose.msra.mxu0 0.0
    %2578 = vmatprep.subr.mxu0 0.0
    %2579 = vmatpush1.xpose.msra.mxu0 0.0
    %2580 = vmatprep.subr.mxu0 0.0
    %2581 = vmatpush1.xpose.msra.mxu0 0.0
    %2582 = vmatprep.subr.mxu0 0.0
    %2583 = vmatpush1.xpose.msra.mxu0 0.0
    %2584 = vmatprep.subr.mxu0 0.0
    %2585 = vmatpush1.xpose.msra.mxu0 0.0
    %2586 = vmatprep.subr.mxu0 0.0
    %2587 = vmatpush1.xpose.msra.mxu0 0.0
    %2588 = vmatprep.subr.mxu0 0.0
    %2589 = vmatpush1.xpose.msra.mxu0 0.0
    %2590 = vmatprep.subr.mxu0 0.0
    %2591 = vmatpush1.xpose.msra.mxu0 0.0
    %2592 = vmatprep.subr.mxu0 0.0
    %2593 = vmatpush1.xpose.msra.mxu0 0.0
    %2594 = vmatprep.subr.mxu0 0.0
    %2595 = vmatpush1.xpose.msra.mxu0 0.0
    %2596 = vmatprep.subr.mxu0 0.0
    %2597 = vmatpush1.xpose.msra.mxu0 0.0
    %2598 = vmatprep.subr.mxu0 0.0
    %2599 = vmatpush1.xpose.msra.mxu0 0.0
    %2600 = vmatprep.subr.mxu0 0.0
    %2601 = vmatpush1.xpose.msra.mxu0 0.0
    %2602 = vmatprep.subr.mxu0 0.0
    %2603 = vmatpush1.xpose.msra.mxu0 0.0
    %2604 = vmatprep.subr.mxu0 0.0
    %2605 = vmatpush1.xpose.msra.mxu0 0.0
    %2606 = vmatprep.subr.mxu0 0.0
    %2607 = vmatpush1.xpose.msra.mxu0 0.0
    %2608 = vmatprep.mubr.f32.mxu0 0.0
    %2609 = vmatmul.mubr.f32.gmra.mrb[0].mxu0 %v2536
    %v2610 = vpop.f32.mrb[0].mxu0
    %v2611 = vadd.f32 0.0, %v2610
    %v2612 = vpop.f32.mrb[0].mxu0
    %2613 = vmatprep.mubr.f32.mxu0 0.0
    %2614 = vmatmul.mubr.f32.gmra.mrb[0].mxu0 %v2538
    %v2615 = vpop.f32.mrb[0].mxu0
    %v2616 = vadd.f32 0.0, %v2615
    %v2617 = vpop.f32.mrb[0].mxu0
    %2618 = vdwg.mxu0
    %2619 = vrot.lane.b32.xlu0 %v2429, 116
    %v2620 = vpop.permute.xlu0 %2619
    %2621 = vrot.lane.b32.xlu0 %v2435, 116
    %v2622 = vpop.permute.xlu0 %2621
    %2623 = vrot.lane.b32.xlu0 %v2429, 92
    %v2624 = vpop.permute.xlu0 %2623
    %2625 = vrot.lane.b32.xlu0 %v2435, 92
    %v2626 = vpop.permute.xlu0 %2625
    %v2627 = vsel %vm276, %v2620, 0
    %v2629 = vsel %vm276, %v2622, 0
    %v2631 = vsel %vm276, %v2624, 0
    %v2633 = vsel %vm276, %v2626, 0
    %2635 = vmatprep.subr.mxu0 0.0
    %2636 = vmatpush1.xpose.msra.mxu0 %v2631
    %2637 = vmatprep.subr.mxu0 0.0
    %2638 = vmatpush1.xpose.msra.mxu0 %v2633
    %2639 = vmatprep.subr.mxu0 0.0
    %2640 = vmatpush1.xpose.msra.mxu0 0.0
    %2641 = vmatprep.subr.mxu0 0.0
    %2642 = vmatpush1.xpose.msra.mxu0 0.0
    %2643 = vmatprep.subr.mxu0 0.0
    %2644 = vmatpush1.xpose.msra.mxu0 0.0
    %2645 = vmatprep.subr.mxu0 0.0
    %2646 = vmatpush1.xpose.msra.mxu0 0.0
    %2647 = vmatprep.subr.mxu0 0.0
    %2648 = vmatpush1.xpose.msra.mxu0 0.0
    %2649 = vmatprep.subr.mxu0 0.0
    %2650 = vmatpush1.xpose.msra.mxu0 0.0
    %2651 = vmatprep.subr.mxu0 0.0
    %2652 = vmatpush1.xpose.msra.mxu0 0.0
    %2653 = vmatprep.subr.mxu0 0.0
    %2654 = vmatpush1.xpose.msra.mxu0 0.0
    %2655 = vmatprep.subr.mxu0 0.0
    %2656 = vmatpush1.xpose.msra.mxu0 0.0
    %2657 = vmatprep.subr.mxu0 0.0
    %2658 = vmatpush1.xpose.msra.mxu0 0.0
    %2659 = vmatprep.subr.mxu0 0.0
    %2660 = vmatpush1.xpose.msra.mxu0 0.0
    %2661 = vmatprep.subr.mxu0 0.0
    %2662 = vmatpush1.xpose.msra.mxu0 0.0
    %2663 = vmatprep.subr.mxu0 0.0
    %2664 = vmatpush1.xpose.msra.mxu0 0.0
    %2665 = vmatprep.subr.mxu0 0.0
    %2666 = vmatpush1.xpose.msra.mxu0 0.0
    %2667 = vmatprep.subr.mxu0 0.0
    %2668 = vmatpush1.xpose.msra.mxu0 0.0
    %2669 = vmatprep.subr.mxu0 0.0
    %2670 = vmatpush1.xpose.msra.mxu0 0.0
    %2671 = vmatprep.subr.mxu0 0.0
    %2672 = vmatpush1.xpose.msra.mxu0 0.0
    %2673 = vmatprep.subr.mxu0 0.0
    %2674 = vmatpush1.xpose.msra.mxu0 0.0
    %2675 = vmatprep.subr.mxu0 0.0
    %2676 = vmatpush1.xpose.msra.mxu0 0.0
    %2677 = vmatprep.subr.mxu0 0.0
    %2678 = vmatpush1.xpose.msra.mxu0 0.0
    %2679 = vmatprep.subr.mxu0 0.0
    %2680 = vmatpush1.xpose.msra.mxu0 0.0
    %2681 = vmatprep.subr.mxu0 0.0
    %2682 = vmatpush1.xpose.msra.mxu0 0.0
    %2683 = vmatprep.subr.mxu0 0.0
    %2684 = vmatpush1.xpose.msra.mxu0 0.0
    %2685 = vmatprep.subr.mxu0 0.0
    %2686 = vmatpush1.xpose.msra.mxu0 0.0
    %2687 = vmatprep.subr.mxu0 0.0
    %2688 = vmatpush1.xpose.msra.mxu0 0.0
    %2689 = vmatprep.subr.mxu0 0.0
    %2690 = vmatpush1.xpose.msra.mxu0 0.0
    %2691 = vmatprep.subr.mxu0 0.0
    %2692 = vmatpush1.xpose.msra.mxu0 0.0
    %2693 = vmatprep.subr.mxu0 0.0
    %2694 = vmatpush1.xpose.msra.mxu0 0.0
    %2695 = vmatprep.subr.mxu0 0.0
    %2696 = vmatpush1.xpose.msra.mxu0 0.0
    %2697 = vmatprep.subr.mxu0 0.0
    %2698 = vmatpush1.xpose.msra.mxu0 0.0
    %2699 = vmatprep.mubr.f32.mxu0 0.0
    %2700 = vmatmul.mubr.f32.gmra.mrb[0].mxu0 %v2627
    %v2701 = vpop.f32.mrb[0].mxu0
    %v2702 = vadd.f32 0.0, %v2701
    %v2703 = vpop.f32.mrb[0].mxu0
    %2704 = vmatprep.mubr.f32.mxu0 0.0
    %2705 = vmatmul.mubr.f32.gmra.mrb[0].mxu0 %v2629
    %v2706 = vpop.f32.mrb[0].mxu0
    %v2707 = vadd.f32 0.0, %v2706
    %v2708 = vpop.f32.mrb[0].mxu0
    %2709 = vdwg.mxu0
    %2710 = vrot.lane.b32.xlu0 %v2429, 110
    %v2711 = vpop.permute.xlu0 %2710
    %2712 = vrot.lane.b32.xlu0 %v2435, 110
    %v2713 = vpop.permute.xlu0 %2712
    %2714 = vrot.lane.b32.xlu0 %v2429, 86
    %v2715 = vpop.permute.xlu0 %2714
    %2716 = vrot.lane.b32.xlu0 %v2435, 86
    %v2717 = vpop.permute.xlu0 %2716
    %v2718 = vsel %vm276, %v2711, 0
    %v2720 = vsel %vm276, %v2713, 0
    %v2722 = vsel %vm276, %v2715, 0
    %v2724 = vsel %vm276, %v2717, 0
    %2726 = vmatprep.subr.mxu0 0.0
    %2727 = vmatpush1.xpose.msra.mxu0 %v2722
    %2728 = vmatprep.subr.mxu0 0.0
    %2729 = vmatpush1.xpose.msra.mxu0 %v2724
    %2730 = vmatprep.subr.mxu0 0.0
    %2731 = vmatpush1.xpose.msra.mxu0 0.0
    %2732 = vmatprep.subr.mxu0 0.0
    %2733 = vmatpush1.xpose.msra.mxu0 0.0
    %2734 = vmatprep.subr.mxu0 0.0
    %2735 = vmatpush1.xpose.msra.mxu0 0.0
    %2736 = vmatprep.subr.mxu0 0.0
    %2737 = vmatpush1.xpose.msra.mxu0 0.0
    %2738 = vmatprep.subr.mxu0 0.0
    %2739 = vmatpush1.xpose.msra.mxu0 0.0
    %2740 = vmatprep.subr.mxu0 0.0
    %2741 = vmatpush1.xpose.msra.mxu0 0.0
    %2742 = vmatprep.subr.mxu0 0.0
    %2743 = vmatpush1.xpose.msra.mxu0 0.0
    %2744 = vmatprep.subr.mxu0 0.0
    %2745 = vmatpush1.xpose.msra.mxu0 0.0
    %2746 = vmatprep.subr.mxu0 0.0
    %2747 = vmatpush1.xpose.msra.mxu0 0.0
    %2748 = vmatprep.subr.mxu0 0.0
    %2749 = vmatpush1.xpose.msra.mxu0 0.0
    %2750 = vmatprep.subr.mxu0 0.0
    %2751 = vmatpush1.xpose.msra.mxu0 0.0
    %2752 = vmatprep.subr.mxu0 0.0
    %2753 = vmatpush1.xpose.msra.mxu0 0.0
    %2754 = vmatprep.subr.mxu0 0.0
    %2755 = vmatpush1.xpose.msra.mxu0 0.0
    %2756 = vmatprep.subr.mxu0 0.0
    %2757 = vmatpush1.xpose.msra.mxu0 0.0
    %2758 = vmatprep.subr.mxu0 0.0
    %2759 = vmatpush1.xpose.msra.mxu0 0.0
    %2760 = vmatprep.subr.mxu0 0.0
    %2761 = vmatpush1.xpose.msra.mxu0 0.0
    %2762 = vmatprep.subr.mxu0 0.0
    %2763 = vmatpush1.xpose.msra.mxu0 0.0
    %2764 = vmatprep.subr.mxu0 0.0
    %2765 = vmatpush1.xpose.msra.mxu0 0.0
    %2766 = vmatprep.subr.mxu0 0.0
    %2767 = vmatpush1.xpose.msra.mxu0 0.0
    %2768 = vmatprep.subr.mxu0 0.0
    %2769 = vmatpush1.xpose.msra.mxu0 0.0
    %2770 = vmatprep.subr.mxu0 0.0
    %2771 = vmatpush1.xpose.msra.mxu0 0.0
    %2772 = vmatprep.subr.mxu0 0.0
    %2773 = vmatpush1.xpose.msra.mxu0 0.0
    %2774 = vmatprep.subr.mxu0 0.0
    %2775 = vmatpush1.xpose.msra.mxu0 0.0
    %2776 = vmatprep.subr.mxu0 0.0
    %2777 = vmatpush1.xpose.msra.mxu0 0.0
    %2778 = vmatprep.subr.mxu0 0.0
    %2779 = vmatpush1.xpose.msra.mxu0 0.0
    %2780 = vmatprep.subr.mxu0 0.0
    %2781 = vmatpush1.xpose.msra.mxu0 0.0
    %2782 = vmatprep.subr.mxu0 0.0
    %2783 = vmatpush1.xpose.msra.mxu0 0.0
    %2784 = vmatprep.subr.mxu0 0.0
    %2785 = vmatpush1.xpose.msra.mxu0 0.0
    %2786 = vmatprep.subr.mxu0 0.0
    %2787 = vmatpush1.xpose.msra.mxu0 0.0
    %2788 = vmatprep.subr.mxu0 0.0
    %2789 = vmatpush1.xpose.msra.mxu0 0.0
    %2790 = vmatprep.mubr.f32.mxu0 0.0
    %2791 = vmatmul.mubr.f32.gmra.mrb[0].mxu0 %v2718
    %v2792 = vpop.f32.mrb[0].mxu0
    %v2793 = vadd.f32 0.0, %v2792
    %v2794 = vpop.f32.mrb[0].mxu0
    %2795 = vmatprep.mubr.f32.mxu0 0.0
    %2796 = vmatmul.mubr.f32.gmra.mrb[0].mxu0 %v2720
    %v2797 = vpop.f32.mrb[0].mxu0
    %v2798 = vadd.f32 0.0, %v2797
    %v2799 = vpop.f32.mrb[0].mxu0
    %2800 = vdwg.mxu0
    %v2801 = vadd.f32 %v2520, %v172
    %v2802 = vadd.f32 %v2525, %v173
    %v2803 = vadd.f32 %v2611, %v174
    %v2804 = vadd.f32 %v2616, %v175
    %v2805 = vadd.f32 %v2702, %v176
    %v2806 = vadd.f32 %v2707, %v177
    %v2807 = vadd.f32 %v2793, %v178
    %v2808 = vadd.f32 %v2798, %v179
    %v2809 = vsel %vm641, %v2801, -inf
    %2810 = vmax.xlane.f32.xlu0 %v2809
    %v2811 = vpop.xlane.xlu0 %2810
    %v2812 = vsel %vm641, %v2802, -inf
    %2813 = vmax.xlane.f32.xlu0 %v2812
    %v2814 = vpop.xlane.xlu0 %2813
    %v2815 = vsel %vm641, %v2803, -inf
    %2816 = vmax.xlane.f32.xlu0 %v2815
    %v2817 = vpop.xlane.xlu0 %2816
    %v2818 = vsel %vm641, %v2804, -inf
    %2819 = vmax.xlane.f32.xlu0 %v2818
    %v2820 = vpop.xlane.xlu0 %2819
    %v2821 = vsel %vm641, %v2805, -inf
    %2822 = vmax.xlane.f32.xlu0 %v2821
    %v2823 = vpop.xlane.xlu0 %2822
    %v2824 = vsel %vm641, %v2806, -inf
    %2825 = vmax.xlane.f32.xlu0 %v2824
    %v2826 = vpop.xlane.xlu0 %2825
    %v2827 = vsel %vm641, %v2807, -inf
    %2828 = vmax.xlane.f32.xlu0 %v2827
    %v2829 = vpop.xlane.xlu0 %2828
    %v2830 = vsel %vm641, %v2808, -inf
    %2831 = vmax.xlane.f32.xlu0 %v2830
    %v2832 = vpop.xlane.xlu0 %2831
    %v2833 = vsub.f32 %v2801, %v2811
    %v2834 = vsub.f32 %v2802, %v2814
    %v2835 = vsub.f32 %v2803, %v2817
    %v2836 = vsub.f32 %v2804, %v2820
    %v2837 = vsub.f32 %v2805, %v2823
    %v2838 = vsub.f32 %v2806, %v2826
    %v2839 = vsub.f32 %v2807, %v2829
    %v2840 = vsub.f32 %v2808, %v2832
    %v2841 = vmul.f32 %v2833, 1.442695
    %v2842 = vpow.pop %v2841
    %v2843 = vmul.f32 %v2834, 1.442695
    %v2844 = vpow.pop %v2843
    %v2845 = vmul.f32 %v2835, 1.442695
    %v2846 = vpow.pop %v2845
    %v2847 = vmul.f32 %v2836, 1.442695
    %v2848 = vpow.pop %v2847
    %v2849 = vmul.f32 %v2837, 1.442695
    %v2850 = vpow.pop %v2849
    %v2851 = vmul.f32 %v2838, 1.442695
    %v2852 = vpow.pop %v2851
    %v2853 = vmul.f32 %v2839, 1.442695
    %v2854 = vpow.pop %v2853
    %v2855 = vmul.f32 %v2840, 1.442695
    %v2856 = vpow.pop %v2855
    %v2857 = vsel %vm641, %v2842, 0.0
    %2858 = vadd.xlane.f32.xlu0 %v2857
    %v2859 = vpop.xlane.xlu0 %2858
    %v2860 = vsel %vm641, %v2844, 0.0
    %2861 = vadd.xlane.f32.xlu0 %v2860
    %v2862 = vpop.xlane.xlu0 %2861
    %v2863 = vsel %vm641, %v2846, 0.0
    %2864 = vadd.xlane.f32.xlu0 %v2863
    %v2865 = vpop.xlane.xlu0 %2864
    %v2866 = vsel %vm641, %v2848, 0.0
    %2867 = vadd.xlane.f32.xlu0 %v2866
    %v2868 = vpop.xlane.xlu0 %2867
    %v2869 = vsel %vm641, %v2850, 0.0
    %2870 = vadd.xlane.f32.xlu0 %v2869
    %v2871 = vpop.xlane.xlu0 %2870
    %v2872 = vsel %vm641, %v2852, 0.0
    %2873 = vadd.xlane.f32.xlu0 %v2872
    %v2874 = vpop.xlane.xlu0 %2873
    %v2875 = vsel %vm641, %v2854, 0.0
    %2876 = vadd.xlane.f32.xlu0 %v2875
    %v2877 = vpop.xlane.xlu0 %2876
    %v2878 = vsel %vm641, %v2856, 0.0
    %2879 = vadd.xlane.f32.xlu0 %v2878
    %v2880 = vpop.xlane.xlu0 %2879
    %v2881 = vrcp.pop %v2859
    %v2882 = vrcp.pop %v2862
    %v2883 = vrcp.pop %v2865
    %v2884 = vrcp.pop %v2868
    %v2885 = vrcp.pop %v2871
    %v2886 = vrcp.pop %v2874
    %v2887 = vrcp.pop %v2877
    %v2888 = vrcp.pop %v2880
    %v2889 = vmul.f32 %v2842, %v2881
    %v2890 = vmul.f32 %v2844, %v2882
    %v2891 = vmul.f32 %v2846, %v2883
    %v2892 = vmul.f32 %v2848, %v2884
    %v2893 = vmul.f32 %v2850, %v2885
    %v2894 = vmul.f32 %v2852, %v2886
    %v2895 = vmul.f32 %v2854, %v2887
    %v2896 = vmul.f32 %v2856, %v2888
    %2897 = vrot.lane.b32.xlu0 %v2429, 56
    %v2898 = vpop.permute.xlu0 %2897
    %2899 = vrot.lane.b32.xlu0 %v2435, 56
    %v2900 = vpop.permute.xlu0 %2899
    %v2904 = vsel %vm641, %v2891, 0
    %v2907 = vsel %vm641, %v2892, 0
    %2909 = vmatprep.subr.mxu0 0.0
    %2910 = vmatpush1.msra.mxu0 %v2898
    %2911 = vmatprep.subr.mxu0 0.0
    %2912 = vmatpush1.msra.mxu0 %v2900
    %2913 = vmatprep.subr.mxu0 0.0
    %2914 = vmatpush1.msra.mxu0 0.0
    %2915 = vmatprep.subr.mxu0 0.0
    %2916 = vmatpush1.msra.mxu0 0.0
    %2917 = vmatprep.subr.mxu0 0.0
    %2918 = vmatpush1.msra.mxu0 0.0
    %2919 = vmatprep.subr.mxu0 0.0
    %2920 = vmatpush1.msra.mxu0 0.0
    %2921 = vmatprep.subr.mxu0 0.0
    %2922 = vmatpush1.msra.mxu0 0.0
    %2923 = vmatprep.subr.mxu0 0.0
    %2924 = vmatpush1.msra.mxu0 0.0
    %2925 = vmatprep.subr.mxu0 0.0
    %2926 = vmatpush1.msra.mxu0 0.0
    %2927 = vmatprep.subr.mxu0 0.0
    %2928 = vmatpush1.msra.mxu0 0.0
    %2929 = vmatprep.subr.mxu0 0.0
    %2930 = vmatpush1.msra.mxu0 0.0
    %2931 = vmatprep.subr.mxu0 0.0
    %2932 = vmatpush1.msra.mxu0 0.0
    %2933 = vmatprep.subr.mxu0 0.0
    %2934 = vmatpush1.msra.mxu0 0.0
    %2935 = vmatprep.subr.mxu0 0.0
    %2936 = vmatpush1.msra.mxu0 0.0
    %2937 = vmatprep.subr.mxu0 0.0
    %2938 = vmatpush1.msra.mxu0 0.0
    %2939 = vmatprep.subr.mxu0 0.0
    %2940 = vmatpush1.msra.mxu0 0.0
    %2941 = vmatprep.subr.mxu0 0.0
    %2942 = vmatpush1.msra.mxu0 0.0
    %2943 = vmatprep.subr.mxu0 0.0
    %2944 = vmatpush1.msra.mxu0 0.0
    %2945 = vmatprep.subr.mxu0 0.0
    %2946 = vmatpush1.msra.mxu0 0.0
    %2947 = vmatprep.subr.mxu0 0.0
    %2948 = vmatpush1.msra.mxu0 0.0
    %2949 = vmatprep.subr.mxu0 0.0
    %2950 = vmatpush1.msra.mxu0 0.0
    %2951 = vmatprep.subr.mxu0 0.0
    %2952 = vmatpush1.msra.mxu0 0.0
    %2953 = vmatprep.subr.mxu0 0.0
    %2954 = vmatpush1.msra.mxu0 0.0
    %2955 = vmatprep.subr.mxu0 0.0
    %2956 = vmatpush1.msra.mxu0 0.0
    %2957 = vmatprep.subr.mxu0 0.0
    %2958 = vmatpush1.msra.mxu0 0.0
    %2959 = vmatprep.subr.mxu0 0.0
    %2960 = vmatpush1.msra.mxu0 0.0
    %2961 = vmatprep.subr.mxu0 0.0
    %2962 = vmatpush1.msra.mxu0 0.0
    %2963 = vmatprep.subr.mxu0 0.0
    %2964 = vmatpush1.msra.mxu0 0.0
    %2965 = vmatprep.subr.mxu0 0.0
    %2966 = vmatpush1.msra.mxu0 0.0
    %2967 = vmatprep.subr.mxu0 0.0
    %2968 = vmatpush1.msra.mxu0 0.0
    %2969 = vmatprep.subr.mxu0 0.0
    %2970 = vmatpush1.msra.mxu0 0.0
    %2971 = vmatprep.subr.mxu0 0.0
    %2972 = vmatpush1.msra.mxu0 0.0
    %2973 = vmatprep.mubr.f32.mxu0 0.0
    %2974 = vmatmul.mubr.f32.gmra.mrb[0].mxu0 %v2904
    %v2975 = vpop.f32.mrb[0].mxu0
    %v2976 = vadd.f32 0.0, %v2975
    %v2977 = vpop.f32.mrb[0].mxu0
    %2978 = vmatprep.mubr.f32.mxu0 0.0
    %2979 = vmatmul.mubr.f32.gmra.mrb[0].mxu0 %v2907
    %v2980 = vpop.f32.mrb[0].mxu0
    %v2981 = vadd.f32 0.0, %v2980
    %v2982 = vpop.f32.mrb[0].mxu0
    %2983 = vdwg.mxu0
    %2984 = vrot.lane.b32.xlu0 %v2429, 80
    %v2985 = vpop.permute.xlu0 %2984
    %2986 = vrot.lane.b32.xlu0 %v2435, 80
    %v2987 = vpop.permute.xlu0 %2986
    %v2991 = vsel %vm641, %v2889, 0
    %v2994 = vsel %vm641, %v2890, 0
    %2996 = vmatprep.subr.mxu0 0.0
    %2997 = vmatpush1.msra.mxu0 %v2985
    %2998 = vmatprep.subr.mxu0 0.0
    %2999 = vmatpush1.msra.mxu0 %v2987
    %3000 = vmatprep.subr.mxu0 0.0
    %3001 = vmatpush1.msra.mxu0 0.0
    %3002 = vmatprep.subr.mxu0 0.0
    %3003 = vmatpush1.msra.mxu0 0.0
    %3004 = vmatprep.subr.mxu0 0.0
    %3005 = vmatpush1.msra.mxu0 0.0
    %3006 = vmatprep.subr.mxu0 0.0
    %3007 = vmatpush1.msra.mxu0 0.0
    %3008 = vmatprep.subr.mxu0 0.0
    %3009 = vmatpush1.msra.mxu0 0.0
    %3010 = vmatprep.subr.mxu0 0.0
    %3011 = vmatpush1.msra.mxu0 0.0
    %3012 = vmatprep.subr.mxu0 0.0
    %3013 = vmatpush1.msra.mxu0 0.0
    %3014 = vmatprep.subr.mxu0 0.0
    %3015 = vmatpush1.msra.mxu0 0.0
    %3016 = vmatprep.subr.mxu0 0.0
    %3017 = vmatpush1.msra.mxu0 0.0
    %3018 = vmatprep.subr.mxu0 0.0
    %3019 = vmatpush1.msra.mxu0 0.0
    %3020 = vmatprep.subr.mxu0 0.0
    %3021 = vmatpush1.msra.mxu0 0.0
    %3022 = vmatprep.subr.mxu0 0.0
    %3023 = vmatpush1.msra.mxu0 0.0
    %3024 = vmatprep.subr.mxu0 0.0
    %3025 = vmatpush1.msra.mxu0 0.0
    %3026 = vmatprep.subr.mxu0 0.0
    %3027 = vmatpush1.msra.mxu0 0.0
    %3028 = vmatprep.subr.mxu0 0.0
    %3029 = vmatpush1.msra.mxu0 0.0
    %3030 = vmatprep.subr.mxu0 0.0
    %3031 = vmatpush1.msra.mxu0 0.0
    %3032 = vmatprep.subr.mxu0 0.0
    %3033 = vmatpush1.msra.mxu0 0.0
    %3034 = vmatprep.subr.mxu0 0.0
    %3035 = vmatpush1.msra.mxu0 0.0
    %3036 = vmatprep.subr.mxu0 0.0
    %3037 = vmatpush1.msra.mxu0 0.0
    %3038 = vmatprep.subr.mxu0 0.0
    %3039 = vmatpush1.msra.mxu0 0.0
    %3040 = vmatprep.subr.mxu0 0.0
    %3041 = vmatpush1.msra.mxu0 0.0
    %3042 = vmatprep.subr.mxu0 0.0
    %3043 = vmatpush1.msra.mxu0 0.0
    %3044 = vmatprep.subr.mxu0 0.0
    %3045 = vmatpush1.msra.mxu0 0.0
    %3046 = vmatprep.subr.mxu0 0.0
    %3047 = vmatpush1.msra.mxu0 0.0
    %3048 = vmatprep.subr.mxu0 0.0
    %3049 = vmatpush1.msra.mxu0 0.0
    %3050 = vmatprep.subr.mxu0 0.0
    %3051 = vmatpush1.msra.mxu0 0.0
    %3052 = vmatprep.subr.mxu0 0.0
    %3053 = vmatpush1.msra.mxu0 0.0
    %3054 = vmatprep.subr.mxu0 0.0
    %3055 = vmatpush1.msra.mxu0 0.0
    %3056 = vmatprep.subr.mxu0 0.0
    %3057 = vmatpush1.msra.mxu0 0.0
    %3058 = vmatprep.subr.mxu0 0.0
    %3059 = vmatpush1.msra.mxu0 0.0
    %3060 = vmatprep.mubr.f32.mxu0 0.0
    %3061 = vmatmul.mubr.f32.gmra.mrb[0].mxu0 %v2991
    %v3062 = vpop.f32.mrb[0].mxu0
    %v3063 = vadd.f32 %v2976, %v3062
    %v3064 = vpop.f32.mrb[0].mxu0
    %3065 = vmatprep.mubr.f32.mxu0 0.0
    %3066 = vmatmul.mubr.f32.gmra.mrb[0].mxu0 %v2994
    %v3067 = vpop.f32.mrb[0].mxu0
    %v3068 = vadd.f32 %v2981, %v3067
    %v3069 = vpop.f32.mrb[0].mxu0
    %3070 = vdwg.mxu0
    %3071 = vrot.lane.b32.xlu0 %v2429, 32
    %v3072 = vpop.permute.xlu0 %3071
    %3073 = vrot.lane.b32.xlu0 %v2435, 32
    %v3074 = vpop.permute.xlu0 %3073
    %v3078 = vsel %vm641, %v2893, 0
    %v3081 = vsel %vm641, %v2894, 0
    %3083 = vmatprep.subr.mxu0 0.0
    %3084 = vmatpush1.msra.mxu0 %v3072
    %3085 = vmatprep.subr.mxu0 0.0
    %3086 = vmatpush1.msra.mxu0 %v3074
    %3087 = vmatprep.subr.mxu0 0.0
    %3088 = vmatpush1.msra.mxu0 0.0
    %3089 = vmatprep.subr.mxu0 0.0
    %3090 = vmatpush1.msra.mxu0 0.0
    %3091 = vmatprep.subr.mxu0 0.0
    %3092 = vmatpush1.msra.mxu0 0.0
    %3093 = vmatprep.subr.mxu0 0.0
    %3094 = vmatpush1.msra.mxu0 0.0
    %3095 = vmatprep.subr.mxu0 0.0
    %3096 = vmatpush1.msra.mxu0 0.0
    %3097 = vmatprep.subr.mxu0 0.0
    %3098 = vmatpush1.msra.mxu0 0.0
    %3099 = vmatprep.subr.mxu0 0.0
    %3100 = vmatpush1.msra.mxu0 0.0
    %3101 = vmatprep.subr.mxu0 0.0
    %3102 = vmatpush1.msra.mxu0 0.0
    %3103 = vmatprep.subr.mxu0 0.0
    %3104 = vmatpush1.msra.mxu0 0.0
    %3105 = vmatprep.subr.mxu0 0.0
    %3106 = vmatpush1.msra.mxu0 0.0
    %3107 = vmatprep.subr.mxu0 0.0
    %3108 = vmatpush1.msra.mxu0 0.0
    %3109 = vmatprep.subr.mxu0 0.0
    %3110 = vmatpush1.msra.mxu0 0.0
    %3111 = vmatprep.subr.mxu0 0.0
    %3112 = vmatpush1.msra.mxu0 0.0
    %3113 = vmatprep.subr.mxu0 0.0
    %3114 = vmatpush1.msra.mxu0 0.0
    %3115 = vmatprep.subr.mxu0 0.0
    %3116 = vmatpush1.msra.mxu0 0.0
    %3117 = vmatprep.subr.mxu0 0.0
    %3118 = vmatpush1.msra.mxu0 0.0
    %3119 = vmatprep.subr.mxu0 0.0
    %3120 = vmatpush1.msra.mxu0 0.0
    %3121 = vmatprep.subr.mxu0 0.0
    %3122 = vmatpush1.msra.mxu0 0.0
    %3123 = vmatprep.subr.mxu0 0.0
    %3124 = vmatpush1.msra.mxu0 0.0
    %3125 = vmatprep.subr.mxu0 0.0
    %3126 = vmatpush1.msra.mxu0 0.0
    %3127 = vmatprep.subr.mxu0 0.0
    %3128 = vmatpush1.msra.mxu0 0.0
    %3129 = vmatprep.subr.mxu0 0.0
    %3130 = vmatpush1.msra.mxu0 0.0
    %3131 = vmatprep.subr.mxu0 0.0
    %3132 = vmatpush1.msra.mxu0 0.0
    %3133 = vmatprep.subr.mxu0 0.0
    %3134 = vmatpush1.msra.mxu0 0.0
    %3135 = vmatprep.subr.mxu0 0.0
    %3136 = vmatpush1.msra.mxu0 0.0
    %3137 = vmatprep.subr.mxu0 0.0
    %3138 = vmatpush1.msra.mxu0 0.0
    %3139 = vmatprep.subr.mxu0 0.0
    %3140 = vmatpush1.msra.mxu0 0.0
    %3141 = vmatprep.subr.mxu0 0.0
    %3142 = vmatpush1.msra.mxu0 0.0
    %3143 = vmatprep.subr.mxu0 0.0
    %3144 = vmatpush1.msra.mxu0 0.0
    %3145 = vmatprep.subr.mxu0 0.0
    %3146 = vmatpush1.msra.mxu0 0.0
    %3147 = vmatprep.mubr.f32.mxu0 0.0
    %3148 = vmatmul.mubr.f32.gmra.mrb[0].mxu0 %v3078
    %v3149 = vpop.f32.mrb[0].mxu0
    %v3150 = vadd.f32 0.0, %v3149
    %v3151 = vpop.f32.mrb[0].mxu0
    %3152 = vmatprep.mubr.f32.mxu0 0.0
    %3153 = vmatmul.mubr.f32.gmra.mrb[0].mxu0 %v3081
    %v3154 = vpop.f32.mrb[0].mxu0
    %v3155 = vadd.f32 0.0, %v3154
    %v3156 = vpop.f32.mrb[0].mxu0
    %3157 = vdwg.mxu0
    %v3158 = vadd.f32 %v3063, %v3150
    %v3159 = vadd.f32 %v3068, %v3155
    %v3161 = vsel %vm641, %v2895, 0
    %v3164 = vsel %vm641, %v2896, 0
    %3166 = vmatprep.subr.mxu0 0.0
    %3167 = vmatpush1.msra.mxu0 %v2431
    %3168 = vmatprep.subr.mxu0 0.0
    %3169 = vmatpush1.msra.mxu0 %v2437
    %3170 = vmatprep.subr.mxu0 0.0
    %3171 = vmatpush1.msra.mxu0 0.0
    %3172 = vmatprep.subr.mxu0 0.0
    %3173 = vmatpush1.msra.mxu0 0.0
    %3174 = vmatprep.subr.mxu0 0.0
    %3175 = vmatpush1.msra.mxu0 0.0
    %3176 = vmatprep.subr.mxu0 0.0
    %3177 = vmatpush1.msra.mxu0 0.0
    %3178 = vmatprep.subr.mxu0 0.0
    %3179 = vmatpush1.msra.mxu0 0.0
    %3180 = vmatprep.subr.mxu0 0.0
    %3181 = vmatpush1.msra.mxu0 0.0
    %3182 = vmatprep.subr.mxu0 0.0
    %3183 = vmatpush1.msra.mxu0 0.0
    %3184 = vmatprep.subr.mxu0 0.0
    %3185 = vmatpush1.msra.mxu0 0.0
    %3186 = vmatprep.subr.mxu0 0.0
    %3187 = vmatpush1.msra.mxu0 0.0
    %3188 = vmatprep.subr.mxu0 0.0
    %3189 = vmatpush1.msra.mxu0 0.0
    %3190 = vmatprep.subr.mxu0 0.0
    %3191 = vmatpush1.msra.mxu0 0.0
    %3192 = vmatprep.subr.mxu0 0.0
    %3193 = vmatpush1.msra.mxu0 0.0
    %3194 = vmatprep.subr.mxu0 0.0
    %3195 = vmatpush1.msra.mxu0 0.0
    %3196 = vmatprep.subr.mxu0 0.0
    %3197 = vmatpush1.msra.mxu0 0.0
    %3198 = vmatprep.subr.mxu0 0.0
    %3199 = vmatpush1.msra.mxu0 0.0
    %3200 = vmatprep.subr.mxu0 0.0
    %3201 = vmatpush1.msra.mxu0 0.0
    %3202 = vmatprep.subr.mxu0 0.0
    %3203 = vmatpush1.msra.mxu0 0.0
    %3204 = vmatprep.subr.mxu0 0.0
    %3205 = vmatpush1.msra.mxu0 0.0
    %3206 = vmatprep.subr.mxu0 0.0
    %3207 = vmatpush1.msra.mxu0 0.0
    %3208 = vmatprep.subr.mxu0 0.0
    %3209 = vmatpush1.msra.mxu0 0.0
    %3210 = vmatprep.subr.mxu0 0.0
    %3211 = vmatpush1.msra.mxu0 0.0
    %3212 = vmatprep.subr.mxu0 0.0
    %3213 = vmatpush1.msra.mxu0 0.0
    %3214 = vmatprep.subr.mxu0 0.0
    %3215 = vmatpush1.msra.mxu0 0.0
    %3216 = vmatprep.subr.mxu0 0.0
    %3217 = vmatpush1.msra.mxu0 0.0
    %3218 = vmatprep.subr.mxu0 0.0
    %3219 = vmatpush1.msra.mxu0 0.0
    %3220 = vmatprep.subr.mxu0 0.0
    %3221 = vmatpush1.msra.mxu0 0.0
    %3222 = vmatprep.subr.mxu0 0.0
    %3223 = vmatpush1.msra.mxu0 0.0
    %3224 = vmatprep.subr.mxu0 0.0
    %3225 = vmatpush1.msra.mxu0 0.0
    %3226 = vmatprep.subr.mxu0 0.0
    %3227 = vmatpush1.msra.mxu0 0.0
    %3228 = vmatprep.subr.mxu0 0.0
    %3229 = vmatpush1.msra.mxu0 0.0
    %3230 = vmatprep.mubr.f32.mxu0 0.0
    %3231 = vmatmul.mubr.f32.gmra.mrb[0].mxu0 %v3161
    %v3232 = vpop.f32.mrb[0].mxu0
    %v3233 = vadd.f32 0.0, %v3232
    %v3234 = vpop.f32.mrb[0].mxu0
    %3235 = vmatprep.mubr.f32.mxu0 0.0
    %3236 = vmatmul.mubr.f32.gmra.mrb[0].mxu0 %v3164
    %v3237 = vpop.f32.mrb[0].mxu0
    %v3238 = vadd.f32 0.0, %v3237
    %v3239 = vpop.f32.mrb[0].mxu0
    %3240 = vdwg.mxu0
    %v3241 = vadd.f32 %v3158, %v3233
    %v3242 = vadd.f32 %v3159, %v3238
    %s3243 = scalar_lea.vmem %s4, 240
    %v3244 = vld [vmem:[%s3243] sm:$0xff]
    %v3245 = vld [vmem:[%s3243 + $0x8] sm:$0xff]
    %v3246 = vld [vmem:[%s3243 + $0x10] sm:$0xff]
    %v3247 = vld [vmem:[%s3243 + $0x18] sm:$0xff]
    %v3248 = vld [vmem:[%s3243 + $0x20] sm:$0xff]
    %v3249 = vld [vmem:[%s3243 + $0x28] sm:$0xff]
    %v3250 = vld [vmem:[%s3243 + $0x30] sm:$0xff]
    %v3251 = vld [vmem:[%s3243 + $0x38] sm:$0xff]
    %v3252 = vld [vmem:[%s3243 + $0x40] sm:$0xff]
    %v3253 = vld [vmem:[%s3243 + $0x48] sm:$0xff]
    %v3254 = vld [vmem:[%s3243 + $0x50] sm:$0xff]
    %v3255 = vld [vmem:[%s3243 + $0x58] sm:$0xff]
    %v3256 = vld [vmem:[%s3243 + $0x60] sm:$0xff]
    %v3257 = vld [vmem:[%s3243 + $0x68] sm:$0xff]
    %v3258 = vld [vmem:[%s3243 + $0x70] sm:$0xff]
    %s3259 = scalar_lea.vmem %s5, 4
    %v3260 = vld [vmem:[%s3259] sm:$0x3]
    %v3261 = vlaneseq
    %v3262 = vshrl.u32 %v3261, 7
    %v3263 = vsub.s32 0, %v3262
    %v3264 = vrot.slane %v3260, %v3263
    %v3266 = vsel %vm186, %v3241, 0
    %v3269 = vsel %vm186, %v3242, 0
    %3271 = vmatprep.subr.mxu0 0.0
    %3272 = vmatpush1.msra.mxu0 %v3244
    %3273 = vmatprep.subr.mxu0 0.0
    %3274 = vmatpush1.msra.mxu0 %v3245
    %3275 = vmatprep.subr.mxu0 0.0
    %3276 = vmatpush1.msra.mxu0 %v3246
    %3277 = vmatprep.subr.mxu0 0.0
    %3278 = vmatpush1.msra.mxu0 0.0
    %3279 = vmatprep.subr.mxu0 0.0
    %3280 = vmatpush1.msra.mxu0 0.0
    %3281 = vmatprep.subr.mxu0 0.0
    %3282 = vmatpush1.msra.mxu0 0.0
    %3283 = vmatprep.subr.mxu0 0.0
    %3284 = vmatpush1.msra.mxu0 0.0
    %3285 = vmatprep.subr.mxu0 0.0
    %3286 = vmatpush1.msra.mxu0 0.0
    %3287 = vmatprep.subr.mxu0 0.0
    %3288 = vmatpush1.msra.mxu0 0.0
    %3289 = vmatprep.subr.mxu0 0.0
    %3290 = vmatpush1.msra.mxu0 0.0
    %3291 = vmatprep.subr.mxu0 0.0
    %3292 = vmatpush1.msra.mxu0 0.0
    %3293 = vmatprep.subr.mxu0 0.0
    %3294 = vmatpush1.msra.mxu0 0.0
    %3295 = vmatprep.subr.mxu0 0.0
    %3296 = vmatpush1.msra.mxu0 0.0
    %3297 = vmatprep.subr.mxu0 0.0
    %3298 = vmatpush1.msra.mxu0 0.0
    %3299 = vmatprep.subr.mxu0 0.0
    %3300 = vmatpush1.msra.mxu0 0.0
    %3301 = vmatprep.subr.mxu0 0.0
    %3302 = vmatpush1.msra.mxu0 0.0
    %3303 = vmatprep.subr.mxu0 0.0
    %3304 = vmatpush1.msra.mxu0 0.0
    %3305 = vmatprep.subr.mxu0 0.0
    %3306 = vmatpush1.msra.mxu0 0.0
    %3307 = vmatprep.subr.mxu0 0.0
    %3308 = vmatpush1.msra.mxu0 0.0
    %3309 = vmatprep.subr.mxu0 0.0
    %3310 = vmatpush1.msra.mxu0 0.0
    %3311 = vmatprep.subr.mxu0 0.0
    %3312 = vmatpush1.msra.mxu0 0.0
    %3313 = vmatprep.subr.mxu0 0.0
    %3314 = vmatpush1.msra.mxu0 0.0
    %3315 = vmatprep.subr.mxu0 0.0
    %3316 = vmatpush1.msra.mxu0 0.0
    %3317 = vmatprep.subr.mxu0 0.0
    %3318 = vmatpush1.msra.mxu0 0.0
    %3319 = vmatprep.subr.mxu0 0.0
    %3320 = vmatpush1.msra.mxu0 0.0
    %3321 = vmatprep.subr.mxu0 0.0
    %3322 = vmatpush1.msra.mxu0 0.0
    %3323 = vmatprep.subr.mxu0 0.0
    %3324 = vmatpush1.msra.mxu0 0.0
    %3325 = vmatprep.subr.mxu0 0.0
    %3326 = vmatpush1.msra.mxu0 0.0
    %3327 = vmatprep.subr.mxu0 0.0
    %3328 = vmatpush1.msra.mxu0 0.0
    %3329 = vmatprep.subr.mxu0 0.0
    %3330 = vmatpush1.msra.mxu0 0.0
    %3331 = vmatprep.subr.mxu0 0.0
    %3332 = vmatpush1.msra.mxu0 0.0
    %3333 = vmatprep.subr.mxu0 0.0
    %3334 = vmatpush1.msra.mxu0 0.0
    %3335 = vmatprep.mubr.f32.mxu0 0.0
    %3336 = vmatmul.mubr.f32.gmra.mrb[0].mxu0 %v3266
    %v3337 = vpop.f32.mrb[0].mxu0
    %v3338 = vadd.f32 %v3264, %v3337
    %v3339 = vpop.f32.mrb[0].mxu0
    %3340 = vmatprep.mubr.f32.mxu0 0.0
    %3341 = vmatmul.mubr.f32.gmra.mrb[0].mxu0 %v3269
    %v3342 = vpop.f32.mrb[0].mxu0
    %v3343 = vadd.f32 %v3264, %v3342
    %v3344 = vpop.f32.mrb[0].mxu0
    %3345 = vdwg.mxu0
    %v3346 = vmax.f32 %v3338, 0.0
    %v3347 = vmax.f32 %v3343, 0.0
    %v3348 = vlaneseq
    %v3349 = vshrl.u32 %v3348, 7
    %v3350 = vsub.s32 1, %v3349
    %v3351 = vrot.slane %v3260, %v3350
    %v3353 = vsel %vm1183, %v3346, 0
    %v3356 = vsel %vm1183, %v3347, 0
    %3358 = vmatprep.subr.mxu0 0.0
    %3359 = vmatpush1.msra.mxu0 %v3247
    %3360 = vmatprep.subr.mxu0 0.0
    %3361 = vmatpush1.msra.mxu0 %v3248
    %3362 = vmatprep.subr.mxu0 0.0
    %3363 = vmatpush1.msra.mxu0 %v3249
    %3364 = vmatprep.subr.mxu0 0.0
    %3365 = vmatpush1.msra.mxu0 %v3250
    %3366 = vmatprep.subr.mxu0 0.0
    %3367 = vmatpush1.msra.mxu0 %v3251
    %3368 = vmatprep.subr.mxu0 0.0
    %3369 = vmatpush1.msra.mxu0 %v3252
    %3370 = vmatprep.subr.mxu0 0.0
    %3371 = vmatpush1.msra.mxu0 %v3253
    %3372 = vmatprep.subr.mxu0 0.0
    %3373 = vmatpush1.msra.mxu0 %v3254
    %3374 = vmatprep.subr.mxu0 0.0
    %3375 = vmatpush1.msra.mxu0 %v3255
    %3376 = vmatprep.subr.mxu0 0.0
    %3377 = vmatpush1.msra.mxu0 %v3256
    %3378 = vmatprep.subr.mxu0 0.0
    %3379 = vmatpush1.msra.mxu0 %v3257
    %3380 = vmatprep.subr.mxu0 0.0
    %3381 = vmatpush1.msra.mxu0 %v3258
    %3382 = vmatprep.subr.mxu0 0.0
    %3383 = vmatpush1.msra.mxu0 0.0
    %3384 = vmatprep.subr.mxu0 0.0
    %3385 = vmatpush1.msra.mxu0 0.0
    %3386 = vmatprep.subr.mxu0 0.0
    %3387 = vmatpush1.msra.mxu0 0.0
    %3388 = vmatprep.subr.mxu0 0.0
    %3389 = vmatpush1.msra.mxu0 0.0
    %3390 = vmatprep.subr.mxu0 0.0
    %3391 = vmatpush1.msra.mxu0 0.0
    %3392 = vmatprep.subr.mxu0 0.0
    %3393 = vmatpush1.msra.mxu0 0.0
    %3394 = vmatprep.subr.mxu0 0.0
    %3395 = vmatpush1.msra.mxu0 0.0
    %3396 = vmatprep.subr.mxu0 0.0
    %3397 = vmatpush1.msra.mxu0 0.0
    %3398 = vmatprep.subr.mxu0 0.0
    %3399 = vmatpush1.msra.mxu0 0.0
    %3400 = vmatprep.subr.mxu0 0.0
    %3401 = vmatpush1.msra.mxu0 0.0
    %3402 = vmatprep.subr.mxu0 0.0
    %3403 = vmatpush1.msra.mxu0 0.0
    %3404 = vmatprep.subr.mxu0 0.0
    %3405 = vmatpush1.msra.mxu0 0.0
    %3406 = vmatprep.subr.mxu0 0.0
    %3407 = vmatpush1.msra.mxu0 0.0
    %3408 = vmatprep.subr.mxu0 0.0
    %3409 = vmatpush1.msra.mxu0 0.0
    %3410 = vmatprep.subr.mxu0 0.0
    %3411 = vmatpush1.msra.mxu0 0.0
    %3412 = vmatprep.subr.mxu0 0.0
    %3413 = vmatpush1.msra.mxu0 0.0
    %3414 = vmatprep.subr.mxu0 0.0
    %3415 = vmatpush1.msra.mxu0 0.0
    %3416 = vmatprep.subr.mxu0 0.0
    %3417 = vmatpush1.msra.mxu0 0.0
    %3418 = vmatprep.subr.mxu0 0.0
    %3419 = vmatpush1.msra.mxu0 0.0
    %3420 = vmatprep.subr.mxu0 0.0
    %3421 = vmatpush1.msra.mxu0 0.0
    %3422 = vmatprep.mubr.f32.mxu0 0.0
    %3423 = vmatmul.mubr.f32.gmra.mrb[0].mxu0 %v3353
    %v3424 = vpop.f32.mrb[0].mxu0
    %v3425 = vadd.f32 %v3351, %v3424
    %v3426 = vpop.f32.mrb[0].mxu0
    %3427 = vmatprep.mubr.f32.mxu0 0.0
    %3428 = vmatmul.mubr.f32.gmra.mrb[0].mxu0 %v3356
    %v3429 = vpop.f32.mrb[0].mxu0
    %v3430 = vadd.f32 %v3351, %v3429
    %v3431 = vpop.f32.mrb[0].mxu0
    %3432 = vdwg.mxu0
    %v3433 = vld [vmem:[%s6] sm:$0xff]
    %v3434 = vld [vmem:[%s6 + $0x8] sm:$0xff]
    %v3435 = vld [vmem:[%s6 + $0x10] sm:$0xff]
    %v3436 = vld [vmem:[%s6 + $0x18] sm:$0x7]
    %v3437 = vsel %vm186, %v3425, 0.0
    %3438 = vadd.xlane.f32.xlu0 %v3437
    %v3439 = vpop.xlane.xlu0 %3438
    %v3440 = vsel %vm186, %v3430, 0.0
    %3441 = vadd.xlane.f32.xlu0 %v3440
    %v3442 = vpop.xlane.xlu0 %3441
    %v3443 = vrcp.pop 24.0
    %v3444 = vmul.f32 %v3439, %v3443
    %v3445 = vmul.f32 %v3442, %v3443
    %v3446 = vsub.f32 %v3425, %v3444
    %v3447 = vsub.f32 %v3430, %v3445
    %v3448 = vmul.f32 %v3446, %v3446
    %v3449 = vmul.f32 %v3447, %v3447
    %v3450 = vsel %vm186, %v3448, 0.0
    %3451 = vadd.xlane.f32.xlu0 %v3450
    %v3452 = vpop.xlane.xlu0 %3451
    %v3453 = vsel %vm186, %v3449, 0.0
    %3454 = vadd.xlane.f32.xlu0 %v3453
    %v3455 = vpop.xlane.xlu0 %3454
    %v3456 = vmul.f32 %v3452, %v3443
    %v3457 = vmul.f32 %v3455, %v3443
    %v3458 = vadd.f32 %v3456, 1e-05
    %v3459 = vadd.f32 %v3457, 1e-05
    %v3460 = vrsqrt.pop %v3458
    %v3461 = vrsqrt.pop %v3459
    %v3462 = vmul.f32 %v3446, %v3460
    %v3463 = vmul.f32 %v3447, %v3461
    %v3464 = vlaneseq
    %v3465 = vshrl.u32 %v3464, 7
    %v3466 = vsub.s32 1, %v3465
    %v3467 = vrot.slane %v3436, %v3466
    %v3468 = vmul.f32 %v3462, %v3467
    %v3469 = vmul.f32 %v3463, %v3467
    %v3470 = vlaneseq
    %v3471 = vshrl.u32 %v3470, 7
    %v3472 = vsub.s32 2, %v3471
    %v3473 = vrot.slane %v3436, %v3472
    %v3474 = vadd.f32 %v3468, %v3473
    %v3475 = vadd.f32 %v3469, %v3473
    %v3476 = vlaneseq
    %v3477 = vshrl.u32 %v3476, 7
    %v3478 = vsub.s32 0, %v3477
    %v3479 = vrot.slane %v3436, %v3478
    %v3481 = vsel %vm186, %v3474, 0
    %v3484 = vsel %vm186, %v3475, 0
    %3486 = vmatprep.subr.mxu0 0.0
    %3487 = vmatpush1.msra.mxu0 %v3433
    %3488 = vmatprep.subr.mxu0 0.0
    %3489 = vmatpush1.msra.mxu0 %v3434
    %3490 = vmatprep.subr.mxu0 0.0
    %3491 = vmatpush1.msra.mxu0 %v3435
    %3492 = vmatprep.subr.mxu0 0.0
    %3493 = vmatpush1.msra.mxu0 0.0
    %3494 = vmatprep.subr.mxu0 0.0
    %3495 = vmatpush1.msra.mxu0 0.0
    %3496 = vmatprep.subr.mxu0 0.0
    %3497 = vmatpush1.msra.mxu0 0.0
    %3498 = vmatprep.subr.mxu0 0.0
    %3499 = vmatpush1.msra.mxu0 0.0
    %3500 = vmatprep.subr.mxu0 0.0
    %3501 = vmatpush1.msra.mxu0 0.0
    %3502 = vmatprep.subr.mxu0 0.0
    %3503 = vmatpush1.msra.mxu0 0.0
    %3504 = vmatprep.subr.mxu0 0.0
    %3505 = vmatpush1.msra.mxu0 0.0
    %3506 = vmatprep.subr.mxu0 0.0
    %3507 = vmatpush1.msra.mxu0 0.0
    %3508 = vmatprep.subr.mxu0 0.0
    %3509 = vmatpush1.msra.mxu0 0.0
    %3510 = vmatprep.subr.mxu0 0.0
    %3511 = vmatpush1.msra.mxu0 0.0
    %3512 = vmatprep.subr.mxu0 0.0
    %3513 = vmatpush1.msra.mxu0 0.0
    %3514 = vmatprep.subr.mxu0 0.0
    %3515 = vmatpush1.msra.mxu0 0.0
    %3516 = vmatprep.subr.mxu0 0.0
    %3517 = vmatpush1.msra.mxu0 0.0
    %3518 = vmatprep.subr.mxu0 0.0
    %3519 = vmatpush1.msra.mxu0 0.0
    %3520 = vmatprep.subr.mxu0 0.0
    %3521 = vmatpush1.msra.mxu0 0.0
    %3522 = vmatprep.subr.mxu0 0.0
    %3523 = vmatpush1.msra.mxu0 0.0
    %3524 = vmatprep.subr.mxu0 0.0
    %3525 = vmatpush1.msra.mxu0 0.0
    %3526 = vmatprep.subr.mxu0 0.0
    %3527 = vmatpush1.msra.mxu0 0.0
    %3528 = vmatprep.subr.mxu0 0.0
    %3529 = vmatpush1.msra.mxu0 0.0
    %3530 = vmatprep.subr.mxu0 0.0
    %3531 = vmatpush1.msra.mxu0 0.0
    %3532 = vmatprep.subr.mxu0 0.0
    %3533 = vmatpush1.msra.mxu0 0.0
    %3534 = vmatprep.subr.mxu0 0.0
    %3535 = vmatpush1.msra.mxu0 0.0
    %3536 = vmatprep.subr.mxu0 0.0
    %3537 = vmatpush1.msra.mxu0 0.0
    %3538 = vmatprep.subr.mxu0 0.0
    %3539 = vmatpush1.msra.mxu0 0.0
    %3540 = vmatprep.subr.mxu0 0.0
    %3541 = vmatpush1.msra.mxu0 0.0
    %3542 = vmatprep.subr.mxu0 0.0
    %3543 = vmatpush1.msra.mxu0 0.0
    %3544 = vmatprep.subr.mxu0 0.0
    %3545 = vmatpush1.msra.mxu0 0.0
    %3546 = vmatprep.subr.mxu0 0.0
    %3547 = vmatpush1.msra.mxu0 0.0
    %3548 = vmatprep.subr.mxu0 0.0
    %3549 = vmatpush1.msra.mxu0 0.0
    %3550 = vmatprep.mubr.f32.mxu0 0.0
    %3551 = vmatmul.mubr.f32.gmra.mrb[0].mxu0 %v3481
    %v3552 = vpop.f32.mrb[0].mxu0
    %v3553 = vadd.f32 %v3479, %v3552
    %v3554 = vpop.f32.mrb[0].mxu0
    %3555 = vmatprep.mubr.f32.mxu0 0.0
    %3556 = vmatmul.mubr.f32.gmra.mrb[0].mxu0 %v3484
    %v3557 = vpop.f32.mrb[0].mxu0
    %v3558 = vadd.f32 %v3479, %v3557
    %v3559 = vpop.f32.mrb[0].mxu0
    %3560 = vdwg.mxu0
    %3561 = vst [vmem:[#allocation2] sm:$0xff] %v3553
    %3562 = vst [vmem:[#allocation2 + $0x8] sm:$0xff] %v3558
    // Predicated region
    $region30: #{tpu_custom_call.1} parent=1 // pred_check
      _
    $region31: #{tpu_custom_call.1} parent=1 // pred_check_branch
      %3564 = sbr.rel (0) target = $region33
    $region32: #{tpu_custom_call.1} parent=1 // pred_region
      %s3566 = ssub.s32 256, 256
      %3567 = vsyncadd [#allocation3], %s3566
      %s3568 = sshll.u32 [#allocation2], 4
      %s3569 = int_to_ptr.vmem [resolvable:$true] %s3568
      %3574 = dma.vmem_to_hbm [thread:$0]  %s3569, 256, %s7, [#allocation3], 128, 128, 8
    $region33: #{tpu_custom_call.1} parent=1 // pred_fallthru
      _
    // Predicated region
    $region34: #{tpu_custom_call.1} parent=1 // pred_check
      _
    $region35: #{tpu_custom_call.1} parent=1 // pred_check_branch
      %3576 = sbr.rel (0) target = $region37
    $region36: #{tpu_custom_call.1} parent=1 // pred_region
      %3577 = dma.done [#allocation3], 256
    $region37: #{tpu_custom_call.1} parent=1 // pred_fallthru
      _
    %3578 = vsyncpa [#allocation3], 1

</llo_original>
